<compile_context>
chip_gen: v7x
topology: tpu7x:2x2x1
jax: 0.10.0
libtpu: 0.0.40
codegen_flags: <defaults>
</compile_context>

<pallas_src>
import functools

import jax
import jax.numpy as jnp
import numpy as np
from jax.experimental import pallas as pl
from jax.experimental.pallas import tpu as pltpu


def bottleneck_kernel(x_ref, w1_ref, b1_ref, w2_ref, b2_ref, w3_ref, b3_ref,
                      o_ref, pad_ref, *, H, W, rate):
    Cp = x_ref.shape[-1]          # padded in/out channels (lane-aligned)
    Pp = w1_ref.shape[-1]         # padded mid channels (lane-aligned)
    Hp, Wp = H + 2 * rate, W + 2 * rate

    x2d = x_ref[0].reshape(H * W, Cp)                          # f32 (HW, Cp)

    # ---- conv1 (1x1, BN1 scale folded into w1) + bias + ReLU ---------------
    h1 = jnp.dot(x2d.astype(w1_ref.dtype), w1_ref[...],
                 preferred_element_type=jnp.float32)
    h1 = jnp.maximum(h1 + b1_ref[...], 0.0)                    # f32 (HW, Pp)

    # ---- conv2 (3x3, stride=1, dilation=rate, padding=rate) ----------------
    # Zero only the halo strips of the f32 padded scratch; the interior is
    # fully overwritten each grid step.
    pad_ref[0:rate, :, :] = jnp.zeros((rate, Wp, Pp), jnp.float32)
    pad_ref[Hp - rate:Hp, :, :] = jnp.zeros((rate, Wp, Pp), jnp.float32)
    pad_ref[:, 0:rate, :] = jnp.zeros((Hp, rate, Pp), jnp.float32)
    pad_ref[:, Wp - rate:Wp, :] = jnp.zeros((Hp, rate, Pp), jnp.float32)
    pad_ref[rate:rate + H, rate:rate + W, :] = h1.reshape(H, W, Pp)

    # 9 shifted taps, each one MXU dot accumulated in f32 (avoids an im2col
    # concat buffer; weights stay resident as a (9, Pp, Pp) bf16 block).
    acc2 = None
    for k in range(9):
        dy, dx = divmod(k, 3)
        tap = pad_ref[dy * rate:dy * rate + H, dx * rate:dx * rate + W, :]
        tap = tap.reshape(H * W, Pp).astype(w2_ref.dtype)       # bf16 (HW, Pp)
        d = jnp.dot(tap, w2_ref[k], preferred_element_type=jnp.float32)
        acc2 = d if acc2 is None else acc2 + d
    h2 = jnp.maximum(acc2 + b2_ref[...], 0.0)                   # f32 (HW, Pp)

    # ---- conv3 (1x1, BN3 scale folded) + bias + residual + ReLU ------------
    h3 = jnp.dot(h2.astype(w3_ref.dtype), w3_ref[...],
                 preferred_element_type=jnp.float32)
    h3 = h3 + b3_ref[...] + x2d                                 # f32 residual
    o_ref[0] = jnp.maximum(h3, 0.0).reshape(H, W, Cp).astype(o_ref.dtype)


def _round_up(n, m):
    return (n + m - 1) // m * m


def fold_bn(bn, eps):
    gamma, beta, mean, var = bn
    scale = gamma / jnp.sqrt(var + eps)
    bias = beta - mean * scale
    return scale, bias


def bottleneck_pallas(x_nchw, params, *, rate=1):
    """Bottleneck forward. x_nchw: (B, Cin, H, W) float32, Cin == 4 * planes."""
    eps = params["eps"]
    x = jnp.transpose(x_nchw, (0, 2, 3, 1)).astype(jnp.float32)   # NCHW -> NHWC
    B, H, W, Cin = x.shape
    P = params["w1"].shape[1]
    Cout = params["w3"].shape[1]
    assert Cout == Cin, "residual add requires inplanes == planes * 4 (no downsample)"

    LANE = 128
    Cp = _round_up(Cin, LANE)     # padded in/out channels
    Pp = _round_up(P, LANE)       # padded mid channels

    s1, b1 = fold_bn(params["bn1"], eps)
    s2, b2 = fold_bn(params["bn2"], eps)
    s3, b3 = fold_bn(params["bn3"], eps)

    # Fold BN scales into the conv weights (host-side, one time), pad channels
    # to the lane width, cast matmul operands to bf16.
    w1 = params["w1"] * s1[None, :]                      # (Cin, P)
    w2 = params["w2"] * s2[None, None, None, :]          # (3, 3, P, P) HWIO
    w3 = params["w3"] * s3[None, :]                      # (P, Cout)

    w1p = (jnp.zeros((Cp, Pp), jnp.float32).at[:Cin, :P].set(w1)
           .astype(jnp.bfloat16))
    w2p = (jnp.zeros((3, 3, Pp, Pp), jnp.float32).at[:, :, :P, :P].set(w2)
           .reshape(9, Pp, Pp).astype(jnp.bfloat16))     # per-tap weight layout
    w3p = (jnp.zeros((Pp, Cp), jnp.float32).at[:P, :Cout].set(w3)
           .astype(jnp.bfloat16))

    b1p = jnp.zeros((1, Pp), jnp.float32).at[0, :P].set(b1)
    b2p = jnp.zeros((1, Pp), jnp.float32).at[0, :P].set(b2)
    b3p = jnp.zeros((1, Cp), jnp.float32).at[0, :Cout].set(b3)

    # Keep the activations f32 so the residual path is exact; matmul LHS is
    # cast to bf16 inside the kernel.
    xp = jnp.zeros((B, H, W, Cp), jnp.float32).at[..., :Cin].set(x)

    kernel = functools.partial(bottleneck_kernel, H=H, W=W, rate=rate)

    flops = 2 * B * H * W * (Cp * Pp + 9 * Pp * Pp + Pp * Cp)
    bytes_accessed = (xp.size * 4                        # f32 input
                      + B * H * W * Cp * 4               # f32 output
                      + (w1p.size + w2p.size + w3p.size) * 2
                      + (b1p.size + b2p.size + b3p.size) * 4)

    out_nhwc = pl.pallas_call(
        kernel,
        out_shape=jax.ShapeDtypeStruct((B, H, W, Cp), jnp.float32),
        grid_spec=pltpu.PrefetchScalarGridSpec(
            num_scalar_prefetch=0,
            grid=(B,),
            in_specs=[
                pl.BlockSpec((1, H, W, Cp), lambda b: (b, 0, 0, 0)),   # x
                pl.BlockSpec((Cp, Pp), lambda b: (0, 0)),              # w1 (BN folded)
                pl.BlockSpec((1, Pp), lambda b: (0, 0)),               # bn1 bias
                pl.BlockSpec((9, Pp, Pp), lambda b: (0, 0, 0)),        # w2 taps
                pl.BlockSpec((1, Pp), lambda b: (0, 0)),               # bn2 bias
                pl.BlockSpec((Pp, Cp), lambda b: (0, 0)),              # w3 (BN folded)
                pl.BlockSpec((1, Cp), lambda b: (0, 0)),               # bn3 bias
            ],
            out_specs=pl.BlockSpec((1, H, W, Cp), lambda b: (b, 0, 0, 0)),
            scratch_shapes=[
                pltpu.VMEM((H + 2 * rate, W + 2 * rate, Pp), jnp.float32),
            ],
        ),
        compiler_params=pltpu.CompilerParams(
            dimension_semantics=("parallel",),          # batch elems independent
            vmem_limit_bytes=32 * 1024 * 1024),
        cost_estimate=pl.CostEstimate(flops=flops, transcendentals=0,
                                      bytes_accessed=bytes_accessed),
    )(xp, w1p, b1p, w2p, b2p, w3p, b3p)

    out_nhwc = out_nhwc[..., :Cout]                     # strip channel padding
    return jnp.transpose(out_nhwc, (0, 3, 1, 2))        # NHWC -> NCHW


def bottleneck_reference(x_nchw, params, *, rate=1):
    """Pure-JAX reference (mirrors the PyTorch module, eval-mode BN, f32)."""
    eps = params["eps"]
    x = jnp.transpose(x_nchw, (0, 2, 3, 1))
    dn = ("NHWC", "HWIO", "NHWC")

    def bn_apply(h, bn):
        gamma, beta, mean, var = bn
        return gamma * (h - mean) / jnp.sqrt(var + eps) + beta

    h = jax.lax.conv_general_dilated(x, params["w1"][None, None], (1, 1),
                                     "VALID", dimension_numbers=dn)
    h = jax.nn.relu(bn_apply(h, params["bn1"]))
    h = jax.lax.conv_general_dilated(h, params["w2"], (1, 1),
                                     [(rate, rate), (rate, rate)],
                                     rhs_dilation=(rate, rate),
                                     dimension_numbers=dn)
    h = jax.nn.relu(bn_apply(h, params["bn2"]))
    h = jax.lax.conv_general_dilated(h, params["w3"][None, None], (1, 1),
                                     "VALID", dimension_numbers=dn)
    h = bn_apply(h, params["bn3"]) + x
    h = jax.nn.relu(h)
    return jnp.transpose(h, (0, 3, 1, 2))


def init_params(key, inplanes, planes, eps=1e-5):
    out_ch = planes * 4
    keys = jax.random.split(key, 6)
    w1 = 0.1 * jax.random.normal(keys[0], (inplanes, planes), jnp.float32)
    w2 = 0.1 * jax.random.normal(keys[1], (3, 3, planes, planes), jnp.float32)
    w3 = 0.1 * jax.random.normal(keys[2], (planes, out_ch), jnp.float32)

    def bn_init(k, c):
        k1, k2, k3, k4 = jax.random.split(k, 4)
        gamma = 1.0 + 0.1 * jax.random.normal(k1, (c,), jnp.float32)
        beta = 0.1 * jax.random.normal(k2, (c,), jnp.float32)
        mean = 0.1 * jax.random.normal(k3, (c,), jnp.float32)
        var = jnp.abs(jax.random.normal(k4, (c,), jnp.float32)) + 0.5
        return gamma, beta, mean, var

    return dict(w1=w1, w2=w2, w3=w3,
                bn1=bn_init(keys[3], planes),
                bn2=bn_init(keys[4], planes),
                bn3=bn_init(keys[5], out_ch),
                eps=eps)


if __name__ == "__main__":
    # Bottleneck(inplanes=16, planes=4, stride=1, rate=1, downsample=None)
    inplanes, planes = 16, 4
    B, H, W = 2, 16, 16
    rate = 1

    key = jax.random.PRNGKey(0)
    kx, kp = jax.random.split(key)
    x = jax.random.normal(kx, (B, inplanes, H, W), jnp.float32)   # NCHW like PyTorch
    params = init_params(kp, inplanes, planes)

    out = jax.block_until_ready(bottleneck_pallas(x, params, rate=rate))
    ref = jax.block_until_ready(bottleneck_reference(x, params, rate=rate))

    # bf16 matmul operands (f32 accumulation, f32 residual) -> relaxed tolerance.
    np.testing.assert_allclose(np.asarray(out), np.asarray(ref),
                               rtol=5e-2, atol=5e-2)
    print("KERNEL_OK")
</pallas_src>

<mosaic_0001>
module attributes {stable_mosaic.version = 11 : i64} {
  func.func @bottleneck_kernel(%arg0: i32, %arg1: memref<1x16x16x128xf32, #tpu.memory_space<vmem>>, %arg2: memref<128x128xbf16, #tpu.memory_space<vmem>>, %arg3: memref<1x128xf32, #tpu.memory_space<vmem>>, %arg4: memref<9x128x128xbf16, #tpu.memory_space<vmem>>, %arg5: memref<1x128xf32, #tpu.memory_space<vmem>>, %arg6: memref<128x128xbf16, #tpu.memory_space<vmem>>, %arg7: memref<1x128xf32, #tpu.memory_space<vmem>>, %arg8: memref<1x16x16x128xf32, #tpu.memory_space<vmem>>, %arg9: memref<18x18x128xf32, #tpu.memory_space<vmem>>) attributes {dimension_semantics = [#tpu.dimension_semantics<parallel>], iteration_bounds = array<i64: 2>, scalar_prefetch = 0 : i64, scratch_operands = 1 : i64, tpu.core_type = #tpu.core_type<tc>, window_params = [{transform_indices = @transform_0, window_bounds = array<i64: 1, 16, 16, 128>}, {pipeline_mode = #tpu.pipeline_mode<synchronous>, transform_indices = @transform_1, window_bounds = array<i64: 128, 128>}, {pipeline_mode = #tpu.pipeline_mode<synchronous>, transform_indices = @transform_2, window_bounds = array<i64: 1, 128>}, {pipeline_mode = #tpu.pipeline_mode<synchronous>, transform_indices = @transform_3, window_bounds = array<i64: 9, 128, 128>}, {pipeline_mode = #tpu.pipeline_mode<synchronous>, transform_indices = @transform_4, window_bounds = array<i64: 1, 128>}, {pipeline_mode = #tpu.pipeline_mode<synchronous>, transform_indices = @transform_5, window_bounds = array<i64: 128, 128>}, {pipeline_mode = #tpu.pipeline_mode<synchronous>, transform_indices = @transform_6, window_bounds = array<i64: 1, 128>}, {transform_indices = @transform_7, window_bounds = array<i64: 1, 16, 16, 128>}]} {
    %c0 = arith.constant 0 : index
    %c0_0 = arith.constant 0 : index
    %c0_1 = arith.constant 0 : index
    %c0_2 = arith.constant 0 : index
    %0 = vector.load %arg1[%c0, %c0_0, %c0_1, %c0_2] : memref<1x16x16x128xf32, #tpu.memory_space<vmem>>, vector<1x16x16x128xf32>
    %1 = vector.shape_cast %0 : vector<1x16x16x128xf32> to vector<16x16x128xf32>
    %2 = vector.shape_cast %1 : vector<16x16x128xf32> to vector<256x128xf32>
    %3 = arith.truncf %2 : vector<256x128xf32> to vector<256x128xbf16>
    %c0_3 = arith.constant 0 : index
    %c0_4 = arith.constant 0 : index
    %4 = vector.load %arg2[%c0_3, %c0_4] : memref<128x128xbf16, #tpu.memory_space<vmem>>, vector<128x128xbf16>
    %cst = arith.constant dense<0.000000e+00> : vector<256x128xf32>
    %5 = tpu.matmul %3, %4, %cst {dimension_numbers = #tpu.dot_dimension_numbers<[1], [0], [0], [1], [0, 0, 1, 1], [], []>} : vector<256x128xbf16>, vector<128x128xbf16>, vector<256x128xf32> -> vector<256x128xf32>
    %c0_5 = arith.constant 0 : index
    %c0_6 = arith.constant 0 : index
    %6 = vector.load %arg3[%c0_5, %c0_6] : memref<1x128xf32, #tpu.memory_space<vmem>>, vector<1x128xf32>
    %7 = vector.broadcast %6 : vector<1x128xf32> to vector<256x128xf32>
    %8 = arith.addf %5, %7 : vector<256x128xf32>
    %cst_7 = arith.constant 0.000000e+00 : f32
    %9 = vector.broadcast %cst_7 : f32 to vector<256x128xf32>
    %10 = arith.maximumf %8, %9 : vector<256x128xf32>
    %cst_8 = arith.constant 0.000000e+00 : f32
    %11 = vector.broadcast %cst_8 : f32 to vector<1x18x128xf32>
    %c0_9 = arith.constant 0 : index
    %c0_10 = arith.constant 0 : index
    %c0_11 = arith.constant 0 : index
    %12 = vector.load %arg9[%c0_9, %c0_10, %c0_11] : memref<18x18x128xf32, #tpu.memory_space<vmem>>, vector<1x18x128xf32>
    tpu.vector_store %arg9[%c0_9, %c0_10, %c0_11], %11 {strides = array<i32>} : memref<18x18x128xf32, #tpu.memory_space<vmem>>, vector<1x18x128xf32>,
    %cst_12 = arith.constant 0.000000e+00 : f32
    %13 = vector.broadcast %cst_12 : f32 to vector<1x18x128xf32>
    %c17 = arith.constant 17 : index
    %c0_13 = arith.constant 0 : index
    %c0_14 = arith.constant 0 : index
    %14 = vector.load %arg9[%c17, %c0_13, %c0_14] : memref<18x18x128xf32, #tpu.memory_space<vmem>>, vector<1x18x128xf32>
    tpu.vector_store %arg9[%c17, %c0_13, %c0_14], %13 {strides = array<i32>} : memref<18x18x128xf32, #tpu.memory_space<vmem>>, vector<1x18x128xf32>,
    %cst_15 = arith.constant 0.000000e+00 : f32
    %15 = vector.broadcast %cst_15 : f32 to vector<18x1x128xf32>
    %c0_16 = arith.constant 0 : index
    %c0_17 = arith.constant 0 : index
    %c0_18 = arith.constant 0 : index
    %16 = vector.load %arg9[%c0_16, %c0_17, %c0_18] : memref<18x18x128xf32, #tpu.memory_space<vmem>>, vector<18x1x128xf32>
    tpu.vector_store %arg9[%c0_16, %c0_17, %c0_18], %15 {strides = array<i32>} : memref<18x18x128xf32, #tpu.memory_space<vmem>>, vector<18x1x128xf32>,
    %cst_19 = arith.constant 0.000000e+00 : f32
    %17 = vector.broadcast %cst_19 : f32 to vector<18x1x128xf32>
    %c0_20 = arith.constant 0 : index
    %c17_21 = arith.constant 17 : index
    %c0_22 = arith.constant 0 : index
    %18 = vector.load %arg9[%c0_20, %c17_21, %c0_22] : memref<18x18x128xf32, #tpu.memory_space<vmem>>, vector<18x1x128xf32>
    tpu.vector_store %arg9[%c0_20, %c17_21, %c0_22], %17 {strides = array<i32>} : memref<18x18x128xf32, #tpu.memory_space<vmem>>, vector<18x1x128xf32>,
    %19 = vector.shape_cast %10 : vector<256x128xf32> to vector<16x16x128xf32>
    %c1 = arith.constant 1 : index
    %c1_23 = arith.constant 1 : index
    %c0_24 = arith.constant 0 : index
    %20 = vector.load %arg9[%c1, %c1_23, %c0_24] : memref<18x18x128xf32, #tpu.memory_space<vmem>>, vector<16x16x128xf32>
    tpu.vector_store %arg9[%c1, %c1_23, %c0_24], %19 {strides = array<i32>} : memref<18x18x128xf32, #tpu.memory_space<vmem>>, vector<16x16x128xf32>,
    %c0_25 = arith.constant 0 : index
    %c0_26 = arith.constant 0 : index
    %c0_27 = arith.constant 0 : index
    %21 = vector.load %arg9[%c0_25, %c0_26, %c0_27] : memref<18x18x128xf32, #tpu.memory_space<vmem>>, vector<16x16x128xf32>
    %22 = vector.shape_cast %21 : vector<16x16x128xf32> to vector<256x128xf32>
    %23 = arith.truncf %22 : vector<256x128xf32> to vector<256x128xbf16>
    %c0_28 = arith.constant 0 : index
    %c0_29 = arith.constant 0 : index
    %c0_30 = arith.constant 0 : index
    %24 = vector.load %arg4[%c0_28, %c0_29, %c0_30] : memref<9x128x128xbf16, #tpu.memory_space<vmem>>, vector<1x128x128xbf16>
    %25 = vector.shape_cast %24 : vector<1x128x128xbf16> to vector<128x128xbf16>
    %cst_31 = arith.constant dense<0.000000e+00> : vector<256x128xf32>
    %26 = tpu.matmul %23, %25, %cst_31 {dimension_numbers = #tpu.dot_dimension_numbers<[1], [0], [0], [1], [0, 0, 1, 1], [], []>} : vector<256x128xbf16>, vector<128x128xbf16>, vector<256x128xf32> -> vector<256x128xf32>
    %c0_32 = arith.constant 0 : index
    %c1_33 = arith.constant 1 : index
    %c0_34 = arith.constant 0 : index
    %27 = vector.load %arg9[%c0_32, %c1_33, %c0_34] : memref<18x18x128xf32, #tpu.memory_space<vmem>>, vector<16x16x128xf32>
    %28 = vector.shape_cast %27 : vector<16x16x128xf32> to vector<256x128xf32>
    %29 = arith.truncf %28 : vector<256x128xf32> to vector<256x128xbf16>
    %c1_35 = arith.constant 1 : index
    %c0_36 = arith.constant 0 : index
    %c0_37 = arith.constant 0 : index
    %30 = vector.load %arg4[%c1_35, %c0_36, %c0_37] : memref<9x128x128xbf16, #tpu.memory_space<vmem>>, vector<1x128x128xbf16>
    %31 = vector.shape_cast %30 : vector<1x128x128xbf16> to vector<128x128xbf16>
    %cst_38 = arith.constant dense<0.000000e+00> : vector<256x128xf32>
    %32 = tpu.matmul %29, %31, %cst_38 {dimension_numbers = #tpu.dot_dimension_numbers<[1], [0], [0], [1], [0, 0, 1, 1], [], []>} : vector<256x128xbf16>, vector<128x128xbf16>, vector<256x128xf32> -> vector<256x128xf32>
    %33 = arith.addf %26, %32 : vector<256x128xf32>
    %c0_39 = arith.constant 0 : index
    %c2 = arith.constant 2 : index
    %c0_40 = arith.constant 0 : index
    %34 = vector.load %arg9[%c0_39, %c2, %c0_40] : memref<18x18x128xf32, #tpu.memory_space<vmem>>, vector<16x16x128xf32>
    %35 = vector.shape_cast %34 : vector<16x16x128xf32> to vector<256x128xf32>
    %36 = arith.truncf %35 : vector<256x128xf32> to vector<256x128xbf16>
    %c2_41 = arith.constant 2 : index
    %c0_42 = arith.constant 0 : index
    %c0_43 = arith.constant 0 : index
    %37 = vector.load %arg4[%c2_41, %c0_42, %c0_43] : memref<9x128x128xbf16, #tpu.memory_space<vmem>>, vector<1x128x128xbf16>
    %38 = vector.shape_cast %37 : vector<1x128x128xbf16> to vector<128x128xbf16>
    %cst_44 = arith.constant dense<0.000000e+00> : vector<256x128xf32>
    %39 = tpu.matmul %36, %38, %cst_44 {dimension_numbers = #tpu.dot_dimension_numbers<[1], [0], [0], [1], [0, 0, 1, 1], [], []>} : vector<256x128xbf16>, vector<128x128xbf16>, vector<256x128xf32> -> vector<256x128xf32>
    %40 = arith.addf %33, %39 : vector<256x128xf32>
    %c1_45 = arith.constant 1 : index
    %c0_46 = arith.constant 0 : index
    %c0_47 = arith.constant 0 : index
    %41 = vector.load %arg9[%c1_45, %c0_46, %c0_47] : memref<18x18x128xf32, #tpu.memory_space<vmem>>, vector<16x16x128xf32>
    %42 = vector.shape_cast %41 : vector<16x16x128xf32> to vector<256x128xf32>
    %43 = arith.truncf %42 : vector<256x128xf32> to vector<256x128xbf16>
    %c3 = arith.constant 3 : index
    %c0_48 = arith.constant 0 : index
    %c0_49 = arith.constant 0 : index
    %44 = vector.load %arg4[%c3, %c0_48, %c0_49] : memref<9x128x128xbf16, #tpu.memory_space<vmem>>, vector<1x128x128xbf16>
    %45 = vector.shape_cast %44 : vector<1x128x128xbf16> to vector<128x128xbf16>
    %cst_50 = arith.constant dense<0.000000e+00> : vector<256x128xf32>
    %46 = tpu.matmul %43, %45, %cst_50 {dimension_numbers = #tpu.dot_dimension_numbers<[1], [0], [0], [1], [0, 0, 1, 1], [], []>} : vector<256x128xbf16>, vector<128x128xbf16>, vector<256x128xf32> -> vector<256x128xf32>
    %47 = arith.addf %40, %46 : vector<256x128xf32>
    %c1_51 = arith.constant 1 : index
    %c1_52 = arith.constant 1 : index
    %c0_53 = arith.constant 0 : index
    %48 = vector.load %arg9[%c1_51, %c1_52, %c0_53] : memref<18x18x128xf32, #tpu.memory_space<vmem>>, vector<16x16x128xf32>
    %49 = vector.shape_cast %48 : vector<16x16x128xf32> to vector<256x128xf32>
    %50 = arith.truncf %49 : vector<256x128xf32> to vector<256x128xbf16>
    %c4 = arith.constant 4 : index
    %c0_54 = arith.constant 0 : index
    %c0_55 = arith.constant 0 : index
    %51 = vector.load %arg4[%c4, %c0_54, %c0_55] : memref<9x128x128xbf16, #tpu.memory_space<vmem>>, vector<1x128x128xbf16>
    %52 = vector.shape_cast %51 : vector<1x128x128xbf16> to vector<128x128xbf16>
    %cst_56 = arith.constant dense<0.000000e+00> : vector<256x128xf32>
    %53 = tpu.matmul %50, %52, %cst_56 {dimension_numbers = #tpu.dot_dimension_numbers<[1], [0], [0], [1], [0, 0, 1, 1], [], []>} : vector<256x128xbf16>, vector<128x128xbf16>, vector<256x128xf32> -> vector<256x128xf32>
    %54 = arith.addf %47, %53 : vector<256x128xf32>
    %c1_57 = arith.constant 1 : index
    %c2_58 = arith.constant 2 : index
    %c0_59 = arith.constant 0 : index
    %55 = vector.load %arg9[%c1_57, %c2_58, %c0_59] : memref<18x18x128xf32, #tpu.memory_space<vmem>>, vector<16x16x128xf32>
    %56 = vector.shape_cast %55 : vector<16x16x128xf32> to vector<256x128xf32>
    %57 = arith.truncf %56 : vector<256x128xf32> to vector<256x128xbf16>
    %c5 = arith.constant 5 : index
    %c0_60 = arith.constant 0 : index
    %c0_61 = arith.constant 0 : index
    %58 = vector.load %arg4[%c5, %c0_60, %c0_61] : memref<9x128x128xbf16, #tpu.memory_space<vmem>>, vector<1x128x128xbf16>
    %59 = vector.shape_cast %58 : vector<1x128x128xbf16> to vector<128x128xbf16>
    %cst_62 = arith.constant dense<0.000000e+00> : vector<256x128xf32>
    %60 = tpu.matmul %57, %59, %cst_62 {dimension_numbers = #tpu.dot_dimension_numbers<[1], [0], [0], [1], [0, 0, 1, 1], [], []>} : vector<256x128xbf16>, vector<128x128xbf16>, vector<256x128xf32> -> vector<256x128xf32>
    %61 = arith.addf %54, %60 : vector<256x128xf32>
    %c2_63 = arith.constant 2 : index
    %c0_64 = arith.constant 0 : index
    %c0_65 = arith.constant 0 : index
    %62 = vector.load %arg9[%c2_63, %c0_64, %c0_65] : memref<18x18x128xf32, #tpu.memory_space<vmem>>, vector<16x16x128xf32>
    %63 = vector.shape_cast %62 : vector<16x16x128xf32> to vector<256x128xf32>
    %64 = arith.truncf %63 : vector<256x128xf32> to vector<256x128xbf16>
    %c6 = arith.constant 6 : index
    %c0_66 = arith.constant 0 : index
    %c0_67 = arith.constant 0 : index
    %65 = vector.load %arg4[%c6, %c0_66, %c0_67] : memref<9x128x128xbf16, #tpu.memory_space<vmem>>, vector<1x128x128xbf16>
    %66 = vector.shape_cast %65 : vector<1x128x128xbf16> to vector<128x128xbf16>
    %cst_68 = arith.constant dense<0.000000e+00> : vector<256x128xf32>
    %67 = tpu.matmul %64, %66, %cst_68 {dimension_numbers = #tpu.dot_dimension_numbers<[1], [0], [0], [1], [0, 0, 1, 1], [], []>} : vector<256x128xbf16>, vector<128x128xbf16>, vector<256x128xf32> -> vector<256x128xf32>
    %68 = arith.addf %61, %67 : vector<256x128xf32>
    %c2_69 = arith.constant 2 : index
    %c1_70 = arith.constant 1 : index
    %c0_71 = arith.constant 0 : index
    %69 = vector.load %arg9[%c2_69, %c1_70, %c0_71] : memref<18x18x128xf32, #tpu.memory_space<vmem>>, vector<16x16x128xf32>
    %70 = vector.shape_cast %69 : vector<16x16x128xf32> to vector<256x128xf32>
    %71 = arith.truncf %70 : vector<256x128xf32> to vector<256x128xbf16>
    %c7 = arith.constant 7 : index
    %c0_72 = arith.constant 0 : index
    %c0_73 = arith.constant 0 : index
    %72 = vector.load %arg4[%c7, %c0_72, %c0_73] : memref<9x128x128xbf16, #tpu.memory_space<vmem>>, vector<1x128x128xbf16>
    %73 = vector.shape_cast %72 : vector<1x128x128xbf16> to vector<128x128xbf16>
    %cst_74 = arith.constant dense<0.000000e+00> : vector<256x128xf32>
    %74 = tpu.matmul %71, %73, %cst_74 {dimension_numbers = #tpu.dot_dimension_numbers<[1], [0], [0], [1], [0, 0, 1, 1], [], []>} : vector<256x128xbf16>, vector<128x128xbf16>, vector<256x128xf32> -> vector<256x128xf32>
    %75 = arith.addf %68, %74 : vector<256x128xf32>
    %c2_75 = arith.constant 2 : index
    %c2_76 = arith.constant 2 : index
    %c0_77 = arith.constant 0 : index
    %76 = vector.load %arg9[%c2_75, %c2_76, %c0_77] : memref<18x18x128xf32, #tpu.memory_space<vmem>>, vector<16x16x128xf32>
    %77 = vector.shape_cast %76 : vector<16x16x128xf32> to vector<256x128xf32>
    %78 = arith.truncf %77 : vector<256x128xf32> to vector<256x128xbf16>
    %c8 = arith.constant 8 : index
    %c0_78 = arith.constant 0 : index
    %c0_79 = arith.constant 0 : index
    %79 = vector.load %arg4[%c8, %c0_78, %c0_79] : memref<9x128x128xbf16, #tpu.memory_space<vmem>>, vector<1x128x128xbf16>
    %80 = vector.shape_cast %79 : vector<1x128x128xbf16> to vector<128x128xbf16>
    %cst_80 = arith.constant dense<0.000000e+00> : vector<256x128xf32>
    %81 = tpu.matmul %78, %80, %cst_80 {dimension_numbers = #tpu.dot_dimension_numbers<[1], [0], [0], [1], [0, 0, 1, 1], [], []>} : vector<256x128xbf16>, vector<128x128xbf16>, vector<256x128xf32> -> vector<256x128xf32>
    %82 = arith.addf %75, %81 : vector<256x128xf32>
    %c0_81 = arith.constant 0 : index
    %c0_82 = arith.constant 0 : index
    %83 = vector.load %arg5[%c0_81, %c0_82] : memref<1x128xf32, #tpu.memory_space<vmem>>, vector<1x128xf32>
    %84 = vector.broadcast %83 : vector<1x128xf32> to vector<256x128xf32>
    %85 = arith.addf %82, %84 : vector<256x128xf32>
    %cst_83 = arith.constant 0.000000e+00 : f32
    %86 = vector.broadcast %cst_83 : f32 to vector<256x128xf32>
    %87 = arith.maximumf %85, %86 : vector<256x128xf32>
    %88 = arith.truncf %87 : vector<256x128xf32> to vector<256x128xbf16>
    %c0_84 = arith.constant 0 : index
    %c0_85 = arith.constant 0 : index
    %89 = vector.load %arg6[%c0_84, %c0_85] : memref<128x128xbf16, #tpu.memory_space<vmem>>, vector<128x128xbf16>
    %cst_86 = arith.constant dense<0.000000e+00> : vector<256x128xf32>
    %90 = tpu.matmul %88, %89, %cst_86 {dimension_numbers = #tpu.dot_dimension_numbers<[1], [0], [0], [1], [0, 0, 1, 1], [], []>} : vector<256x128xbf16>, vector<128x128xbf16>, vector<256x128xf32> -> vector<256x128xf32>
    %c0_87 = arith.constant 0 : index
    %c0_88 = arith.constant 0 : index
    %91 = vector.load %arg7[%c0_87, %c0_88] : memref<1x128xf32, #tpu.memory_space<vmem>>, vector<1x128xf32>
    %92 = vector.broadcast %91 : vector<1x128xf32> to vector<256x128xf32>
    %93 = arith.addf %90, %92 : vector<256x128xf32>
    %94 = arith.addf %93, %2 : vector<256x128xf32>
    %cst_89 = arith.constant 0.000000e+00 : f32
    %95 = vector.broadcast %cst_89 : f32 to vector<256x128xf32>
    %96 = arith.maximumf %94, %95 : vector<256x128xf32>
    %97 = vector.shape_cast %96 : vector<256x128xf32> to vector<16x16x128xf32>
    %c0_90 = arith.constant 0 : index
    %c0_91 = arith.constant 0 : index
    %c0_92 = arith.constant 0 : index
    %c0_93 = arith.constant 0 : index
    %98 = vector.load %arg8[%c0_90, %c0_91, %c0_92, %c0_93] : memref<1x16x16x128xf32, #tpu.memory_space<vmem>>, vector<1x16x16x128xf32>
    %99 = vector.shape_cast %98 : vector<1x16x16x128xf32> to vector<16x16x128xf32>
    %100 = vector.shape_cast %97 : vector<16x16x128xf32> to vector<1x16x16x128xf32>
    tpu.vector_store %arg8[%c0_90, %c0_91, %c0_92, %c0_93], %100 {strides = array<i32>} : memref<1x16x16x128xf32, #tpu.memory_space<vmem>>, vector<1x16x16x128xf32>,
    return
  }
  func.func @transform_0(%arg0: i32) -> (i32, i32, i32, i32) {
    %c0_i32 = arith.constant 0 : i32
    %c0_i32_0 = arith.constant 0 : i32
    %c0_i32_1 = arith.constant 0 : i32
    %c0_i32_2 = arith.constant 0 : i32
    return %arg0, %c0_i32, %c0_i32_0, %c0_i32_1 : i32, i32, i32, i32
  }
  func.func @transform_1(%arg0: i32) -> (i32, i32) {
    %c0_i32 = arith.constant 0 : i32
    %c0_i32_0 = arith.constant 0 : i32
    %c0_i32_1 = arith.constant 0 : i32
    return %c0_i32, %c0_i32_0 : i32, i32
  }
  func.func @transform_2(%arg0: i32) -> (i32, i32) {
    %c0_i32 = arith.constant 0 : i32
    %c0_i32_0 = arith.constant 0 : i32
    %c0_i32_1 = arith.constant 0 : i32
    return %c0_i32, %c0_i32_0 : i32, i32
  }
  func.func @transform_3(%arg0: i32) -> (i32, i32, i32) {
    %c0_i32 = arith.constant 0 : i32
    %c0_i32_0 = arith.constant 0 : i32
    %c0_i32_1 = arith.constant 0 : i32
    %c0_i32_2 = arith.constant 0 : i32
    return %c0_i32, %c0_i32_0, %c0_i32_1 : i32, i32, i32
  }
  func.func @transform_4(%arg0: i32) -> (i32, i32) {
    %c0_i32 = arith.constant 0 : i32
    %c0_i32_0 = arith.constant 0 : i32
    %c0_i32_1 = arith.constant 0 : i32
    return %c0_i32, %c0_i32_0 : i32, i32
  }
  func.func @transform_5(%arg0: i32) -> (i32, i32) {
    %c0_i32 = arith.constant 0 : i32
    %c0_i32_0 = arith.constant 0 : i32
    %c0_i32_1 = arith.constant 0 : i32
    return %c0_i32, %c0_i32_0 : i32, i32
  }
  func.func @transform_6(%arg0: i32) -> (i32, i32) {
    %c0_i32 = arith.constant 0 : i32
    %c0_i32_0 = arith.constant 0 : i32
    %c0_i32_1 = arith.constant 0 : i32
    return %c0_i32, %c0_i32_0 : i32, i32
  }
  func.func @transform_7(%arg0: i32) -> (i32, i32, i32, i32) {
    %c0_i32 = arith.constant 0 : i32
    %c0_i32_0 = arith.constant 0 : i32
    %c0_i32_1 = arith.constant 0 : i32
    %c0_i32_2 = arith.constant 0 : i32
    return %arg0, %c0_i32, %c0_i32_0, %c0_i32_1 : i32, i32, i32, i32
  }
}

</mosaic_0001>

<llo_original>
// kernel: tpu_custom_call.1
$region0: #{tpu_custom_call.1}
  #allocation0 [shape = 'u32[]', space=smem, size = 0x4, offset = 0x4, fixed_abs, tag = 'smem constant byte address 0x4 - core index']
  #allocation1 [shape = 'u32[144,128]{1,0:T(1,128)}', space=vmem, size = 0x12000, scoped, tag = 'internal scratch']
  #allocation2 [shape = 'f32[18,18,128]{2,1,0:T(8,128)}', space=vmem, size = 0x36000, scoped, tag = 'scratch operand']
  %s0 = inlined_call_operand.hbm [shape: f32[2,16,16,128], index: 0, kind: input, shape index: {}]
  %s1 = inlined_call_operand.hbm [shape: bf16[128,128], index: 1, kind: input, shape index: {}]
  %s2 = inlined_call_operand.vmem [shape: f32[1,128], index: 2, kind: input, shape index: {}]
  %s3 = inlined_call_operand.hbm [shape: bf16[9,128,128], index: 3, kind: input, shape index: {}]
  %s4 = inlined_call_operand.vmem [shape: f32[1,128], index: 4, kind: input, shape index: {}]
  %s5 = inlined_call_operand.hbm [shape: bf16[128,128], index: 5, kind: input, shape index: {}]
  %s6 = inlined_call_operand.vmem [shape: f32[1,128], index: 6, kind: input, shape index: {}]
  %s7 = inlined_call_operand.hbm [shape: f32[2,16,16,128], index: 7, kind: output, shape index: {}]
  %s8 = sld [smem:[#allocation0]]
  $region77: #{tpu_custom_call.1} parent=0
    _
  %s10 = ssub.s32 1, %s8
  %s11 = scalar_select 0, %s10, %s8
  $region1: #{tpu_custom_call.1} parent=0
    #allocation3 [shape = 'u8[262144]{0}', space=vmem, size = 0x40000, scoped, tag = 'input window, operand 0']
    #allocation4 [shape = 's32[2]{0}', space=sflag, size = 0x8, scoped, tag = 'scoped memory for tpu_custom_call.1']
    #allocation5 [shape = 's32[2]{0}', space=sflag, size = 0x8, scoped, tag = 'scoped memory for tpu_custom_call.1']
    #allocation6 [shape = 'u8[32768]{0}', space=vmem, size = 0x8000, scoped, tag = 'input window, operand 1, single buffered']
    #allocation7 [shape = 's32[1]{0}', space=sflag, size = 0x4, scoped, tag = 'scoped memory for tpu_custom_call.1']
    #allocation8 [shape = 'u8[294912]{0}', space=vmem, size = 0x48000, scoped, tag = 'input window, operand 3, single buffered']
    #allocation9 [shape = 'u8[32768]{0}', space=vmem, size = 0x8000, scoped, tag = 'input window, operand 5, single buffered']
    #allocation10 [shape = 's32[1]{0}', space=sflag, size = 0x4, scoped, tag = 'scoped memory for tpu_custom_call.1']
    #allocation11 [shape = 'u8[262144]{0}', space=vmem, size = 0x40000, scoped, tag = 'output window, operand 0']
    %12 = vsyncpa [#allocation4], 0
    %s13 = scalar_lea.sflag [#allocation4], 1
    %14 = vsyncpa %s13, 0
    %15 = vsyncpa [#allocation7], 0
    %16 = vsyncpa [#allocation10], 0
    %17 = vsyncpa [#allocation5], 0
    %s18 = scalar_lea.sflag [#allocation5], 1
    %19 = vsyncpa %s18, 0
    loop: start=0, step=1, limit=4
    $region2: #{tpu_custom_call.1} parent=1 // loop_pre_header
      _
    $region3: #{tpu_custom_call.1} parent=1 // loop_header
      %s21 = sphi 0, %s25
      %p22 = scmp.ge.s32.totalorder %s21, 4
      %s31 = sphi 0, %s33
      %s34 = sphi 0, %s31
      %s35 = sphi 0, %s34
      %s51 = sphi 0, %s35
      %s55 = sphi 0, %s55
      %s57 = sphi 0, %s55
      %s58 = sphi 0, %s57
      %s72 = sphi 0, %s58
      %s76 = sphi 0, %s76
      %s78 = sphi 0, %s76
      %s79 = sphi 0, %s78
      %s93 = sphi 0, %s79
      %s97 = sphi 0, %s97
      %s99 = sphi 0, %s97
      %s100 = sphi 0, %s99
      %s114 = sphi 0, %s100
      %s118 = sphi 0, %s118
      %s120 = sphi 0, %s118
      %s121 = sphi 0, %s120
      %s135 = sphi 0, %s121
      %s139 = sphi 0, %s139
      %s141 = sphi 0, %s139
      %s142 = sphi 0, %s141
      %s156 = sphi 0, %s142
      %s160 = sphi 0, %s160
      %s162 = sphi 0, %s160
      %s163 = sphi 0, %s162
      %s177 = sphi 0, %s163
      %s183 = sphi 0, %s185
      %s186 = sphi 0, %s183
      %s187 = sphi 0, %s186
      %s203 = sphi 0, %s187
    $region4: #{tpu_custom_call.1} parent=1 // loop_header_branch
      %24 = sbr.rel (%p22) target = $region8
    $region5: #{tpu_custom_call.1} parent=1 // loop_body
      %s26 = ssub.s32 %s21, 1
      %s27 = ssub.s32 %s21, 2
      %s28 = sadd.s32 %s21, 1
      %s29 = ssub.s32 %s21, %s28
      %p30 = scmp.eq.s32.totalorder %s29, 0
      %s32 = sadd.s32 %s31, 1
      %s33 = scalar_select %p30, %s31, %s32
      %p36 = pneg %p30
      %p37 = scmp.eq.s32.totalorder %s21, 1
      %p38 = por %p36, %p37
      %p39 = scmp.ne.s32.totalorder %s31, %s34
      %p40 = scmp.eq.s32.totalorder %s21, 0
      %p41 = por %p39, %p40
      %p42 = scmp.ne.s32.totalorder %s31, %s34
      %p43 = scmp.eq.s32.totalorder %s26, 1
      %p44 = por %p42, %p43
      %p45 = scmp.ne.s32.totalorder %s34, %s35
      %p46 = scmp.eq.s32.totalorder %s26, 0
      %p47 = por %p45, %p46
      %p48 = scmp.ne.s32.totalorder %s34, %s35
      %p49 = scmp.eq.s32.totalorder %s27, 1
      %p50 = por %p48, %p49
      %p52 = scmp.ne.s32.totalorder %s35, %s51
      %p53 = scmp.eq.s32.totalorder %s27, 0
      %p54 = por %p52, %p53
      %s56 = sadd.s32 %s55, 1
      %p59 = scmp.eq.s32.totalorder %s21, 1
      %p60 = scmp.ne.s32.totalorder %s55, %s57
      %p61 = scmp.eq.s32.totalorder %s21, 0
      %p62 = por %p60, %p61
      %p63 = scmp.ne.s32.totalorder %s55, %s57
      %p64 = scmp.eq.s32.totalorder %s26, 1
      %p65 = por %p63, %p64
      %p66 = scmp.ne.s32.totalorder %s57, %s58
      %p67 = scmp.eq.s32.totalorder %s26, 0
      %p68 = por %p66, %p67
      %p69 = scmp.ne.s32.totalorder %s57, %s58
      %p70 = scmp.eq.s32.totalorder %s27, 1
      %p71 = por %p69, %p70
      %p73 = scmp.ne.s32.totalorder %s58, %s72
      %p74 = scmp.eq.s32.totalorder %s27, 0
      %p75 = por %p73, %p74
      %s77 = sadd.s32 %s76, 1
      %p80 = scmp.eq.s32.totalorder %s21, 1
      %p81 = scmp.ne.s32.totalorder %s76, %s78
      %p82 = scmp.eq.s32.totalorder %s21, 0
      %p83 = por %p81, %p82
      %p84 = scmp.ne.s32.totalorder %s76, %s78
      %p85 = scmp.eq.s32.totalorder %s26, 1
      %p86 = por %p84, %p85
      %p87 = scmp.ne.s32.totalorder %s78, %s79
      %p88 = scmp.eq.s32.totalorder %s26, 0
      %p89 = por %p87, %p88
      %p90 = scmp.ne.s32.totalorder %s78, %s79
      %p91 = scmp.eq.s32.totalorder %s27, 1
      %p92 = por %p90, %p91
      %p94 = scmp.ne.s32.totalorder %s79, %s93
      %p95 = scmp.eq.s32.totalorder %s27, 0
      %p96 = por %p94, %p95
      %s98 = sadd.s32 %s97, 1
      %p101 = scmp.eq.s32.totalorder %s21, 1
      %p102 = scmp.ne.s32.totalorder %s97, %s99
      %p103 = scmp.eq.s32.totalorder %s21, 0
      %p104 = por %p102, %p103
      %p105 = scmp.ne.s32.totalorder %s97, %s99
      %p106 = scmp.eq.s32.totalorder %s26, 1
      %p107 = por %p105, %p106
      %p108 = scmp.ne.s32.totalorder %s99, %s100
      %p109 = scmp.eq.s32.totalorder %s26, 0
      %p110 = por %p108, %p109
      %p111 = scmp.ne.s32.totalorder %s99, %s100
      %p112 = scmp.eq.s32.totalorder %s27, 1
      %p113 = por %p111, %p112
      %p115 = scmp.ne.s32.totalorder %s100, %s114
      %p116 = scmp.eq.s32.totalorder %s27, 0
      %p117 = por %p115, %p116
      %s119 = sadd.s32 %s118, 1
      %p122 = scmp.eq.s32.totalorder %s21, 1
      %p123 = scmp.ne.s32.totalorder %s118, %s120
      %p124 = scmp.eq.s32.totalorder %s21, 0
      %p125 = por %p123, %p124
      %p126 = scmp.ne.s32.totalorder %s118, %s120
      %p127 = scmp.eq.s32.totalorder %s26, 1
      %p128 = por %p126, %p127
      %p129 = scmp.ne.s32.totalorder %s120, %s121
      %p130 = scmp.eq.s32.totalorder %s26, 0
      %p131 = por %p129, %p130
      %p132 = scmp.ne.s32.totalorder %s120, %s121
      %p133 = scmp.eq.s32.totalorder %s27, 1
      %p134 = por %p132, %p133
      %p136 = scmp.ne.s32.totalorder %s121, %s135
      %p137 = scmp.eq.s32.totalorder %s27, 0
      %p138 = por %p136, %p137
      %s140 = sadd.s32 %s139, 1
      %p143 = scmp.eq.s32.totalorder %s21, 1
      %p144 = scmp.ne.s32.totalorder %s139, %s141
      %p145 = scmp.eq.s32.totalorder %s21, 0
      %p146 = por %p144, %p145
      %p147 = scmp.ne.s32.totalorder %s139, %s141
      %p148 = scmp.eq.s32.totalorder %s26, 1
      %p149 = por %p147, %p148
      %p150 = scmp.ne.s32.totalorder %s141, %s142
      %p151 = scmp.eq.s32.totalorder %s26, 0
      %p152 = por %p150, %p151
      %p153 = scmp.ne.s32.totalorder %s141, %s142
      %p154 = scmp.eq.s32.totalorder %s27, 1
      %p155 = por %p153, %p154
      %p157 = scmp.ne.s32.totalorder %s142, %s156
      %p158 = scmp.eq.s32.totalorder %s27, 0
      %p159 = por %p157, %p158
      %s161 = sadd.s32 %s160, 1
      %p164 = scmp.eq.s32.totalorder %s21, 1
      %p165 = scmp.ne.s32.totalorder %s160, %s162
      %p166 = scmp.eq.s32.totalorder %s21, 0
      %p167 = por %p165, %p166
      %p168 = scmp.ne.s32.totalorder %s160, %s162
      %p169 = scmp.eq.s32.totalorder %s26, 1
      %p170 = por %p168, %p169
      %p171 = scmp.ne.s32.totalorder %s162, %s163
      %p172 = scmp.eq.s32.totalorder %s26, 0
      %p173 = por %p171, %p172
      %p174 = scmp.ne.s32.totalorder %s162, %s163
      %p175 = scmp.eq.s32.totalorder %s27, 1
      %p176 = por %p174, %p175
      %p178 = scmp.ne.s32.totalorder %s163, %s177
      %p179 = scmp.eq.s32.totalorder %s27, 0
      %p180 = por %p178, %p179
      %s181 = ssub.s32 %s21, %s28
      %p182 = scmp.eq.s32.totalorder %s181, 0
      %s184 = sadd.s32 %s183, 1
      %s185 = scalar_select %p182, %s183, %s184
      %p188 = pneg %p182
      %p189 = scmp.eq.s32.totalorder %s21, 1
      %p190 = por %p188, %p189
      %p191 = scmp.ne.s32.totalorder %s183, %s186
      %p192 = scmp.eq.s32.totalorder %s21, 0
      %p193 = por %p191, %p192
      %p194 = scmp.ne.s32.totalorder %s183, %s186
      %p195 = scmp.eq.s32.totalorder %s26, 1
      %p196 = por %p194, %p195
      %p197 = scmp.ne.s32.totalorder %s186, %s187
      %p198 = scmp.eq.s32.totalorder %s26, 0
      %p199 = por %p197, %p198
      %p200 = scmp.ne.s32.totalorder %s186, %s187
      %p201 = scmp.eq.s32.totalorder %s27, 1
      %p202 = por %p200, %p201
      %p204 = scmp.ne.s32.totalorder %s187, %s203
      %p205 = scmp.eq.s32.totalorder %s27, 0
      %p206 = por %p204, %p205
      %p207 = scmp.le.s32.totalorder 1, %s21
      %p208 = scmp.lt.s32.totalorder %s21, 3
      %p209 = pnand %p207, %p208
      %p210 = pneg %p209
      // Predicated region
      $region9: #{tpu_custom_call.1} parent=5 // pred_check
        _
      $region10: #{tpu_custom_call.1} parent=5 // pred_check_branch
        %212 = sbr.rel (%p209) target = $region12
      $region11: #{tpu_custom_call.1} parent=5 // pred_region
        %s213 = ssub.s32 %s21, 1
        // Predicated region
        $region13: #{tpu_custom_call.1} parent=11 // pred_check
          %p214 = pneg %p68
        $region14: #{tpu_custom_call.1} parent=11 // pred_check_branch
          %216 = sbr.rel (%p214) target = $region16
        $region15: #{tpu_custom_call.1} parent=11 // pred_region
          %s218 = ssub.s32 1024, 1024
          %219 = vsyncadd [#allocation7], %s218
          %s220 = sshll.u32 [#allocation6], 4
          %s221 = int_to_ptr.vmem [resolvable:$true] %s220
          %226 = dma.hbm_to_vmem [thread:$0]  %s1, 1024, %s221, [#allocation7], 64, 64, 4
        $region16: #{tpu_custom_call.1} parent=11 // pred_fallthru
          _
        // Predicated region
        $region17: #{tpu_custom_call.1} parent=11 // pred_check
          %p227 = pneg %p89
        $region18: #{tpu_custom_call.1} parent=11 // pred_check_branch
          %229 = sbr.rel (%p227) target = $region20
        $region19: #{tpu_custom_call.1} parent=11 // pred_region
          _
        $region20: #{tpu_custom_call.1} parent=11 // pred_fallthru
          _
        // Predicated region
        $region21: #{tpu_custom_call.1} parent=11 // pred_check
          %p230 = pneg %p110
        $region22: #{tpu_custom_call.1} parent=11 // pred_check_branch
          %232 = sbr.rel (%p230) target = $region24
        $region23: #{tpu_custom_call.1} parent=11 // pred_region
          %s234 = ssub.s32 9216, 9216
          %235 = vsyncadd [#allocation7], %s234
          %s236 = sshll.u32 [#allocation8], 4
          %s237 = int_to_ptr.vmem [resolvable:$true] %s236
          %242 = dma.hbm_to_vmem [thread:$0]  %s3, 9216, %s237, [#allocation7], 64, 64, 4
        $region24: #{tpu_custom_call.1} parent=11 // pred_fallthru
          _
        // Predicated region
        $region25: #{tpu_custom_call.1} parent=11 // pred_check
          %p243 = pneg %p131
        $region26: #{tpu_custom_call.1} parent=11 // pred_check_branch
          %245 = sbr.rel (%p243) target = $region28
        $region27: #{tpu_custom_call.1} parent=11 // pred_region
          _
        $region28: #{tpu_custom_call.1} parent=11 // pred_fallthru
          _
        // Predicated region
        $region29: #{tpu_custom_call.1} parent=11 // pred_check
          %p246 = pneg %p152
        $region30: #{tpu_custom_call.1} parent=11 // pred_check_branch
          %248 = sbr.rel (%p246) target = $region32
        $region31: #{tpu_custom_call.1} parent=11 // pred_region
          %s250 = ssub.s32 1024, 1024
          %251 = vsyncadd [#allocation10], %s250
          %s252 = sshll.u32 [#allocation9], 4
          %s253 = int_to_ptr.vmem [resolvable:$true] %s252
          %258 = dma.hbm_to_vmem [thread:$0]  %s5, 1024, %s253, [#allocation10], 64, 64, 4
        $region32: #{tpu_custom_call.1} parent=11 // pred_fallthru
          _
        // Predicated region
        $region33: #{tpu_custom_call.1} parent=11 // pred_check
          %p259 = pneg %p173
        $region34: #{tpu_custom_call.1} parent=11 // pred_check_branch
          %261 = sbr.rel (%p259) target = $region36
        $region35: #{tpu_custom_call.1} parent=11 // pred_region
          _
        $region36: #{tpu_custom_call.1} parent=11 // pred_fallthru
          _
      $region12: #{tpu_custom_call.1} parent=5 // pred_fallthru
        _
      %p262 = scmp.lt.s32.totalorder %s21, 2
      // Predicated region
      $region37: #{tpu_custom_call.1} parent=5 // pred_check
        %p263 = pneg %p262
      $region38: #{tpu_custom_call.1} parent=5 // pred_check_branch
        %265 = sbr.rel (%p263) target = $region40
      $region39: #{tpu_custom_call.1} parent=5 // pred_region
        // Predicated region
        $region41: #{tpu_custom_call.1} parent=39 // pred_check
          %p266 = pneg %p41
        $region42: #{tpu_custom_call.1} parent=39 // pred_check_branch
          %268 = sbr.rel (%p266) target = $region44
        $region43: #{tpu_custom_call.1} parent=39 // pred_region
          %s269 = sand.u32 %s31, 1
          %s270 = scalar_lea.sflag [#allocation4], %s269
          %s271 = sand.u32 %s31, 1
          %s272 = smul.addr %s271, 256
          %s273 = scalar_lea.vmem [#allocation3], %s272
          %s275 = ssub.s32 4096, 4096
          %276 = vsyncadd %s270, %s275
          %s277 = smul.addr %s21, 32
          %s278 = smul.addr %s277, 128
          %s279 = scalar_lea.hbm %s0, %s278
          %s280 = sshll.u32 %s273, 4
          %s281 = int_to_ptr.vmem [resolvable:$true] %s280
          %286 = dma.hbm_to_vmem [thread:$0]  %s279, 4096, %s281, %s270, 128, 128, 8
        $region44: #{tpu_custom_call.1} parent=39 // pred_fallthru
          _
      $region40: #{tpu_custom_call.1} parent=5 // pred_fallthru
        _
      %p287 = scmp.le.s32.totalorder 1, %s21
      %p288 = scmp.lt.s32.totalorder %s21, 3
      %p289 = pnand %p287, %p288
      %p290 = pneg %p289
      // Predicated region
      $region45: #{tpu_custom_call.1} parent=5 // pred_check
        _
      $region46: #{tpu_custom_call.1} parent=5 // pred_check_branch
        %292 = sbr.rel (%p289) target = $region48
      $region47: #{tpu_custom_call.1} parent=5 // pred_region
        %s293 = ssub.s32 %s21, 1
        %s294 = sand.u32 %s34, 1
        %s295 = scalar_lea.sflag [#allocation4], %s294
        %s296 = sand.u32 %s34, 1
        %s297 = smul.addr %s296, 256
        %s298 = scalar_lea.vmem [#allocation3], %s297
        // Predicated region
        $region49: #{tpu_custom_call.1} parent=47 // pred_check
          %p299 = pneg %p47
        $region50: #{tpu_custom_call.1} parent=47 // pred_check_branch
          %301 = sbr.rel (%p299) target = $region52
        $region51: #{tpu_custom_call.1} parent=47 // pred_region
          %302 = dma.done %s295, 4096
        $region52: #{tpu_custom_call.1} parent=47 // pred_fallthru
          _
        // Predicated region
        $region53: #{tpu_custom_call.1} parent=47 // pred_check
          %p303 = pneg %p68
        $region54: #{tpu_custom_call.1} parent=47 // pred_check_branch
          %305 = sbr.rel (%p303) target = $region56
        $region55: #{tpu_custom_call.1} parent=47 // pred_region
          %306 = dma.done [#allocation7], 1024
        $region56: #{tpu_custom_call.1} parent=47 // pred_fallthru
          _
        // Predicated region
        $region57: #{tpu_custom_call.1} parent=47 // pred_check
          %p307 = pneg %p110
        $region58: #{tpu_custom_call.1} parent=47 // pred_check_branch
          %309 = sbr.rel (%p307) target = $region60
        $region59: #{tpu_custom_call.1} parent=47 // pred_region
          %310 = dma.done [#allocation7], 9216
        $region60: #{tpu_custom_call.1} parent=47 // pred_fallthru
          _
        // Predicated region
        $region61: #{tpu_custom_call.1} parent=47 // pred_check
          %p311 = pneg %p152
        $region62: #{tpu_custom_call.1} parent=47 // pred_check_branch
          %313 = sbr.rel (%p311) target = $region64
        $region63: #{tpu_custom_call.1} parent=47 // pred_region
          %314 = dma.done [#allocation10], 1024
        $region64: #{tpu_custom_call.1} parent=47 // pred_fallthru
          _
        %s315 = sand.u32 %s34, 1
        %s316 = scalar_lea.sflag [#allocation4], %s315
        %s317 = sand.u32 %s34, 1
        %s318 = smul.addr %s317, 256
        %s319 = scalar_lea.vmem [#allocation3], %s318
        %p320 = pneg %p47
        %p321 = pneg %p44
        %p322 = pneg %p68
        %p323 = pneg %p65
        %p324 = pneg %p89
        %p325 = pneg %p86
        %p326 = pneg %p110
        %p327 = pneg %p107
        %p328 = pneg %p131
        %p329 = pneg %p128
        %p330 = pneg %p152
        %p331 = pneg %p149
        %p332 = pneg %p173
        %p333 = pneg %p170
        %p334 = pneg %p199
        %p335 = pneg %p196
        %s336 = sand.u32 %s186, 1
        %s337 = scalar_lea.sflag [#allocation5], %s336
        %s338 = sand.u32 %s186, 1
        %s339 = smul.addr %s338, 256
        %s340 = scalar_lea.vmem [#allocation11], %s339
        %v342 = vld [vmem:[%s298] sm:$0xff]
        %v343 = vld [vmem:[%s298 + $0x8] sm:$0xff]
        %v344 = vld [vmem:[%s298 + $0x10] sm:$0xff]
        %v345 = vld [vmem:[%s298 + $0x18] sm:$0xff]
        %v346 = vld [vmem:[%s298 + $0x20] sm:$0xff]
        %v347 = vld [vmem:[%s298 + $0x28] sm:$0xff]
        %v348 = vld [vmem:[%s298 + $0x30] sm:$0xff]
        %v349 = vld [vmem:[%s298 + $0x38] sm:$0xff]
        %v350 = vld [vmem:[%s298 + $0x40] sm:$0xff]
        %v351 = vld [vmem:[%s298 + $0x48] sm:$0xff]
        %v352 = vld [vmem:[%s298 + $0x50] sm:$0xff]
        %v353 = vld [vmem:[%s298 + $0x58] sm:$0xff]
        %v354 = vld [vmem:[%s298 + $0x60] sm:$0xff]
        %v355 = vld [vmem:[%s298 + $0x68] sm:$0xff]
        %v356 = vld [vmem:[%s298 + $0x70] sm:$0xff]
        %v357 = vld [vmem:[%s298 + $0x78] sm:$0xff]
        %v358 = vld [vmem:[%s298 + $0x80] sm:$0xff]
        %v359 = vld [vmem:[%s298 + $0x88] sm:$0xff]
        %v360 = vld [vmem:[%s298 + $0x90] sm:$0xff]
        %v361 = vld [vmem:[%s298 + $0x98] sm:$0xff]
        %v362 = vld [vmem:[%s298 + $0xa0] sm:$0xff]
        %v363 = vld [vmem:[%s298 + $0xa8] sm:$0xff]
        %v364 = vld [vmem:[%s298 + $0xb0] sm:$0xff]
        %v365 = vld [vmem:[%s298 + $0xb8] sm:$0xff]
        %v366 = vld [vmem:[%s298 + $0xc0] sm:$0xff]
        %v367 = vld [vmem:[%s298 + $0xc8] sm:$0xff]
        %v368 = vld [vmem:[%s298 + $0xd0] sm:$0xff]
        %v369 = vld [vmem:[%s298 + $0xd8] sm:$0xff]
        %v370 = vld [vmem:[%s298 + $0xe0] sm:$0xff]
        %v371 = vld [vmem:[%s298 + $0xe8] sm:$0xff]
        %v372 = vld [vmem:[%s298 + $0xf0] sm:$0xff]
        %v373 = vld [vmem:[%s298 + $0xf8] sm:$0xff]
        %v374 = vpack.c.bf16 %v343, %v342
        %v375 = vpack.c.bf16 %v345, %v344
        %v376 = vpack.c.bf16 %v347, %v346
        %v377 = vpack.c.bf16 %v349, %v348
        %v378 = vpack.c.bf16 %v351, %v350
        %v379 = vpack.c.bf16 %v353, %v352
        %v380 = vpack.c.bf16 %v355, %v354
        %v381 = vpack.c.bf16 %v357, %v356
        %v382 = vpack.c.bf16 %v359, %v358
        %v383 = vpack.c.bf16 %v361, %v360
        %v384 = vpack.c.bf16 %v363, %v362
        %v385 = vpack.c.bf16 %v365, %v364
        %v386 = vpack.c.bf16 %v367, %v366
        %v387 = vpack.c.bf16 %v369, %v368
        %v388 = vpack.c.bf16 %v371, %v370
        %v389 = vpack.c.bf16 %v373, %v372
        %v390 = vld [vmem:[#allocation6] sm:$0xf]
        %v391 = vld [vmem:[#allocation6 + $0x4] sm:$0xf]
        %v392 = vld [vmem:[#allocation6 + $0x8] sm:$0xf]
        %v393 = vld [vmem:[#allocation6 + $0xc] sm:$0xf]
        %v394 = vld [vmem:[#allocation6 + $0x10] sm:$0xf]
        %v395 = vld [vmem:[#allocation6 + $0x14] sm:$0xf]
        %v396 = vld [vmem:[#allocation6 + $0x18] sm:$0xf]
        %v397 = vld [vmem:[#allocation6 + $0x1c] sm:$0xf]
        %v398 = vld [vmem:[#allocation6 + $0x20] sm:$0xf]
        %v399 = vld [vmem:[#allocation6 + $0x24] sm:$0xf]
        %v400 = vld [vmem:[#allocation6 + $0x28] sm:$0xf]
        %v401 = vld [vmem:[#allocation6 + $0x2c] sm:$0xf]
        %v402 = vld [vmem:[#allocation6 + $0x30] sm:$0xf]
        %v403 = vld [vmem:[#allocation6 + $0x34] sm:$0xf]
        %v404 = vld [vmem:[#allocation6 + $0x38] sm:$0xf]
        %v405 = vld [vmem:[#allocation6 + $0x3c] sm:$0xf]
        %v406 = vld [vmem:[%s2] sm:$0x1]
        %v408 = vlaneseq
        %v409 = vshrl.u32 %v408, 7
        %v410 = vsub.s32 0, %v409
        %v411 = vrot.slane %v406, %v410
        %v429 = vunpack.c.l.b16 %v390
        %v430 = vunpack.c.l.b16 %v391
        %v431 = vunpack.c.l.b16 %v392
        %v432 = vunpack.c.l.b16 %v393
        %v433 = vunpack.c.l.b16 %v394
        %v434 = vunpack.c.l.b16 %v395
        %v435 = vunpack.c.l.b16 %v396
        %v436 = vunpack.c.l.b16 %v397
        %v437 = vunpack.c.l.b16 %v398
        %v438 = vunpack.c.l.b16 %v399
        %v439 = vunpack.c.l.b16 %v400
        %v440 = vunpack.c.l.b16 %v401
        %v441 = vunpack.c.l.b16 %v402
        %v442 = vunpack.c.l.b16 %v403
        %v443 = vunpack.c.l.b16 %v404
        %v444 = vunpack.c.l.b16 %v405
        %v445 = vpack.c.b16 %v430, %v429
        %v446 = vpack.c.b16 %v432, %v431
        %v447 = vpack.c.b16 %v434, %v433
        %v448 = vpack.c.b16 %v436, %v435
        %v449 = vpack.c.b16 %v438, %v437
        %v450 = vpack.c.b16 %v440, %v439
        %v451 = vpack.c.b16 %v442, %v441
        %v452 = vpack.c.b16 %v444, %v443
        %461 = vmatprep.subr.bf16.mxu0 0
        %462 = vmatpush1.bf16.msra.mxu0 %v445
        %463 = vmatprep.subr.bf16.mxu0 0
        %464 = vmatpush1.bf16.msra.mxu0 %v446
        %465 = vmatprep.subr.bf16.mxu0 0
        %466 = vmatpush1.bf16.msra.mxu0 %v447
        %467 = vmatprep.subr.bf16.mxu0 0
        %468 = vmatpush1.bf16.msra.mxu0 %v448
        %469 = vmatprep.subr.bf16.mxu0 0
        %470 = vmatpush1.bf16.msra.mxu0 %v449
        %471 = vmatprep.subr.bf16.mxu0 0
        %472 = vmatpush1.bf16.msra.mxu0 %v450
        %473 = vmatprep.subr.bf16.mxu0 0
        %474 = vmatpush1.bf16.msra.mxu0 %v451
        %475 = vmatprep.subr.bf16.mxu0 0
        %476 = vmatpush1.bf16.msra.mxu0 %v452
        %477 = vmatprep.subr.bf16.mxu0 0
        %478 = vmatpush1.bf16.msra.mxu0 0
        %479 = vmatprep.subr.bf16.mxu0 0
        %480 = vmatpush1.bf16.msra.mxu0 0
        %481 = vmatprep.subr.bf16.mxu0 0
        %482 = vmatpush1.bf16.msra.mxu0 0
        %483 = vmatprep.subr.bf16.mxu0 0
        %484 = vmatpush1.bf16.msra.mxu0 0
        %485 = vmatprep.subr.bf16.mxu0 0
        %486 = vmatpush1.bf16.msra.mxu0 0
        %487 = vmatprep.subr.bf16.mxu0 0
        %488 = vmatpush1.bf16.msra.mxu0 0
        %489 = vmatprep.subr.bf16.mxu0 0
        %490 = vmatpush1.bf16.msra.mxu0 0
        %491 = vmatprep.subr.bf16.mxu0 0
        %492 = vmatpush1.bf16.msra.mxu0 0
        %493 = vmatprep.mubr.bf16.mxu0 0
        %494 = vmatmul.mubr.bf16.gmra.mrb[0].mxu0 %v374
        %v495 = vpop.f32.mrb[0].mxu0
        %v496 = vadd.f32 %v411, %v495
        %v497 = vpop.f32.mrb[0].mxu0
        %v498 = vpop.f32.mrb[0].mxu0
        %v499 = vadd.f32 %v411, %v498
        %v500 = vpop.f32.mrb[0].mxu0
        %501 = vmatprep.mubr.bf16.mxu0 0
        %502 = vmatmul.mubr.bf16.gmra.mrb[0].mxu0 %v375
        %v503 = vpop.f32.mrb[0].mxu0
        %v504 = vadd.f32 %v411, %v503
        %v505 = vpop.f32.mrb[0].mxu0
        %v506 = vpop.f32.mrb[0].mxu0
        %v507 = vadd.f32 %v411, %v506
        %v508 = vpop.f32.mrb[0].mxu0
        %509 = vmatprep.mubr.bf16.mxu0 0
        %510 = vmatmul.mubr.bf16.gmra.mrb[0].mxu0 %v376
        %v511 = vpop.f32.mrb[0].mxu0
        %v512 = vadd.f32 %v411, %v511
        %v513 = vpop.f32.mrb[0].mxu0
        %v514 = vpop.f32.mrb[0].mxu0
        %v515 = vadd.f32 %v411, %v514
        %v516 = vpop.f32.mrb[0].mxu0
        %517 = vmatprep.mubr.bf16.mxu0 0
        %518 = vmatmul.mubr.bf16.gmra.mrb[0].mxu0 %v377
        %v519 = vpop.f32.mrb[0].mxu0
        %v520 = vadd.f32 %v411, %v519
        %v521 = vpop.f32.mrb[0].mxu0
        %v522 = vpop.f32.mrb[0].mxu0
        %v523 = vadd.f32 %v411, %v522
        %v524 = vpop.f32.mrb[0].mxu0
        %525 = vmatprep.mubr.bf16.mxu0 0
        %526 = vmatmul.mubr.bf16.gmra.mrb[0].mxu0 %v378
        %v527 = vpop.f32.mrb[0].mxu0
        %v528 = vadd.f32 %v411, %v527
        %v529 = vpop.f32.mrb[0].mxu0
        %v530 = vpop.f32.mrb[0].mxu0
        %v531 = vadd.f32 %v411, %v530
        %v532 = vpop.f32.mrb[0].mxu0
        %533 = vmatprep.mubr.bf16.mxu0 0
        %534 = vmatmul.mubr.bf16.gmra.mrb[0].mxu0 %v379
        %v535 = vpop.f32.mrb[0].mxu0
        %v536 = vadd.f32 %v411, %v535
        %v537 = vpop.f32.mrb[0].mxu0
        %v538 = vpop.f32.mrb[0].mxu0
        %v539 = vadd.f32 %v411, %v538
        %v540 = vpop.f32.mrb[0].mxu0
        %541 = vmatprep.mubr.bf16.mxu0 0
        %542 = vmatmul.mubr.bf16.gmra.mrb[0].mxu0 %v380
        %v543 = vpop.f32.mrb[0].mxu0
        %v544 = vadd.f32 %v411, %v543
        %v545 = vpop.f32.mrb[0].mxu0
        %v546 = vpop.f32.mrb[0].mxu0
        %v547 = vadd.f32 %v411, %v546
        %v548 = vpop.f32.mrb[0].mxu0
        %549 = vmatprep.mubr.bf16.mxu0 0
        %550 = vmatmul.mubr.bf16.gmra.mrb[0].mxu0 %v381
        %v551 = vpop.f32.mrb[0].mxu0
        %v552 = vadd.f32 %v411, %v551
        %v553 = vpop.f32.mrb[0].mxu0
        %v554 = vpop.f32.mrb[0].mxu0
        %v555 = vadd.f32 %v411, %v554
        %v556 = vpop.f32.mrb[0].mxu0
        %557 = vmatprep.mubr.bf16.mxu0 0
        %558 = vmatmul.mubr.bf16.gmra.mrb[0].mxu0 %v382
        %v559 = vpop.f32.mrb[0].mxu0
        %v560 = vadd.f32 %v411, %v559
        %v561 = vpop.f32.mrb[0].mxu0
        %v562 = vpop.f32.mrb[0].mxu0
        %v563 = vadd.f32 %v411, %v562
        %v564 = vpop.f32.mrb[0].mxu0
        %565 = vmatprep.mubr.bf16.mxu0 0
        %566 = vmatmul.mubr.bf16.gmra.mrb[0].mxu0 %v383
        %v567 = vpop.f32.mrb[0].mxu0
        %v568 = vadd.f32 %v411, %v567
        %v569 = vpop.f32.mrb[0].mxu0
        %v570 = vpop.f32.mrb[0].mxu0
        %v571 = vadd.f32 %v411, %v570
        %v572 = vpop.f32.mrb[0].mxu0
        %573 = vmatprep.mubr.bf16.mxu0 0
        %574 = vmatmul.mubr.bf16.gmra.mrb[0].mxu0 %v384
        %v575 = vpop.f32.mrb[0].mxu0
        %v576 = vadd.f32 %v411, %v575
        %v577 = vpop.f32.mrb[0].mxu0
        %v578 = vpop.f32.mrb[0].mxu0
        %v579 = vadd.f32 %v411, %v578
        %v580 = vpop.f32.mrb[0].mxu0
        %581 = vmatprep.mubr.bf16.mxu0 0
        %582 = vmatmul.mubr.bf16.gmra.mrb[0].mxu0 %v385
        %v583 = vpop.f32.mrb[0].mxu0
        %v584 = vadd.f32 %v411, %v583
        %v585 = vpop.f32.mrb[0].mxu0
        %v586 = vpop.f32.mrb[0].mxu0
        %v587 = vadd.f32 %v411, %v586
        %v588 = vpop.f32.mrb[0].mxu0
        %589 = vmatprep.mubr.bf16.mxu0 0
        %590 = vmatmul.mubr.bf16.gmra.mrb[0].mxu0 %v386
        %v591 = vpop.f32.mrb[0].mxu0
        %v592 = vadd.f32 %v411, %v591
        %v593 = vpop.f32.mrb[0].mxu0
        %v594 = vpop.f32.mrb[0].mxu0
        %v595 = vadd.f32 %v411, %v594
        %v596 = vpop.f32.mrb[0].mxu0
        %597 = vmatprep.mubr.bf16.mxu0 0
        %598 = vmatmul.mubr.bf16.gmra.mrb[0].mxu0 %v387
        %v599 = vpop.f32.mrb[0].mxu0
        %v600 = vadd.f32 %v411, %v599
        %v601 = vpop.f32.mrb[0].mxu0
        %v602 = vpop.f32.mrb[0].mxu0
        %v603 = vadd.f32 %v411, %v602
        %v604 = vpop.f32.mrb[0].mxu0
        %605 = vmatprep.mubr.bf16.mxu0 0
        %606 = vmatmul.mubr.bf16.gmra.mrb[0].mxu0 %v388
        %v607 = vpop.f32.mrb[0].mxu0
        %v608 = vadd.f32 %v411, %v607
        %v609 = vpop.f32.mrb[0].mxu0
        %v610 = vpop.f32.mrb[0].mxu0
        %v611 = vadd.f32 %v411, %v610
        %v612 = vpop.f32.mrb[0].mxu0
        %613 = vmatprep.mubr.bf16.mxu0 0
        %614 = vmatmul.mubr.bf16.gmra.mrb[0].mxu0 %v389
        %v615 = vpop.f32.mrb[0].mxu0
        %v616 = vadd.f32 %v411, %v615
        %v617 = vpop.f32.mrb[0].mxu0
        %v618 = vpop.f32.mrb[0].mxu0
        %v619 = vadd.f32 %v411, %v618
        %v620 = vpop.f32.mrb[0].mxu0
        %621 = vdwg.mxu0
        %v622 = vmax.f32 %v496, 0.0
        %v623 = vmax.f32 %v499, 0.0
        %v624 = vmax.f32 %v504, 0.0
        %v625 = vmax.f32 %v507, 0.0
        %v626 = vmax.f32 %v512, 0.0
        %v627 = vmax.f32 %v515, 0.0
        %v628 = vmax.f32 %v520, 0.0
        %v629 = vmax.f32 %v523, 0.0
        %v630 = vmax.f32 %v528, 0.0
        %v631 = vmax.f32 %v531, 0.0
        %v632 = vmax.f32 %v536, 0.0
        %v633 = vmax.f32 %v539, 0.0
        %v634 = vmax.f32 %v544, 0.0
        %v635 = vmax.f32 %v547, 0.0
        %v636 = vmax.f32 %v552, 0.0
        %v637 = vmax.f32 %v555, 0.0
        %v638 = vmax.f32 %v560, 0.0
        %v639 = vmax.f32 %v563, 0.0
        %v640 = vmax.f32 %v568, 0.0
        %v641 = vmax.f32 %v571, 0.0
        %v642 = vmax.f32 %v576, 0.0
        %v643 = vmax.f32 %v579, 0.0
        %v644 = vmax.f32 %v584, 0.0
        %v645 = vmax.f32 %v587, 0.0
        %v646 = vmax.f32 %v592, 0.0
        %v647 = vmax.f32 %v595, 0.0
        %v648 = vmax.f32 %v600, 0.0
        %v649 = vmax.f32 %v603, 0.0
        %v650 = vmax.f32 %v608, 0.0
        %v651 = vmax.f32 %v611, 0.0
        %v652 = vmax.f32 %v616, 0.0
        %v653 = vmax.f32 %v619, 0.0
        %654 = vst [vmem:[#allocation2] sm:$0xff] 0.0
        %655 = vst [vmem:[#allocation2 + $0x8] sm:$0xff] 0.0
        %656 = vst [vmem:[#allocation2 + $0x10] sm:$0x3] 0.0
        %s657 = scalar_lea.vmem [#allocation2], 408
        %658 = vst [vmem:[%s657] sm:$0xff] 0.0
        %659 = vst [vmem:[%s657 + $0x8] sm:$0xff] 0.0
        %660 = vst [vmem:[%s657 + $0x10] sm:$0x3] 0.0
        %661 = vst [vmem:[#allocation2] sm:$0x1] 0.0
        %662 = vst [vmem:[#allocation2 + $0x18] sm:$0x1] 0.0
        %663 = vst [vmem:[#allocation2 + $0x30] sm:$0x1] 0.0
        %664 = vst [vmem:[#allocation2 + $0x48] sm:$0x1] 0.0
        %665 = vst [vmem:[#allocation2 + $0x60] sm:$0x1] 0.0
        %666 = vst [vmem:[#allocation2 + $0x78] sm:$0x1] 0.0
        %667 = vst [vmem:[#allocation2 + $0x90] sm:$0x1] 0.0
        %668 = vst [vmem:[#allocation2 + $0xa8] sm:$0x1] 0.0
        %669 = vst [vmem:[#allocation2 + $0xc0] sm:$0x1] 0.0
        %670 = vst [vmem:[#allocation2 + $0xd8] sm:$0x1] 0.0
        %671 = vst [vmem:[#allocation2 + $0xf0] sm:$0x1] 0.0
        %672 = vst [vmem:[#allocation2 + $0x108] sm:$0x1] 0.0
        %673 = vst [vmem:[#allocation2 + $0x120] sm:$0x1] 0.0
        %674 = vst [vmem:[#allocation2 + $0x138] sm:$0x1] 0.0
        %675 = vst [vmem:[#allocation2 + $0x150] sm:$0x1] 0.0
        %676 = vst [vmem:[#allocation2 + $0x168] sm:$0x1] 0.0
        %677 = vst [vmem:[#allocation2 + $0x180] sm:$0x1] 0.0
        %678 = vst [vmem:[#allocation2 + $0x198] sm:$0x1] 0.0
        %679 = vst [vmem:[#allocation2 + $0x11] sm:$0x1] 0.0
        %680 = vst [vmem:[#allocation2 + $0x29] sm:$0x1] 0.0
        %681 = vst [vmem:[#allocation2 + $0x41] sm:$0x1] 0.0
        %682 = vst [vmem:[#allocation2 + $0x59] sm:$0x1] 0.0
        %683 = vst [vmem:[#allocation2 + $0x71] sm:$0x1] 0.0
        %684 = vst [vmem:[#allocation2 + $0x89] sm:$0x1] 0.0
        %685 = vst [vmem:[#allocation2 + $0xa1] sm:$0x1] 0.0
        %686 = vst [vmem:[#allocation2 + $0xb9] sm:$0x1] 0.0
        %687 = vst [vmem:[#allocation2 + $0xd1] sm:$0x1] 0.0
        %688 = vst [vmem:[#allocation2 + $0xe9] sm:$0x1] 0.0
        %689 = vst [vmem:[#allocation2 + $0x101] sm:$0x1] 0.0
        %690 = vst [vmem:[#allocation2 + $0x119] sm:$0x1] 0.0
        %691 = vst [vmem:[#allocation2 + $0x131] sm:$0x1] 0.0
        %692 = vst [vmem:[#allocation2 + $0x149] sm:$0x1] 0.0
        %693 = vst [vmem:[#allocation2 + $0x161] sm:$0x1] 0.0
        %694 = vst [vmem:[#allocation2 + $0x179] sm:$0x1] 0.0
        %695 = vst [vmem:[#allocation2 + $0x191] sm:$0x1] 0.0
        %696 = vst [vmem:[#allocation2 + $0x1a9] sm:$0x1] 0.0
        %s697 = scalar_lea.vmem [#allocation2], 24
        %698 = vst [vmem:[%s697 + $0x1] sm:$0xff] %v622
        %699 = vst [vmem:[%s697 + $0x9] sm:$0xff] %v623
        %700 = vst [vmem:[%s697 + $0x19] sm:$0xff] %v624
        %701 = vst [vmem:[%s697 + $0x21] sm:$0xff] %v625
        %702 = vst [vmem:[%s697 + $0x31] sm:$0xff] %v626
        %703 = vst [vmem:[%s697 + $0x39] sm:$0xff] %v627
        %704 = vst [vmem:[%s697 + $0x49] sm:$0xff] %v628
        %705 = vst [vmem:[%s697 + $0x51] sm:$0xff] %v629
        %706 = vst [vmem:[%s697 + $0x61] sm:$0xff] %v630
        %707 = vst [vmem:[%s697 + $0x69] sm:$0xff] %v631
        %708 = vst [vmem:[%s697 + $0x79] sm:$0xff] %v632
        %709 = vst [vmem:[%s697 + $0x81] sm:$0xff] %v633
        %710 = vst [vmem:[%s697 + $0x91] sm:$0xff] %v634
        %711 = vst [vmem:[%s697 + $0x99] sm:$0xff] %v635
        %712 = vst [vmem:[%s697 + $0xa9] sm:$0xff] %v636
        %713 = vst [vmem:[%s697 + $0xb1] sm:$0xff] %v637
        %714 = vst [vmem:[%s697 + $0xc1] sm:$0xff] %v638
        %715 = vst [vmem:[%s697 + $0xc9] sm:$0xff] %v639
        %716 = vst [vmem:[%s697 + $0xd9] sm:$0xff] %v640
        %717 = vst [vmem:[%s697 + $0xe1] sm:$0xff] %v641
        %718 = vst [vmem:[%s697 + $0xf1] sm:$0xff] %v642
        %719 = vst [vmem:[%s697 + $0xf9] sm:$0xff] %v643
        %720 = vst [vmem:[%s697 + $0x109] sm:$0xff] %v644
        %721 = vst [vmem:[%s697 + $0x111] sm:$0xff] %v645
        %722 = vst [vmem:[%s697 + $0x121] sm:$0xff] %v646
        %723 = vst [vmem:[%s697 + $0x129] sm:$0xff] %v647
        %724 = vst [vmem:[%s697 + $0x139] sm:$0xff] %v648
        %725 = vst [vmem:[%s697 + $0x141] sm:$0xff] %v649
        %726 = vst [vmem:[%s697 + $0x151] sm:$0xff] %v650
        %727 = vst [vmem:[%s697 + $0x159] sm:$0xff] %v651
        %728 = vst [vmem:[%s697 + $0x169] sm:$0xff] %v652
        %729 = vst [vmem:[%s697 + $0x171] sm:$0xff] %v653
        %v730 = vld [vmem:[#allocation2] sm:$0xff]
        %v731 = vld [vmem:[#allocation2 + $0x8] sm:$0xff]
        %v732 = vld [vmem:[#allocation2 + $0x18] sm:$0xff]
        %v733 = vld [vmem:[#allocation2 + $0x20] sm:$0xff]
        %v734 = vld [vmem:[#allocation2 + $0x30] sm:$0xff]
        %v735 = vld [vmem:[#allocation2 + $0x38] sm:$0xff]
        %v736 = vld [vmem:[#allocation2 + $0x48] sm:$0xff]
        %v737 = vld [vmem:[#allocation2 + $0x50] sm:$0xff]
        %v738 = vld [vmem:[#allocation2 + $0x60] sm:$0xff]
        %v739 = vld [vmem:[#allocation2 + $0x68] sm:$0xff]
        %v740 = vld [vmem:[#allocation2 + $0x78] sm:$0xff]
        %v741 = vld [vmem:[#allocation2 + $0x80] sm:$0xff]
        %v742 = vld [vmem:[#allocation2 + $0x90] sm:$0xff]
        %v743 = vld [vmem:[#allocation2 + $0x98] sm:$0xff]
        %v744 = vld [vmem:[#allocation2 + $0xa8] sm:$0xff]
        %v745 = vld [vmem:[#allocation2 + $0xb0] sm:$0xff]
        %v746 = vld [vmem:[#allocation2 + $0xc0] sm:$0xff]
        %v747 = vld [vmem:[#allocation2 + $0xc8] sm:$0xff]
        %v748 = vld [vmem:[#allocation2 + $0xd8] sm:$0xff]
        %v749 = vld [vmem:[#allocation2 + $0xe0] sm:$0xff]
        %v750 = vld [vmem:[#allocation2 + $0xf0] sm:$0xff]
        %v751 = vld [vmem:[#allocation2 + $0xf8] sm:$0xff]
        %v752 = vld [vmem:[#allocation2 + $0x108] sm:$0xff]
        %v753 = vld [vmem:[#allocation2 + $0x110] sm:$0xff]
        %v754 = vld [vmem:[#allocation2 + $0x120] sm:$0xff]
        %v755 = vld [vmem:[#allocation2 + $0x128] sm:$0xff]
        %v756 = vld [vmem:[#allocation2 + $0x138] sm:$0xff]
        %v757 = vld [vmem:[#allocation2 + $0x140] sm:$0xff]
        %v758 = vld [vmem:[#allocation2 + $0x150] sm:$0xff]
        %v759 = vld [vmem:[#allocation2 + $0x158] sm:$0xff]
        %v760 = vld [vmem:[#allocation2 + $0x168] sm:$0xff]
        %v761 = vld [vmem:[#allocation2 + $0x170] sm:$0xff]
        %v762 = vpack.c.bf16 %v731, %v730
        %v763 = vpack.c.bf16 %v733, %v732
        %v764 = vpack.c.bf16 %v735, %v734
        %v765 = vpack.c.bf16 %v737, %v736
        %v766 = vpack.c.bf16 %v739, %v738
        %v767 = vpack.c.bf16 %v741, %v740
        %v768 = vpack.c.bf16 %v743, %v742
        %v769 = vpack.c.bf16 %v745, %v744
        %v770 = vpack.c.bf16 %v747, %v746
        %v771 = vpack.c.bf16 %v749, %v748
        %v772 = vpack.c.bf16 %v751, %v750
        %v773 = vpack.c.bf16 %v753, %v752
        %v774 = vpack.c.bf16 %v755, %v754
        %v775 = vpack.c.bf16 %v757, %v756
        %v776 = vpack.c.bf16 %v759, %v758
        %v777 = vpack.c.bf16 %v761, %v760
        %v778 = vld [vmem:[#allocation8] sm:$0xf]
        %v779 = vld [vmem:[#allocation8 + $0x4] sm:$0xf]
        %v780 = vld [vmem:[#allocation8 + $0x8] sm:$0xf]
        %v781 = vld [vmem:[#allocation8 + $0xc] sm:$0xf]
        %v782 = vld [vmem:[#allocation8 + $0x10] sm:$0xf]
        %v783 = vld [vmem:[#allocation8 + $0x14] sm:$0xf]
        %v784 = vld [vmem:[#allocation8 + $0x18] sm:$0xf]
        %v785 = vld [vmem:[#allocation8 + $0x1c] sm:$0xf]
        %v786 = vld [vmem:[#allocation8 + $0x20] sm:$0xf]
        %v787 = vld [vmem:[#allocation8 + $0x24] sm:$0xf]
        %v788 = vld [vmem:[#allocation8 + $0x28] sm:$0xf]
        %v789 = vld [vmem:[#allocation8 + $0x2c] sm:$0xf]
        %v790 = vld [vmem:[#allocation8 + $0x30] sm:$0xf]
        %v791 = vld [vmem:[#allocation8 + $0x34] sm:$0xf]
        %v792 = vld [vmem:[#allocation8 + $0x38] sm:$0xf]
        %v793 = vld [vmem:[#allocation8 + $0x3c] sm:$0xf]
        %v794 = vld [vmem:[#allocation2 + $0x1] sm:$0xff]
        %v795 = vld [vmem:[#allocation2 + $0x9] sm:$0xff]
        %v796 = vld [vmem:[#allocation2 + $0x19] sm:$0xff]
        %v797 = vld [vmem:[#allocation2 + $0x21] sm:$0xff]
        %v798 = vld [vmem:[#allocation2 + $0x31] sm:$0xff]
        %v799 = vld [vmem:[#allocation2 + $0x39] sm:$0xff]
        %v800 = vld [vmem:[#allocation2 + $0x49] sm:$0xff]
        %v801 = vld [vmem:[#allocation2 + $0x51] sm:$0xff]
        %v802 = vld [vmem:[#allocation2 + $0x61] sm:$0xff]
        %v803 = vld [vmem:[#allocation2 + $0x69] sm:$0xff]
        %v804 = vld [vmem:[#allocation2 + $0x79] sm:$0xff]
        %v805 = vld [vmem:[#allocation2 + $0x81] sm:$0xff]
        %v806 = vld [vmem:[#allocation2 + $0x91] sm:$0xff]
        %v807 = vld [vmem:[#allocation2 + $0x99] sm:$0xff]
        %v808 = vld [vmem:[#allocation2 + $0xa9] sm:$0xff]
        %v809 = vld [vmem:[#allocation2 + $0xb1] sm:$0xff]
        %v810 = vld [vmem:[#allocation2 + $0xc1] sm:$0xff]
        %v811 = vld [vmem:[#allocation2 + $0xc9] sm:$0xff]
        %v812 = vld [vmem:[#allocation2 + $0xd9] sm:$0xff]
        %v813 = vld [vmem:[#allocation2 + $0xe1] sm:$0xff]
        %v814 = vld [vmem:[#allocation2 + $0xf1] sm:$0xff]
        %v815 = vld [vmem:[#allocation2 + $0xf9] sm:$0xff]
        %v816 = vld [vmem:[#allocation2 + $0x109] sm:$0xff]
        %v817 = vld [vmem:[#allocation2 + $0x111] sm:$0xff]
        %v818 = vld [vmem:[#allocation2 + $0x121] sm:$0xff]
        %v819 = vld [vmem:[#allocation2 + $0x129] sm:$0xff]
        %v820 = vld [vmem:[#allocation2 + $0x139] sm:$0xff]
        %v821 = vld [vmem:[#allocation2 + $0x141] sm:$0xff]
        %v822 = vld [vmem:[#allocation2 + $0x151] sm:$0xff]
        %v823 = vld [vmem:[#allocation2 + $0x159] sm:$0xff]
        %v824 = vld [vmem:[#allocation2 + $0x169] sm:$0xff]
        %v825 = vld [vmem:[#allocation2 + $0x171] sm:$0xff]
        %v826 = vpack.c.bf16 %v795, %v794
        %v827 = vpack.c.bf16 %v797, %v796
        %v828 = vpack.c.bf16 %v799, %v798
        %v829 = vpack.c.bf16 %v801, %v800
        %v830 = vpack.c.bf16 %v803, %v802
        %v831 = vpack.c.bf16 %v805, %v804
        %v832 = vpack.c.bf16 %v807, %v806
        %v833 = vpack.c.bf16 %v809, %v808
        %v834 = vpack.c.bf16 %v811, %v810
        %v835 = vpack.c.bf16 %v813, %v812
        %v836 = vpack.c.bf16 %v815, %v814
        %v837 = vpack.c.bf16 %v817, %v816
        %v838 = vpack.c.bf16 %v819, %v818
        %v839 = vpack.c.bf16 %v821, %v820
        %v840 = vpack.c.bf16 %v823, %v822
        %v841 = vpack.c.bf16 %v825, %v824
        %s842 = scalar_lea.vmem [#allocation8], 64
        %v843 = vld [vmem:[%s842] sm:$0xf]
        %v844 = vld [vmem:[%s842 + $0x4] sm:$0xf]
        %v845 = vld [vmem:[%s842 + $0x8] sm:$0xf]
        %v846 = vld [vmem:[%s842 + $0xc] sm:$0xf]
        %v847 = vld [vmem:[%s842 + $0x10] sm:$0xf]
        %v848 = vld [vmem:[%s842 + $0x14] sm:$0xf]
        %v849 = vld [vmem:[%s842 + $0x18] sm:$0xf]
        %v850 = vld [vmem:[%s842 + $0x1c] sm:$0xf]
        %v851 = vld [vmem:[%s842 + $0x20] sm:$0xf]
        %v852 = vld [vmem:[%s842 + $0x24] sm:$0xf]
        %v853 = vld [vmem:[%s842 + $0x28] sm:$0xf]
        %v854 = vld [vmem:[%s842 + $0x2c] sm:$0xf]
        %v855 = vld [vmem:[%s842 + $0x30] sm:$0xf]
        %v856 = vld [vmem:[%s842 + $0x34] sm:$0xf]
        %v857 = vld [vmem:[%s842 + $0x38] sm:$0xf]
        %v858 = vld [vmem:[%s842 + $0x3c] sm:$0xf]
        %v875 = vunpack.c.l.b16 %v843
        %v876 = vunpack.c.l.b16 %v844
        %v877 = vunpack.c.l.b16 %v845
        %v878 = vunpack.c.l.b16 %v846
        %v879 = vunpack.c.l.b16 %v847
        %v880 = vunpack.c.l.b16 %v848
        %v881 = vunpack.c.l.b16 %v849
        %v882 = vunpack.c.l.b16 %v850
        %v883 = vunpack.c.l.b16 %v851
        %v884 = vunpack.c.l.b16 %v852
        %v885 = vunpack.c.l.b16 %v853
        %v886 = vunpack.c.l.b16 %v854
        %v887 = vunpack.c.l.b16 %v855
        %v888 = vunpack.c.l.b16 %v856
        %v889 = vunpack.c.l.b16 %v857
        %v890 = vunpack.c.l.b16 %v858
        %v891 = vpack.c.b16 %v876, %v875
        %v892 = vpack.c.b16 %v878, %v877
        %v893 = vpack.c.b16 %v880, %v879
        %v894 = vpack.c.b16 %v882, %v881
        %v895 = vpack.c.b16 %v884, %v883
        %v896 = vpack.c.b16 %v886, %v885
        %v897 = vpack.c.b16 %v888, %v887
        %v898 = vpack.c.b16 %v890, %v889
        %907 = vmatprep.subr.bf16.mxu0 0
        %908 = vmatpush1.bf16.msra.mxu0 %v891
        %909 = vmatprep.subr.bf16.mxu0 0
        %910 = vmatpush1.bf16.msra.mxu0 %v892
        %911 = vmatprep.subr.bf16.mxu0 0
        %912 = vmatpush1.bf16.msra.mxu0 %v893
        %913 = vmatprep.subr.bf16.mxu0 0
        %914 = vmatpush1.bf16.msra.mxu0 %v894
        %915 = vmatprep.subr.bf16.mxu0 0
        %916 = vmatpush1.bf16.msra.mxu0 %v895
        %917 = vmatprep.subr.bf16.mxu0 0
        %918 = vmatpush1.bf16.msra.mxu0 %v896
        %919 = vmatprep.subr.bf16.mxu0 0
        %920 = vmatpush1.bf16.msra.mxu0 %v897
        %921 = vmatprep.subr.bf16.mxu0 0
        %922 = vmatpush1.bf16.msra.mxu0 %v898
        %923 = vmatprep.subr.bf16.mxu0 0
        %924 = vmatpush1.bf16.msra.mxu0 0
        %925 = vmatprep.subr.bf16.mxu0 0
        %926 = vmatpush1.bf16.msra.mxu0 0
        %927 = vmatprep.subr.bf16.mxu0 0
        %928 = vmatpush1.bf16.msra.mxu0 0
        %929 = vmatprep.subr.bf16.mxu0 0
        %930 = vmatpush1.bf16.msra.mxu0 0
        %931 = vmatprep.subr.bf16.mxu0 0
        %932 = vmatpush1.bf16.msra.mxu0 0
        %933 = vmatprep.subr.bf16.mxu0 0
        %934 = vmatpush1.bf16.msra.mxu0 0
        %935 = vmatprep.subr.bf16.mxu0 0
        %936 = vmatpush1.bf16.msra.mxu0 0
        %937 = vmatprep.subr.bf16.mxu0 0
        %938 = vmatpush1.bf16.msra.mxu0 0
        %939 = vmatprep.mubr.bf16.mxu0 0
        %940 = vmatmul.mubr.bf16.gmra.mrb[0].mxu0 %v826
        %v941 = vpop.f32.mrb[0].mxu0
        %v942 = vadd.f32 0.0, %v941
        %v943 = vpop.f32.mrb[0].mxu0
        %v944 = vpop.f32.mrb[0].mxu0
        %v945 = vadd.f32 0.0, %v944
        %v946 = vpop.f32.mrb[0].mxu0
        %947 = vmatprep.mubr.bf16.mxu0 0
        %948 = vmatmul.mubr.bf16.gmra.mrb[0].mxu0 %v827
        %v949 = vpop.f32.mrb[0].mxu0
        %v950 = vadd.f32 0.0, %v949
        %v951 = vpop.f32.mrb[0].mxu0
        %v952 = vpop.f32.mrb[0].mxu0
        %v953 = vadd.f32 0.0, %v952
        %v954 = vpop.f32.mrb[0].mxu0
        %955 = vmatprep.mubr.bf16.mxu0 0
        %956 = vmatmul.mubr.bf16.gmra.mrb[0].mxu0 %v828
        %v957 = vpop.f32.mrb[0].mxu0
        %v958 = vadd.f32 0.0, %v957
        %v959 = vpop.f32.mrb[0].mxu0
        %v960 = vpop.f32.mrb[0].mxu0
        %v961 = vadd.f32 0.0, %v960
        %v962 = vpop.f32.mrb[0].mxu0
        %963 = vmatprep.mubr.bf16.mxu0 0
        %964 = vmatmul.mubr.bf16.gmra.mrb[0].mxu0 %v829
        %v965 = vpop.f32.mrb[0].mxu0
        %v966 = vadd.f32 0.0, %v965
        %v967 = vpop.f32.mrb[0].mxu0
        %v968 = vpop.f32.mrb[0].mxu0
        %v969 = vadd.f32 0.0, %v968
        %v970 = vpop.f32.mrb[0].mxu0
        %971 = vmatprep.mubr.bf16.mxu0 0
        %972 = vmatmul.mubr.bf16.gmra.mrb[0].mxu0 %v830
        %v973 = vpop.f32.mrb[0].mxu0
        %v974 = vadd.f32 0.0, %v973
        %v975 = vpop.f32.mrb[0].mxu0
        %v976 = vpop.f32.mrb[0].mxu0
        %v977 = vadd.f32 0.0, %v976
        %v978 = vpop.f32.mrb[0].mxu0
        %979 = vmatprep.mubr.bf16.mxu0 0
        %980 = vmatmul.mubr.bf16.gmra.mrb[0].mxu0 %v831
        %v981 = vpop.f32.mrb[0].mxu0
        %v982 = vadd.f32 0.0, %v981
        %v983 = vpop.f32.mrb[0].mxu0
        %v984 = vpop.f32.mrb[0].mxu0
        %v985 = vadd.f32 0.0, %v984
        %v986 = vpop.f32.mrb[0].mxu0
        %987 = vmatprep.mubr.bf16.mxu0 0
        %988 = vmatmul.mubr.bf16.gmra.mrb[0].mxu0 %v832
        %v989 = vpop.f32.mrb[0].mxu0
        %v990 = vadd.f32 0.0, %v989
        %v991 = vpop.f32.mrb[0].mxu0
        %v992 = vpop.f32.mrb[0].mxu0
        %v993 = vadd.f32 0.0, %v992
        %v994 = vpop.f32.mrb[0].mxu0
        %995 = vmatprep.mubr.bf16.mxu0 0
        %996 = vmatmul.mubr.bf16.gmra.mrb[0].mxu0 %v833
        %v997 = vpop.f32.mrb[0].mxu0
        %v998 = vadd.f32 0.0, %v997
        %v999 = vpop.f32.mrb[0].mxu0
        %v1000 = vpop.f32.mrb[0].mxu0
        %v1001 = vadd.f32 0.0, %v1000
        %v1002 = vpop.f32.mrb[0].mxu0
        %1003 = vmatprep.mubr.bf16.mxu0 0
        %1004 = vmatmul.mubr.bf16.gmra.mrb[0].mxu0 %v834
        %v1005 = vpop.f32.mrb[0].mxu0
        %v1006 = vadd.f32 0.0, %v1005
        %v1007 = vpop.f32.mrb[0].mxu0
        %v1008 = vpop.f32.mrb[0].mxu0
        %v1009 = vadd.f32 0.0, %v1008
        %v1010 = vpop.f32.mrb[0].mxu0
        %1011 = vmatprep.mubr.bf16.mxu0 0
        %1012 = vmatmul.mubr.bf16.gmra.mrb[0].mxu0 %v835
        %v1013 = vpop.f32.mrb[0].mxu0
        %v1014 = vadd.f32 0.0, %v1013
        %v1015 = vpop.f32.mrb[0].mxu0
        %v1016 = vpop.f32.mrb[0].mxu0
        %v1017 = vadd.f32 0.0, %v1016
        %v1018 = vpop.f32.mrb[0].mxu0
        %1019 = vmatprep.mubr.bf16.mxu0 0
        %1020 = vmatmul.mubr.bf16.gmra.mrb[0].mxu0 %v836
        %v1021 = vpop.f32.mrb[0].mxu0
        %v1022 = vadd.f32 0.0, %v1021
        %v1023 = vpop.f32.mrb[0].mxu0
        %v1024 = vpop.f32.mrb[0].mxu0
        %v1025 = vadd.f32 0.0, %v1024
        %v1026 = vpop.f32.mrb[0].mxu0
        %1027 = vmatprep.mubr.bf16.mxu0 0
        %1028 = vmatmul.mubr.bf16.gmra.mrb[0].mxu0 %v837
        %v1029 = vpop.f32.mrb[0].mxu0
        %v1030 = vadd.f32 0.0, %v1029
        %v1031 = vpop.f32.mrb[0].mxu0
        %v1032 = vpop.f32.mrb[0].mxu0
        %v1033 = vadd.f32 0.0, %v1032
        %v1034 = vpop.f32.mrb[0].mxu0
        %1035 = vmatprep.mubr.bf16.mxu0 0
        %1036 = vmatmul.mubr.bf16.gmra.mrb[0].mxu0 %v838
        %v1037 = vpop.f32.mrb[0].mxu0
        %v1038 = vadd.f32 0.0, %v1037
        %v1039 = vpop.f32.mrb[0].mxu0
        %v1040 = vpop.f32.mrb[0].mxu0
        %v1041 = vadd.f32 0.0, %v1040
        %v1042 = vpop.f32.mrb[0].mxu0
        %1043 = vmatprep.mubr.bf16.mxu0 0
        %1044 = vmatmul.mubr.bf16.gmra.mrb[0].mxu0 %v839
        %v1045 = vpop.f32.mrb[0].mxu0
        %v1046 = vadd.f32 0.0, %v1045
        %v1047 = vpop.f32.mrb[0].mxu0
        %v1048 = vpop.f32.mrb[0].mxu0
        %v1049 = vadd.f32 0.0, %v1048
        %v1050 = vpop.f32.mrb[0].mxu0
        %1051 = vmatprep.mubr.bf16.mxu0 0
        %1052 = vmatmul.mubr.bf16.gmra.mrb[0].mxu0 %v840
        %v1053 = vpop.f32.mrb[0].mxu0
        %v1054 = vadd.f32 0.0, %v1053
        %v1055 = vpop.f32.mrb[0].mxu0
        %v1056 = vpop.f32.mrb[0].mxu0
        %v1057 = vadd.f32 0.0, %v1056
        %v1058 = vpop.f32.mrb[0].mxu0
        %1059 = vmatprep.mubr.bf16.mxu0 0
        %1060 = vmatmul.mubr.bf16.gmra.mrb[0].mxu0 %v841
        %v1061 = vpop.f32.mrb[0].mxu0
        %v1062 = vadd.f32 0.0, %v1061
        %v1063 = vpop.f32.mrb[0].mxu0
        %v1064 = vpop.f32.mrb[0].mxu0
        %v1065 = vadd.f32 0.0, %v1064
        %v1066 = vpop.f32.mrb[0].mxu0
        %1067 = vdwg.mxu0
        %v1084 = vunpack.c.l.b16 %v778
        %v1085 = vunpack.c.l.b16 %v779
        %v1086 = vunpack.c.l.b16 %v780
        %v1087 = vunpack.c.l.b16 %v781
        %v1088 = vunpack.c.l.b16 %v782
        %v1089 = vunpack.c.l.b16 %v783
        %v1090 = vunpack.c.l.b16 %v784
        %v1091 = vunpack.c.l.b16 %v785
        %v1092 = vunpack.c.l.b16 %v786
        %v1093 = vunpack.c.l.b16 %v787
        %v1094 = vunpack.c.l.b16 %v788
        %v1095 = vunpack.c.l.b16 %v789
        %v1096 = vunpack.c.l.b16 %v790
        %v1097 = vunpack.c.l.b16 %v791
        %v1098 = vunpack.c.l.b16 %v792
        %v1099 = vunpack.c.l.b16 %v793
        %v1100 = vpack.c.b16 %v1085, %v1084
        %v1101 = vpack.c.b16 %v1087, %v1086
        %v1102 = vpack.c.b16 %v1089, %v1088
        %v1103 = vpack.c.b16 %v1091, %v1090
        %v1104 = vpack.c.b16 %v1093, %v1092
        %v1105 = vpack.c.b16 %v1095, %v1094
        %v1106 = vpack.c.b16 %v1097, %v1096
        %v1107 = vpack.c.b16 %v1099, %v1098
        %1116 = vmatprep.subr.bf16.mxu0 0
        %1117 = vmatpush1.bf16.msra.mxu0 %v1100
        %1118 = vmatprep.subr.bf16.mxu0 0
        %1119 = vmatpush1.bf16.msra.mxu0 %v1101
        %1120 = vmatprep.subr.bf16.mxu0 0
        %1121 = vmatpush1.bf16.msra.mxu0 %v1102
        %1122 = vmatprep.subr.bf16.mxu0 0
        %1123 = vmatpush1.bf16.msra.mxu0 %v1103
        %1124 = vmatprep.subr.bf16.mxu0 0
        %1125 = vmatpush1.bf16.msra.mxu0 %v1104
        %1126 = vmatprep.subr.bf16.mxu0 0
        %1127 = vmatpush1.bf16.msra.mxu0 %v1105
        %1128 = vmatprep.subr.bf16.mxu0 0
        %1129 = vmatpush1.bf16.msra.mxu0 %v1106
        %1130 = vmatprep.subr.bf16.mxu0 0
        %1131 = vmatpush1.bf16.msra.mxu0 %v1107
        %1132 = vmatprep.subr.bf16.mxu0 0
        %1133 = vmatpush1.bf16.msra.mxu0 0
        %1134 = vmatprep.subr.bf16.mxu0 0
        %1135 = vmatpush1.bf16.msra.mxu0 0
        %1136 = vmatprep.subr.bf16.mxu0 0
        %1137 = vmatpush1.bf16.msra.mxu0 0
        %1138 = vmatprep.subr.bf16.mxu0 0
        %1139 = vmatpush1.bf16.msra.mxu0 0
        %1140 = vmatprep.subr.bf16.mxu0 0
        %1141 = vmatpush1.bf16.msra.mxu0 0
        %1142 = vmatprep.subr.bf16.mxu0 0
        %1143 = vmatpush1.bf16.msra.mxu0 0
        %1144 = vmatprep.subr.bf16.mxu0 0
        %1145 = vmatpush1.bf16.msra.mxu0 0
        %1146 = vmatprep.subr.bf16.mxu0 0
        %1147 = vmatpush1.bf16.msra.mxu0 0
        %1148 = vmatprep.mubr.bf16.mxu0 0
        %1149 = vmatmul.mubr.bf16.gmra.mrb[0].mxu0 %v762
        %v1150 = vpop.f32.mrb[0].mxu0
        %v1151 = vadd.f32 %v942, %v1150
        %v1152 = vpop.f32.mrb[0].mxu0
        %v1153 = vpop.f32.mrb[0].mxu0
        %v1154 = vadd.f32 %v945, %v1153
        %v1155 = vpop.f32.mrb[0].mxu0
        %1156 = vmatprep.mubr.bf16.mxu0 0
        %1157 = vmatmul.mubr.bf16.gmra.mrb[0].mxu0 %v763
        %v1158 = vpop.f32.mrb[0].mxu0
        %v1159 = vadd.f32 %v950, %v1158
        %v1160 = vpop.f32.mrb[0].mxu0
        %v1161 = vpop.f32.mrb[0].mxu0
        %v1162 = vadd.f32 %v953, %v1161
        %v1163 = vpop.f32.mrb[0].mxu0
        %1164 = vmatprep.mubr.bf16.mxu0 0
        %1165 = vmatmul.mubr.bf16.gmra.mrb[0].mxu0 %v764
        %v1166 = vpop.f32.mrb[0].mxu0
        %v1167 = vadd.f32 %v958, %v1166
        %v1168 = vpop.f32.mrb[0].mxu0
        %v1169 = vpop.f32.mrb[0].mxu0
        %v1170 = vadd.f32 %v961, %v1169
        %v1171 = vpop.f32.mrb[0].mxu0
        %1172 = vmatprep.mubr.bf16.mxu0 0
        %1173 = vmatmul.mubr.bf16.gmra.mrb[0].mxu0 %v765
        %v1174 = vpop.f32.mrb[0].mxu0
        %v1175 = vadd.f32 %v966, %v1174
        %v1176 = vpop.f32.mrb[0].mxu0
        %v1177 = vpop.f32.mrb[0].mxu0
        %v1178 = vadd.f32 %v969, %v1177
        %v1179 = vpop.f32.mrb[0].mxu0
        %1180 = vmatprep.mubr.bf16.mxu0 0
        %1181 = vmatmul.mubr.bf16.gmra.mrb[0].mxu0 %v766
        %v1182 = vpop.f32.mrb[0].mxu0
        %v1183 = vadd.f32 %v974, %v1182
        %v1184 = vpop.f32.mrb[0].mxu0
        %v1185 = vpop.f32.mrb[0].mxu0
        %v1186 = vadd.f32 %v977, %v1185
        %v1187 = vpop.f32.mrb[0].mxu0
        %1188 = vmatprep.mubr.bf16.mxu0 0
        %1189 = vmatmul.mubr.bf16.gmra.mrb[0].mxu0 %v767
        %v1190 = vpop.f32.mrb[0].mxu0
        %v1191 = vadd.f32 %v982, %v1190
        %v1192 = vpop.f32.mrb[0].mxu0
        %v1193 = vpop.f32.mrb[0].mxu0
        %v1194 = vadd.f32 %v985, %v1193
        %v1195 = vpop.f32.mrb[0].mxu0
        %1196 = vmatprep.mubr.bf16.mxu0 0
        %1197 = vmatmul.mubr.bf16.gmra.mrb[0].mxu0 %v768
        %v1198 = vpop.f32.mrb[0].mxu0
        %v1199 = vadd.f32 %v990, %v1198
        %v1200 = vpop.f32.mrb[0].mxu0
        %v1201 = vpop.f32.mrb[0].mxu0
        %v1202 = vadd.f32 %v993, %v1201
        %v1203 = vpop.f32.mrb[0].mxu0
        %1204 = vmatprep.mubr.bf16.mxu0 0
        %1205 = vmatmul.mubr.bf16.gmra.mrb[0].mxu0 %v769
        %v1206 = vpop.f32.mrb[0].mxu0
        %v1207 = vadd.f32 %v998, %v1206
        %v1208 = vpop.f32.mrb[0].mxu0
        %v1209 = vpop.f32.mrb[0].mxu0
        %v1210 = vadd.f32 %v1001, %v1209
        %v1211 = vpop.f32.mrb[0].mxu0
        %1212 = vmatprep.mubr.bf16.mxu0 0
        %1213 = vmatmul.mubr.bf16.gmra.mrb[0].mxu0 %v770
        %v1214 = vpop.f32.mrb[0].mxu0
        %v1215 = vadd.f32 %v1006, %v1214
        %v1216 = vpop.f32.mrb[0].mxu0
        %v1217 = vpop.f32.mrb[0].mxu0
        %v1218 = vadd.f32 %v1009, %v1217
        %v1219 = vpop.f32.mrb[0].mxu0
        %1220 = vmatprep.mubr.bf16.mxu0 0
        %1221 = vmatmul.mubr.bf16.gmra.mrb[0].mxu0 %v771
        %v1222 = vpop.f32.mrb[0].mxu0
        %v1223 = vadd.f32 %v1014, %v1222
        %v1224 = vpop.f32.mrb[0].mxu0
        %v1225 = vpop.f32.mrb[0].mxu0
        %v1226 = vadd.f32 %v1017, %v1225
        %v1227 = vpop.f32.mrb[0].mxu0
        %1228 = vmatprep.mubr.bf16.mxu0 0
        %1229 = vmatmul.mubr.bf16.gmra.mrb[0].mxu0 %v772
        %v1230 = vpop.f32.mrb[0].mxu0
        %v1231 = vadd.f32 %v1022, %v1230
        %v1232 = vpop.f32.mrb[0].mxu0
        %v1233 = vpop.f32.mrb[0].mxu0
        %v1234 = vadd.f32 %v1025, %v1233
        %v1235 = vpop.f32.mrb[0].mxu0
        %1236 = vmatprep.mubr.bf16.mxu0 0
        %1237 = vmatmul.mubr.bf16.gmra.mrb[0].mxu0 %v773
        %v1238 = vpop.f32.mrb[0].mxu0
        %v1239 = vadd.f32 %v1030, %v1238
        %v1240 = vpop.f32.mrb[0].mxu0
        %v1241 = vpop.f32.mrb[0].mxu0
        %v1242 = vadd.f32 %v1033, %v1241
        %v1243 = vpop.f32.mrb[0].mxu0
        %1244 = vmatprep.mubr.bf16.mxu0 0
        %1245 = vmatmul.mubr.bf16.gmra.mrb[0].mxu0 %v774
        %v1246 = vpop.f32.mrb[0].mxu0
        %v1247 = vadd.f32 %v1038, %v1246
        %v1248 = vpop.f32.mrb[0].mxu0
        %v1249 = vpop.f32.mrb[0].mxu0
        %v1250 = vadd.f32 %v1041, %v1249
        %v1251 = vpop.f32.mrb[0].mxu0
        %1252 = vmatprep.mubr.bf16.mxu0 0
        %1253 = vmatmul.mubr.bf16.gmra.mrb[0].mxu0 %v775
        %v1254 = vpop.f32.mrb[0].mxu0
        %v1255 = vadd.f32 %v1046, %v1254
        %v1256 = vpop.f32.mrb[0].mxu0
        %v1257 = vpop.f32.mrb[0].mxu0
        %v1258 = vadd.f32 %v1049, %v1257
        %v1259 = vpop.f32.mrb[0].mxu0
        %1260 = vmatprep.mubr.bf16.mxu0 0
        %1261 = vmatmul.mubr.bf16.gmra.mrb[0].mxu0 %v776
        %v1262 = vpop.f32.mrb[0].mxu0
        %v1263 = vadd.f32 %v1054, %v1262
        %v1264 = vpop.f32.mrb[0].mxu0
        %v1265 = vpop.f32.mrb[0].mxu0
        %v1266 = vadd.f32 %v1057, %v1265
        %v1267 = vpop.f32.mrb[0].mxu0
        %1268 = vmatprep.mubr.bf16.mxu0 0
        %1269 = vmatmul.mubr.bf16.gmra.mrb[0].mxu0 %v777
        %v1270 = vpop.f32.mrb[0].mxu0
        %v1271 = vadd.f32 %v1062, %v1270
        %v1272 = vpop.f32.mrb[0].mxu0
        %v1273 = vpop.f32.mrb[0].mxu0
        %v1274 = vadd.f32 %v1065, %v1273
        %v1275 = vpop.f32.mrb[0].mxu0
        %1276 = vdwg.mxu0
        %v1277 = vld [vmem:[#allocation2 + $0x2] sm:$0xff]
        %v1278 = vld [vmem:[#allocation2 + $0xa] sm:$0xff]
        %v1279 = vld [vmem:[#allocation2 + $0x1a] sm:$0xff]
        %v1280 = vld [vmem:[#allocation2 + $0x22] sm:$0xff]
        %v1281 = vld [vmem:[#allocation2 + $0x32] sm:$0xff]
        %v1282 = vld [vmem:[#allocation2 + $0x3a] sm:$0xff]
        %v1283 = vld [vmem:[#allocation2 + $0x4a] sm:$0xff]
        %v1284 = vld [vmem:[#allocation2 + $0x52] sm:$0xff]
        %v1285 = vld [vmem:[#allocation2 + $0x62] sm:$0xff]
        %v1286 = vld [vmem:[#allocation2 + $0x6a] sm:$0xff]
        %v1287 = vld [vmem:[#allocation2 + $0x7a] sm:$0xff]
        %v1288 = vld [vmem:[#allocation2 + $0x82] sm:$0xff]
        %v1289 = vld [vmem:[#allocation2 + $0x92] sm:$0xff]
        %v1290 = vld [vmem:[#allocation2 + $0x9a] sm:$0xff]
        %v1291 = vld [vmem:[#allocation2 + $0xaa] sm:$0xff]
        %v1292 = vld [vmem:[#allocation2 + $0xb2] sm:$0xff]
        %v1293 = vld [vmem:[#allocation2 + $0xc2] sm:$0xff]
        %v1294 = vld [vmem:[#allocation2 + $0xca] sm:$0xff]
        %v1295 = vld [vmem:[#allocation2 + $0xda] sm:$0xff]
        %v1296 = vld [vmem:[#allocation2 + $0xe2] sm:$0xff]
        %v1297 = vld [vmem:[#allocation2 + $0xf2] sm:$0xff]
        %v1298 = vld [vmem:[#allocation2 + $0xfa] sm:$0xff]
        %v1299 = vld [vmem:[#allocation2 + $0x10a] sm:$0xff]
        %v1300 = vld [vmem:[#allocation2 + $0x112] sm:$0xff]
        %v1301 = vld [vmem:[#allocation2 + $0x122] sm:$0xff]
        %v1302 = vld [vmem:[#allocation2 + $0x12a] sm:$0xff]
        %v1303 = vld [vmem:[#allocation2 + $0x13a] sm:$0xff]
        %v1304 = vld [vmem:[#allocation2 + $0x142] sm:$0xff]
        %v1305 = vld [vmem:[#allocation2 + $0x152] sm:$0xff]
        %v1306 = vld [vmem:[#allocation2 + $0x15a] sm:$0xff]
        %v1307 = vld [vmem:[#allocation2 + $0x16a] sm:$0xff]
        %v1308 = vld [vmem:[#allocation2 + $0x172] sm:$0xff]
        %v1309 = vpack.c.bf16 %v1278, %v1277
        %v1310 = vpack.c.bf16 %v1280, %v1279
        %v1311 = vpack.c.bf16 %v1282, %v1281
        %v1312 = vpack.c.bf16 %v1284, %v1283
        %v1313 = vpack.c.bf16 %v1286, %v1285
        %v1314 = vpack.c.bf16 %v1288, %v1287
        %v1315 = vpack.c.bf16 %v1290, %v1289
        %v1316 = vpack.c.bf16 %v1292, %v1291
        %v1317 = vpack.c.bf16 %v1294, %v1293
        %v1318 = vpack.c.bf16 %v1296, %v1295
        %v1319 = vpack.c.bf16 %v1298, %v1297
        %v1320 = vpack.c.bf16 %v1300, %v1299
        %v1321 = vpack.c.bf16 %v1302, %v1301
        %v1322 = vpack.c.bf16 %v1304, %v1303
        %v1323 = vpack.c.bf16 %v1306, %v1305
        %v1324 = vpack.c.bf16 %v1308, %v1307
        %s1325 = scalar_lea.vmem [#allocation8], 128
        %v1326 = vld [vmem:[%s1325] sm:$0xf]
        %v1327 = vld [vmem:[%s1325 + $0x4] sm:$0xf]
        %v1328 = vld [vmem:[%s1325 + $0x8] sm:$0xf]
        %v1329 = vld [vmem:[%s1325 + $0xc] sm:$0xf]
        %v1330 = vld [vmem:[%s1325 + $0x10] sm:$0xf]
        %v1331 = vld [vmem:[%s1325 + $0x14] sm:$0xf]
        %v1332 = vld [vmem:[%s1325 + $0x18] sm:$0xf]
        %v1333 = vld [vmem:[%s1325 + $0x1c] sm:$0xf]
        %v1334 = vld [vmem:[%s1325 + $0x20] sm:$0xf]
        %v1335 = vld [vmem:[%s1325 + $0x24] sm:$0xf]
        %v1336 = vld [vmem:[%s1325 + $0x28] sm:$0xf]
        %v1337 = vld [vmem:[%s1325 + $0x2c] sm:$0xf]
        %v1338 = vld [vmem:[%s1325 + $0x30] sm:$0xf]
        %v1339 = vld [vmem:[%s1325 + $0x34] sm:$0xf]
        %v1340 = vld [vmem:[%s1325 + $0x38] sm:$0xf]
        %v1341 = vld [vmem:[%s1325 + $0x3c] sm:$0xf]
        %v1358 = vunpack.c.l.b16 %v1326
        %v1359 = vunpack.c.l.b16 %v1327
        %v1360 = vunpack.c.l.b16 %v1328
        %v1361 = vunpack.c.l.b16 %v1329
        %v1362 = vunpack.c.l.b16 %v1330
        %v1363 = vunpack.c.l.b16 %v1331
        %v1364 = vunpack.c.l.b16 %v1332
        %v1365 = vunpack.c.l.b16 %v1333
        %v1366 = vunpack.c.l.b16 %v1334
        %v1367 = vunpack.c.l.b16 %v1335
        %v1368 = vunpack.c.l.b16 %v1336
        %v1369 = vunpack.c.l.b16 %v1337
        %v1370 = vunpack.c.l.b16 %v1338
        %v1371 = vunpack.c.l.b16 %v1339
        %v1372 = vunpack.c.l.b16 %v1340
        %v1373 = vunpack.c.l.b16 %v1341
        %v1374 = vpack.c.b16 %v1359, %v1358
        %v1375 = vpack.c.b16 %v1361, %v1360
        %v1376 = vpack.c.b16 %v1363, %v1362
        %v1377 = vpack.c.b16 %v1365, %v1364
        %v1378 = vpack.c.b16 %v1367, %v1366
        %v1379 = vpack.c.b16 %v1369, %v1368
        %v1380 = vpack.c.b16 %v1371, %v1370
        %v1381 = vpack.c.b16 %v1373, %v1372
        %1390 = vmatprep.subr.bf16.mxu0 0
        %1391 = vmatpush1.bf16.msra.mxu0 %v1374
        %1392 = vmatprep.subr.bf16.mxu0 0
        %1393 = vmatpush1.bf16.msra.mxu0 %v1375
        %1394 = vmatprep.subr.bf16.mxu0 0
        %1395 = vmatpush1.bf16.msra.mxu0 %v1376
        %1396 = vmatprep.subr.bf16.mxu0 0
        %1397 = vmatpush1.bf16.msra.mxu0 %v1377
        %1398 = vmatprep.subr.bf16.mxu0 0
        %1399 = vmatpush1.bf16.msra.mxu0 %v1378
        %1400 = vmatprep.subr.bf16.mxu0 0
        %1401 = vmatpush1.bf16.msra.mxu0 %v1379
        %1402 = vmatprep.subr.bf16.mxu0 0
        %1403 = vmatpush1.bf16.msra.mxu0 %v1380
        %1404 = vmatprep.subr.bf16.mxu0 0
        %1405 = vmatpush1.bf16.msra.mxu0 %v1381
        %1406 = vmatprep.subr.bf16.mxu0 0
        %1407 = vmatpush1.bf16.msra.mxu0 0
        %1408 = vmatprep.subr.bf16.mxu0 0
        %1409 = vmatpush1.bf16.msra.mxu0 0
        %1410 = vmatprep.subr.bf16.mxu0 0
        %1411 = vmatpush1.bf16.msra.mxu0 0
        %1412 = vmatprep.subr.bf16.mxu0 0
        %1413 = vmatpush1.bf16.msra.mxu0 0
        %1414 = vmatprep.subr.bf16.mxu0 0
        %1415 = vmatpush1.bf16.msra.mxu0 0
        %1416 = vmatprep.subr.bf16.mxu0 0
        %1417 = vmatpush1.bf16.msra.mxu0 0
        %1418 = vmatprep.subr.bf16.mxu0 0
        %1419 = vmatpush1.bf16.msra.mxu0 0
        %1420 = vmatprep.subr.bf16.mxu0 0
        %1421 = vmatpush1.bf16.msra.mxu0 0
        %1422 = vmatprep.mubr.bf16.mxu0 0
        %1423 = vmatmul.mubr.bf16.gmra.mrb[0].mxu0 %v1309
        %v1424 = vpop.f32.mrb[0].mxu0
        %v1425 = vadd.f32 0.0, %v1424
        %v1426 = vpop.f32.mrb[0].mxu0
        %v1427 = vpop.f32.mrb[0].mxu0
        %v1428 = vadd.f32 0.0, %v1427
        %v1429 = vpop.f32.mrb[0].mxu0
        %1430 = vmatprep.mubr.bf16.mxu0 0
        %1431 = vmatmul.mubr.bf16.gmra.mrb[0].mxu0 %v1310
        %v1432 = vpop.f32.mrb[0].mxu0
        %v1433 = vadd.f32 0.0, %v1432
        %v1434 = vpop.f32.mrb[0].mxu0
        %v1435 = vpop.f32.mrb[0].mxu0
        %v1436 = vadd.f32 0.0, %v1435
        %v1437 = vpop.f32.mrb[0].mxu0
        %1438 = vmatprep.mubr.bf16.mxu0 0
        %1439 = vmatmul.mubr.bf16.gmra.mrb[0].mxu0 %v1311
        %v1440 = vpop.f32.mrb[0].mxu0
        %v1441 = vadd.f32 0.0, %v1440
        %v1442 = vpop.f32.mrb[0].mxu0
        %v1443 = vpop.f32.mrb[0].mxu0
        %v1444 = vadd.f32 0.0, %v1443
        %v1445 = vpop.f32.mrb[0].mxu0
        %1446 = vmatprep.mubr.bf16.mxu0 0
        %1447 = vmatmul.mubr.bf16.gmra.mrb[0].mxu0 %v1312
        %v1448 = vpop.f32.mrb[0].mxu0
        %v1449 = vadd.f32 0.0, %v1448
        %v1450 = vpop.f32.mrb[0].mxu0
        %v1451 = vpop.f32.mrb[0].mxu0
        %v1452 = vadd.f32 0.0, %v1451
        %v1453 = vpop.f32.mrb[0].mxu0
        %1454 = vmatprep.mubr.bf16.mxu0 0
        %1455 = vmatmul.mubr.bf16.gmra.mrb[0].mxu0 %v1313
        %v1456 = vpop.f32.mrb[0].mxu0
        %v1457 = vadd.f32 0.0, %v1456
        %v1458 = vpop.f32.mrb[0].mxu0
        %v1459 = vpop.f32.mrb[0].mxu0
        %v1460 = vadd.f32 0.0, %v1459
        %v1461 = vpop.f32.mrb[0].mxu0
        %1462 = vmatprep.mubr.bf16.mxu0 0
        %1463 = vmatmul.mubr.bf16.gmra.mrb[0].mxu0 %v1314
        %v1464 = vpop.f32.mrb[0].mxu0
        %v1465 = vadd.f32 0.0, %v1464
        %v1466 = vpop.f32.mrb[0].mxu0
        %v1467 = vpop.f32.mrb[0].mxu0
        %v1468 = vadd.f32 0.0, %v1467
        %v1469 = vpop.f32.mrb[0].mxu0
        %1470 = vmatprep.mubr.bf16.mxu0 0
        %1471 = vmatmul.mubr.bf16.gmra.mrb[0].mxu0 %v1315
        %v1472 = vpop.f32.mrb[0].mxu0
        %v1473 = vadd.f32 0.0, %v1472
        %v1474 = vpop.f32.mrb[0].mxu0
        %v1475 = vpop.f32.mrb[0].mxu0
        %v1476 = vadd.f32 0.0, %v1475
        %v1477 = vpop.f32.mrb[0].mxu0
        %1478 = vmatprep.mubr.bf16.mxu0 0
        %1479 = vmatmul.mubr.bf16.gmra.mrb[0].mxu0 %v1316
        %v1480 = vpop.f32.mrb[0].mxu0
        %v1481 = vadd.f32 0.0, %v1480
        %v1482 = vpop.f32.mrb[0].mxu0
        %v1483 = vpop.f32.mrb[0].mxu0
        %v1484 = vadd.f32 0.0, %v1483
        %v1485 = vpop.f32.mrb[0].mxu0
        %1486 = vmatprep.mubr.bf16.mxu0 0
        %1487 = vmatmul.mubr.bf16.gmra.mrb[0].mxu0 %v1317
        %v1488 = vpop.f32.mrb[0].mxu0
        %v1489 = vadd.f32 0.0, %v1488
        %v1490 = vpop.f32.mrb[0].mxu0
        %v1491 = vpop.f32.mrb[0].mxu0
        %v1492 = vadd.f32 0.0, %v1491
        %v1493 = vpop.f32.mrb[0].mxu0
        %1494 = vmatprep.mubr.bf16.mxu0 0
        %1495 = vmatmul.mubr.bf16.gmra.mrb[0].mxu0 %v1318
        %v1496 = vpop.f32.mrb[0].mxu0
        %v1497 = vadd.f32 0.0, %v1496
        %v1498 = vpop.f32.mrb[0].mxu0
        %v1499 = vpop.f32.mrb[0].mxu0
        %v1500 = vadd.f32 0.0, %v1499
        %v1501 = vpop.f32.mrb[0].mxu0
        %1502 = vmatprep.mubr.bf16.mxu0 0
        %1503 = vmatmul.mubr.bf16.gmra.mrb[0].mxu0 %v1319
        %v1504 = vpop.f32.mrb[0].mxu0
        %v1505 = vadd.f32 0.0, %v1504
        %v1506 = vpop.f32.mrb[0].mxu0
        %v1507 = vpop.f32.mrb[0].mxu0
        %v1508 = vadd.f32 0.0, %v1507
        %v1509 = vpop.f32.mrb[0].mxu0
        %1510 = vmatprep.mubr.bf16.mxu0 0
        %1511 = vmatmul.mubr.bf16.gmra.mrb[0].mxu0 %v1320
        %v1512 = vpop.f32.mrb[0].mxu0
        %v1513 = vadd.f32 0.0, %v1512
        %v1514 = vpop.f32.mrb[0].mxu0
        %v1515 = vpop.f32.mrb[0].mxu0
        %v1516 = vadd.f32 0.0, %v1515
        %v1517 = vpop.f32.mrb[0].mxu0
        %1518 = vmatprep.mubr.bf16.mxu0 0
        %1519 = vmatmul.mubr.bf16.gmra.mrb[0].mxu0 %v1321
        %v1520 = vpop.f32.mrb[0].mxu0
        %v1521 = vadd.f32 0.0, %v1520
        %v1522 = vpop.f32.mrb[0].mxu0
        %v1523 = vpop.f32.mrb[0].mxu0
        %v1524 = vadd.f32 0.0, %v1523
        %v1525 = vpop.f32.mrb[0].mxu0
        %1526 = vmatprep.mubr.bf16.mxu0 0
        %1527 = vmatmul.mubr.bf16.gmra.mrb[0].mxu0 %v1322
        %v1528 = vpop.f32.mrb[0].mxu0
        %v1529 = vadd.f32 0.0, %v1528
        %v1530 = vpop.f32.mrb[0].mxu0
        %v1531 = vpop.f32.mrb[0].mxu0
        %v1532 = vadd.f32 0.0, %v1531
        %v1533 = vpop.f32.mrb[0].mxu0
        %1534 = vmatprep.mubr.bf16.mxu0 0
        %1535 = vmatmul.mubr.bf16.gmra.mrb[0].mxu0 %v1323
        %v1536 = vpop.f32.mrb[0].mxu0
        %v1537 = vadd.f32 0.0, %v1536
        %v1538 = vpop.f32.mrb[0].mxu0
        %v1539 = vpop.f32.mrb[0].mxu0
        %v1540 = vadd.f32 0.0, %v1539
        %v1541 = vpop.f32.mrb[0].mxu0
        %1542 = vmatprep.mubr.bf16.mxu0 0
        %1543 = vmatmul.mubr.bf16.gmra.mrb[0].mxu0 %v1324
        %v1544 = vpop.f32.mrb[0].mxu0
        %v1545 = vadd.f32 0.0, %v1544
        %v1546 = vpop.f32.mrb[0].mxu0
        %v1547 = vpop.f32.mrb[0].mxu0
        %v1548 = vadd.f32 0.0, %v1547
        %v1549 = vpop.f32.mrb[0].mxu0
        %1550 = vdwg.mxu0
        %v1551 = vadd.f32 %v1151, %v1425
        %v1552 = vadd.f32 %v1154, %v1428
        %v1553 = vadd.f32 %v1159, %v1433
        %v1554 = vadd.f32 %v1162, %v1436
        %v1555 = vadd.f32 %v1167, %v1441
        %v1556 = vadd.f32 %v1170, %v1444
        %v1557 = vadd.f32 %v1175, %v1449
        %v1558 = vadd.f32 %v1178, %v1452
        %v1559 = vadd.f32 %v1183, %v1457
        %v1560 = vadd.f32 %v1186, %v1460
        %v1561 = vadd.f32 %v1191, %v1465
        %v1562 = vadd.f32 %v1194, %v1468
        %v1563 = vadd.f32 %v1199, %v1473
        %v1564 = vadd.f32 %v1202, %v1476
        %v1565 = vadd.f32 %v1207, %v1481
        %v1566 = vadd.f32 %v1210, %v1484
        %v1567 = vadd.f32 %v1215, %v1489
        %v1568 = vadd.f32 %v1218, %v1492
        %v1569 = vadd.f32 %v1223, %v1497
        %v1570 = vadd.f32 %v1226, %v1500
        %v1571 = vadd.f32 %v1231, %v1505
        %v1572 = vadd.f32 %v1234, %v1508
        %v1573 = vadd.f32 %v1239, %v1513
        %v1574 = vadd.f32 %v1242, %v1516
        %v1575 = vadd.f32 %v1247, %v1521
        %v1576 = vadd.f32 %v1250, %v1524
        %v1577 = vadd.f32 %v1255, %v1529
        %v1578 = vadd.f32 %v1258, %v1532
        %v1579 = vadd.f32 %v1263, %v1537
        %v1580 = vadd.f32 %v1266, %v1540
        %v1581 = vadd.f32 %v1271, %v1545
        %v1582 = vadd.f32 %v1274, %v1548
        %v1583 = vld [vmem:[%s697] sm:$0xff]
        %v1584 = vld [vmem:[%s697 + $0x8] sm:$0xff]
        %v1585 = vld [vmem:[%s697 + $0x18] sm:$0xff]
        %v1586 = vld [vmem:[%s697 + $0x20] sm:$0xff]
        %v1587 = vld [vmem:[%s697 + $0x30] sm:$0xff]
        %v1588 = vld [vmem:[%s697 + $0x38] sm:$0xff]
        %v1589 = vld [vmem:[%s697 + $0x48] sm:$0xff]
        %v1590 = vld [vmem:[%s697 + $0x50] sm:$0xff]
        %v1591 = vld [vmem:[%s697 + $0x60] sm:$0xff]
        %v1592 = vld [vmem:[%s697 + $0x68] sm:$0xff]
        %v1593 = vld [vmem:[%s697 + $0x78] sm:$0xff]
        %v1594 = vld [vmem:[%s697 + $0x80] sm:$0xff]
        %v1595 = vld [vmem:[%s697 + $0x90] sm:$0xff]
        %v1596 = vld [vmem:[%s697 + $0x98] sm:$0xff]
        %v1597 = vld [vmem:[%s697 + $0xa8] sm:$0xff]
        %v1598 = vld [vmem:[%s697 + $0xb0] sm:$0xff]
        %v1599 = vld [vmem:[%s697 + $0xc0] sm:$0xff]
        %v1600 = vld [vmem:[%s697 + $0xc8] sm:$0xff]
        %v1601 = vld [vmem:[%s697 + $0xd8] sm:$0xff]
        %v1602 = vld [vmem:[%s697 + $0xe0] sm:$0xff]
        %v1603 = vld [vmem:[%s697 + $0xf0] sm:$0xff]
        %v1604 = vld [vmem:[%s697 + $0xf8] sm:$0xff]
        %v1605 = vld [vmem:[%s697 + $0x108] sm:$0xff]
        %v1606 = vld [vmem:[%s697 + $0x110] sm:$0xff]
        %v1607 = vld [vmem:[%s697 + $0x120] sm:$0xff]
        %v1608 = vld [vmem:[%s697 + $0x128] sm:$0xff]
        %v1609 = vld [vmem:[%s697 + $0x138] sm:$0xff]
        %v1610 = vld [vmem:[%s697 + $0x140] sm:$0xff]
        %v1611 = vld [vmem:[%s697 + $0x150] sm:$0xff]
        %v1612 = vld [vmem:[%s697 + $0x158] sm:$0xff]
        %v1613 = vld [vmem:[%s697 + $0x168] sm:$0xff]
        %v1614 = vld [vmem:[%s697 + $0x170] sm:$0xff]
        %v1615 = vpack.c.bf16 %v1584, %v1583
        %v1616 = vpack.c.bf16 %v1586, %v1585
        %v1617 = vpack.c.bf16 %v1588, %v1587
        %v1618 = vpack.c.bf16 %v1590, %v1589
        %v1619 = vpack.c.bf16 %v1592, %v1591
        %v1620 = vpack.c.bf16 %v1594, %v1593
        %v1621 = vpack.c.bf16 %v1596, %v1595
        %v1622 = vpack.c.bf16 %v1598, %v1597
        %v1623 = vpack.c.bf16 %v1600, %v1599
        %v1624 = vpack.c.bf16 %v1602, %v1601
        %v1625 = vpack.c.bf16 %v1604, %v1603
        %v1626 = vpack.c.bf16 %v1606, %v1605
        %v1627 = vpack.c.bf16 %v1608, %v1607
        %v1628 = vpack.c.bf16 %v1610, %v1609
        %v1629 = vpack.c.bf16 %v1612, %v1611
        %v1630 = vpack.c.bf16 %v1614, %v1613
        %s1631 = scalar_lea.vmem [#allocation8], 192
        %v1632 = vld [vmem:[%s1631] sm:$0xf]
        %v1633 = vld [vmem:[%s1631 + $0x4] sm:$0xf]
        %v1634 = vld [vmem:[%s1631 + $0x8] sm:$0xf]
        %v1635 = vld [vmem:[%s1631 + $0xc] sm:$0xf]
        %v1636 = vld [vmem:[%s1631 + $0x10] sm:$0xf]
        %v1637 = vld [vmem:[%s1631 + $0x14] sm:$0xf]
        %v1638 = vld [vmem:[%s1631 + $0x18] sm:$0xf]
        %v1639 = vld [vmem:[%s1631 + $0x1c] sm:$0xf]
        %v1640 = vld [vmem:[%s1631 + $0x20] sm:$0xf]
        %v1641 = vld [vmem:[%s1631 + $0x24] sm:$0xf]
        %v1642 = vld [vmem:[%s1631 + $0x28] sm:$0xf]
        %v1643 = vld [vmem:[%s1631 + $0x2c] sm:$0xf]
        %v1644 = vld [vmem:[%s1631 + $0x30] sm:$0xf]
        %v1645 = vld [vmem:[%s1631 + $0x34] sm:$0xf]
        %v1646 = vld [vmem:[%s1631 + $0x38] sm:$0xf]
        %v1647 = vld [vmem:[%s1631 + $0x3c] sm:$0xf]
        %v1664 = vunpack.c.l.b16 %v1632
        %v1665 = vunpack.c.l.b16 %v1633
        %v1666 = vunpack.c.l.b16 %v1634
        %v1667 = vunpack.c.l.b16 %v1635
        %v1668 = vunpack.c.l.b16 %v1636
        %v1669 = vunpack.c.l.b16 %v1637
        %v1670 = vunpack.c.l.b16 %v1638
        %v1671 = vunpack.c.l.b16 %v1639
        %v1672 = vunpack.c.l.b16 %v1640
        %v1673 = vunpack.c.l.b16 %v1641
        %v1674 = vunpack.c.l.b16 %v1642
        %v1675 = vunpack.c.l.b16 %v1643
        %v1676 = vunpack.c.l.b16 %v1644
        %v1677 = vunpack.c.l.b16 %v1645
        %v1678 = vunpack.c.l.b16 %v1646
        %v1679 = vunpack.c.l.b16 %v1647
        %v1680 = vpack.c.b16 %v1665, %v1664
        %v1681 = vpack.c.b16 %v1667, %v1666
        %v1682 = vpack.c.b16 %v1669, %v1668
        %v1683 = vpack.c.b16 %v1671, %v1670
        %v1684 = vpack.c.b16 %v1673, %v1672
        %v1685 = vpack.c.b16 %v1675, %v1674
        %v1686 = vpack.c.b16 %v1677, %v1676
        %v1687 = vpack.c.b16 %v1679, %v1678
        %1696 = vmatprep.subr.bf16.mxu0 0
        %1697 = vmatpush1.bf16.msra.mxu0 %v1680
        %1698 = vmatprep.subr.bf16.mxu0 0
        %1699 = vmatpush1.bf16.msra.mxu0 %v1681
        %1700 = vmatprep.subr.bf16.mxu0 0
        %1701 = vmatpush1.bf16.msra.mxu0 %v1682
        %1702 = vmatprep.subr.bf16.mxu0 0
        %1703 = vmatpush1.bf16.msra.mxu0 %v1683
        %1704 = vmatprep.subr.bf16.mxu0 0
        %1705 = vmatpush1.bf16.msra.mxu0 %v1684
        %1706 = vmatprep.subr.bf16.mxu0 0
        %1707 = vmatpush1.bf16.msra.mxu0 %v1685
        %1708 = vmatprep.subr.bf16.mxu0 0
        %1709 = vmatpush1.bf16.msra.mxu0 %v1686
        %1710 = vmatprep.subr.bf16.mxu0 0
        %1711 = vmatpush1.bf16.msra.mxu0 %v1687
        %1712 = vmatprep.subr.bf16.mxu0 0
        %1713 = vmatpush1.bf16.msra.mxu0 0
        %1714 = vmatprep.subr.bf16.mxu0 0
        %1715 = vmatpush1.bf16.msra.mxu0 0
        %1716 = vmatprep.subr.bf16.mxu0 0
        %1717 = vmatpush1.bf16.msra.mxu0 0
        %1718 = vmatprep.subr.bf16.mxu0 0
        %1719 = vmatpush1.bf16.msra.mxu0 0
        %1720 = vmatprep.subr.bf16.mxu0 0
        %1721 = vmatpush1.bf16.msra.mxu0 0
        %1722 = vmatprep.subr.bf16.mxu0 0
        %1723 = vmatpush1.bf16.msra.mxu0 0
        %1724 = vmatprep.subr.bf16.mxu0 0
        %1725 = vmatpush1.bf16.msra.mxu0 0
        %1726 = vmatprep.subr.bf16.mxu0 0
        %1727 = vmatpush1.bf16.msra.mxu0 0
        %1728 = vmatprep.mubr.bf16.mxu0 0
        %1729 = vmatmul.mubr.bf16.gmra.mrb[0].mxu0 %v1615
        %v1730 = vpop.f32.mrb[0].mxu0
        %v1731 = vadd.f32 0.0, %v1730
        %v1732 = vpop.f32.mrb[0].mxu0
        %v1733 = vpop.f32.mrb[0].mxu0
        %v1734 = vadd.f32 0.0, %v1733
        %v1735 = vpop.f32.mrb[0].mxu0
        %1736 = vmatprep.mubr.bf16.mxu0 0
        %1737 = vmatmul.mubr.bf16.gmra.mrb[0].mxu0 %v1616
        %v1738 = vpop.f32.mrb[0].mxu0
        %v1739 = vadd.f32 0.0, %v1738
        %v1740 = vpop.f32.mrb[0].mxu0
        %v1741 = vpop.f32.mrb[0].mxu0
        %v1742 = vadd.f32 0.0, %v1741
        %v1743 = vpop.f32.mrb[0].mxu0
        %1744 = vmatprep.mubr.bf16.mxu0 0
        %1745 = vmatmul.mubr.bf16.gmra.mrb[0].mxu0 %v1617
        %v1746 = vpop.f32.mrb[0].mxu0
        %v1747 = vadd.f32 0.0, %v1746
        %v1748 = vpop.f32.mrb[0].mxu0
        %v1749 = vpop.f32.mrb[0].mxu0
        %v1750 = vadd.f32 0.0, %v1749
        %v1751 = vpop.f32.mrb[0].mxu0
        %1752 = vmatprep.mubr.bf16.mxu0 0
        %1753 = vmatmul.mubr.bf16.gmra.mrb[0].mxu0 %v1618
        %v1754 = vpop.f32.mrb[0].mxu0
        %v1755 = vadd.f32 0.0, %v1754
        %v1756 = vpop.f32.mrb[0].mxu0
        %v1757 = vpop.f32.mrb[0].mxu0
        %v1758 = vadd.f32 0.0, %v1757
        %v1759 = vpop.f32.mrb[0].mxu0
        %1760 = vmatprep.mubr.bf16.mxu0 0
        %1761 = vmatmul.mubr.bf16.gmra.mrb[0].mxu0 %v1619
        %v1762 = vpop.f32.mrb[0].mxu0
        %v1763 = vadd.f32 0.0, %v1762
        %v1764 = vpop.f32.mrb[0].mxu0
        %v1765 = vpop.f32.mrb[0].mxu0
        %v1766 = vadd.f32 0.0, %v1765
        %v1767 = vpop.f32.mrb[0].mxu0
        %1768 = vmatprep.mubr.bf16.mxu0 0
        %1769 = vmatmul.mubr.bf16.gmra.mrb[0].mxu0 %v1620
        %v1770 = vpop.f32.mrb[0].mxu0
        %v1771 = vadd.f32 0.0, %v1770
        %v1772 = vpop.f32.mrb[0].mxu0
        %v1773 = vpop.f32.mrb[0].mxu0
        %v1774 = vadd.f32 0.0, %v1773
        %v1775 = vpop.f32.mrb[0].mxu0
        %1776 = vmatprep.mubr.bf16.mxu0 0
        %1777 = vmatmul.mubr.bf16.gmra.mrb[0].mxu0 %v1621
        %v1778 = vpop.f32.mrb[0].mxu0
        %v1779 = vadd.f32 0.0, %v1778
        %v1780 = vpop.f32.mrb[0].mxu0
        %v1781 = vpop.f32.mrb[0].mxu0
        %v1782 = vadd.f32 0.0, %v1781
        %v1783 = vpop.f32.mrb[0].mxu0
        %1784 = vmatprep.mubr.bf16.mxu0 0
        %1785 = vmatmul.mubr.bf16.gmra.mrb[0].mxu0 %v1622
        %v1786 = vpop.f32.mrb[0].mxu0
        %v1787 = vadd.f32 0.0, %v1786
        %v1788 = vpop.f32.mrb[0].mxu0
        %v1789 = vpop.f32.mrb[0].mxu0
        %v1790 = vadd.f32 0.0, %v1789
        %v1791 = vpop.f32.mrb[0].mxu0
        %1792 = vmatprep.mubr.bf16.mxu0 0
        %1793 = vmatmul.mubr.bf16.gmra.mrb[0].mxu0 %v1623
        %v1794 = vpop.f32.mrb[0].mxu0
        %v1795 = vadd.f32 0.0, %v1794
        %v1796 = vpop.f32.mrb[0].mxu0
        %v1797 = vpop.f32.mrb[0].mxu0
        %v1798 = vadd.f32 0.0, %v1797
        %v1799 = vpop.f32.mrb[0].mxu0
        %1800 = vmatprep.mubr.bf16.mxu0 0
        %1801 = vmatmul.mubr.bf16.gmra.mrb[0].mxu0 %v1624
        %v1802 = vpop.f32.mrb[0].mxu0
        %v1803 = vadd.f32 0.0, %v1802
        %v1804 = vpop.f32.mrb[0].mxu0
        %v1805 = vpop.f32.mrb[0].mxu0
        %v1806 = vadd.f32 0.0, %v1805
        %v1807 = vpop.f32.mrb[0].mxu0
        %1808 = vmatprep.mubr.bf16.mxu0 0
        %1809 = vmatmul.mubr.bf16.gmra.mrb[0].mxu0 %v1625
        %v1810 = vpop.f32.mrb[0].mxu0
        %v1811 = vadd.f32 0.0, %v1810
        %v1812 = vpop.f32.mrb[0].mxu0
        %v1813 = vpop.f32.mrb[0].mxu0
        %v1814 = vadd.f32 0.0, %v1813
        %v1815 = vpop.f32.mrb[0].mxu0
        %1816 = vmatprep.mubr.bf16.mxu0 0
        %1817 = vmatmul.mubr.bf16.gmra.mrb[0].mxu0 %v1626
        %v1818 = vpop.f32.mrb[0].mxu0
        %v1819 = vadd.f32 0.0, %v1818
        %v1820 = vpop.f32.mrb[0].mxu0
        %v1821 = vpop.f32.mrb[0].mxu0
        %v1822 = vadd.f32 0.0, %v1821
        %v1823 = vpop.f32.mrb[0].mxu0
        %1824 = vmatprep.mubr.bf16.mxu0 0
        %1825 = vmatmul.mubr.bf16.gmra.mrb[0].mxu0 %v1627
        %v1826 = vpop.f32.mrb[0].mxu0
        %v1827 = vadd.f32 0.0, %v1826
        %v1828 = vpop.f32.mrb[0].mxu0
        %v1829 = vpop.f32.mrb[0].mxu0
        %v1830 = vadd.f32 0.0, %v1829
        %v1831 = vpop.f32.mrb[0].mxu0
        %1832 = vmatprep.mubr.bf16.mxu0 0
        %1833 = vmatmul.mubr.bf16.gmra.mrb[0].mxu0 %v1628
        %v1834 = vpop.f32.mrb[0].mxu0
        %v1835 = vadd.f32 0.0, %v1834
        %v1836 = vpop.f32.mrb[0].mxu0
        %v1837 = vpop.f32.mrb[0].mxu0
        %v1838 = vadd.f32 0.0, %v1837
        %v1839 = vpop.f32.mrb[0].mxu0
        %1840 = vmatprep.mubr.bf16.mxu0 0
        %1841 = vmatmul.mubr.bf16.gmra.mrb[0].mxu0 %v1629
        %v1842 = vpop.f32.mrb[0].mxu0
        %v1843 = vadd.f32 0.0, %v1842
        %v1844 = vpop.f32.mrb[0].mxu0
        %v1845 = vpop.f32.mrb[0].mxu0
        %v1846 = vadd.f32 0.0, %v1845
        %v1847 = vpop.f32.mrb[0].mxu0
        %1848 = vmatprep.mubr.bf16.mxu0 0
        %1849 = vmatmul.mubr.bf16.gmra.mrb[0].mxu0 %v1630
        %v1850 = vpop.f32.mrb[0].mxu0
        %v1851 = vadd.f32 0.0, %v1850
        %v1852 = vpop.f32.mrb[0].mxu0
        %v1853 = vpop.f32.mrb[0].mxu0
        %v1854 = vadd.f32 0.0, %v1853
        %v1855 = vpop.f32.mrb[0].mxu0
        %1856 = vdwg.mxu0
        %v1857 = vadd.f32 %v1551, %v1731
        %v1858 = vadd.f32 %v1552, %v1734
        %v1859 = vadd.f32 %v1553, %v1739
        %v1860 = vadd.f32 %v1554, %v1742
        %v1861 = vadd.f32 %v1555, %v1747
        %v1862 = vadd.f32 %v1556, %v1750
        %v1863 = vadd.f32 %v1557, %v1755
        %v1864 = vadd.f32 %v1558, %v1758
        %v1865 = vadd.f32 %v1559, %v1763
        %v1866 = vadd.f32 %v1560, %v1766
        %v1867 = vadd.f32 %v1561, %v1771
        %v1868 = vadd.f32 %v1562, %v1774
        %v1869 = vadd.f32 %v1563, %v1779
        %v1870 = vadd.f32 %v1564, %v1782
        %v1871 = vadd.f32 %v1565, %v1787
        %v1872 = vadd.f32 %v1566, %v1790
        %v1873 = vadd.f32 %v1567, %v1795
        %v1874 = vadd.f32 %v1568, %v1798
        %v1875 = vadd.f32 %v1569, %v1803
        %v1876 = vadd.f32 %v1570, %v1806
        %v1877 = vadd.f32 %v1571, %v1811
        %v1878 = vadd.f32 %v1572, %v1814
        %v1879 = vadd.f32 %v1573, %v1819
        %v1880 = vadd.f32 %v1574, %v1822
        %v1881 = vadd.f32 %v1575, %v1827
        %v1882 = vadd.f32 %v1576, %v1830
        %v1883 = vadd.f32 %v1577, %v1835
        %v1884 = vadd.f32 %v1578, %v1838
        %v1885 = vadd.f32 %v1579, %v1843
        %v1886 = vadd.f32 %v1580, %v1846
        %v1887 = vadd.f32 %v1581, %v1851
        %v1888 = vadd.f32 %v1582, %v1854
        %v1889 = vld [vmem:[%s697 + $0x1] sm:$0xff]
        %v1890 = vld [vmem:[%s697 + $0x9] sm:$0xff]
        %v1891 = vld [vmem:[%s697 + $0x19] sm:$0xff]
        %v1892 = vld [vmem:[%s697 + $0x21] sm:$0xff]
        %v1893 = vld [vmem:[%s697 + $0x31] sm:$0xff]
        %v1894 = vld [vmem:[%s697 + $0x39] sm:$0xff]
        %v1895 = vld [vmem:[%s697 + $0x49] sm:$0xff]
        %v1896 = vld [vmem:[%s697 + $0x51] sm:$0xff]
        %v1897 = vld [vmem:[%s697 + $0x61] sm:$0xff]
        %v1898 = vld [vmem:[%s697 + $0x69] sm:$0xff]
        %v1899 = vld [vmem:[%s697 + $0x79] sm:$0xff]
        %v1900 = vld [vmem:[%s697 + $0x81] sm:$0xff]
        %v1901 = vld [vmem:[%s697 + $0x91] sm:$0xff]
        %v1902 = vld [vmem:[%s697 + $0x99] sm:$0xff]
        %v1903 = vld [vmem:[%s697 + $0xa9] sm:$0xff]
        %v1904 = vld [vmem:[%s697 + $0xb1] sm:$0xff]
        %v1905 = vld [vmem:[%s697 + $0xc1] sm:$0xff]
        %v1906 = vld [vmem:[%s697 + $0xc9] sm:$0xff]
        %v1907 = vld [vmem:[%s697 + $0xd9] sm:$0xff]
        %v1908 = vld [vmem:[%s697 + $0xe1] sm:$0xff]
        %v1909 = vld [vmem:[%s697 + $0xf1] sm:$0xff]
        %v1910 = vld [vmem:[%s697 + $0xf9] sm:$0xff]
        %v1911 = vld [vmem:[%s697 + $0x109] sm:$0xff]
        %v1912 = vld [vmem:[%s697 + $0x111] sm:$0xff]
        %v1913 = vld [vmem:[%s697 + $0x121] sm:$0xff]
        %v1914 = vld [vmem:[%s697 + $0x129] sm:$0xff]
        %v1915 = vld [vmem:[%s697 + $0x139] sm:$0xff]
        %v1916 = vld [vmem:[%s697 + $0x141] sm:$0xff]
        %v1917 = vld [vmem:[%s697 + $0x151] sm:$0xff]
        %v1918 = vld [vmem:[%s697 + $0x159] sm:$0xff]
        %v1919 = vld [vmem:[%s697 + $0x169] sm:$0xff]
        %v1920 = vld [vmem:[%s697 + $0x171] sm:$0xff]
        %v1921 = vpack.c.bf16 %v1890, %v1889
        %v1922 = vpack.c.bf16 %v1892, %v1891
        %v1923 = vpack.c.bf16 %v1894, %v1893
        %v1924 = vpack.c.bf16 %v1896, %v1895
        %v1925 = vpack.c.bf16 %v1898, %v1897
        %v1926 = vpack.c.bf16 %v1900, %v1899
        %v1927 = vpack.c.bf16 %v1902, %v1901
        %v1928 = vpack.c.bf16 %v1904, %v1903
        %v1929 = vpack.c.bf16 %v1906, %v1905
        %v1930 = vpack.c.bf16 %v1908, %v1907
        %v1931 = vpack.c.bf16 %v1910, %v1909
        %v1932 = vpack.c.bf16 %v1912, %v1911
        %v1933 = vpack.c.bf16 %v1914, %v1913
        %v1934 = vpack.c.bf16 %v1916, %v1915
        %v1935 = vpack.c.bf16 %v1918, %v1917
        %v1936 = vpack.c.bf16 %v1920, %v1919
        %s1937 = scalar_lea.vmem [#allocation8], 256
        %v1938 = vld [vmem:[%s1937] sm:$0xf]
        %v1939 = vld [vmem:[%s1937 + $0x4] sm:$0xf]
        %v1940 = vld [vmem:[%s1937 + $0x8] sm:$0xf]
        %v1941 = vld [vmem:[%s1937 + $0xc] sm:$0xf]
        %v1942 = vld [vmem:[%s1937 + $0x10] sm:$0xf]
        %v1943 = vld [vmem:[%s1937 + $0x14] sm:$0xf]
        %v1944 = vld [vmem:[%s1937 + $0x18] sm:$0xf]
        %v1945 = vld [vmem:[%s1937 + $0x1c] sm:$0xf]
        %v1946 = vld [vmem:[%s1937 + $0x20] sm:$0xf]
        %v1947 = vld [vmem:[%s1937 + $0x24] sm:$0xf]
        %v1948 = vld [vmem:[%s1937 + $0x28] sm:$0xf]
        %v1949 = vld [vmem:[%s1937 + $0x2c] sm:$0xf]
        %v1950 = vld [vmem:[%s1937 + $0x30] sm:$0xf]
        %v1951 = vld [vmem:[%s1937 + $0x34] sm:$0xf]
        %v1952 = vld [vmem:[%s1937 + $0x38] sm:$0xf]
        %v1953 = vld [vmem:[%s1937 + $0x3c] sm:$0xf]
        %v1970 = vunpack.c.l.b16 %v1938
        %v1971 = vunpack.c.l.b16 %v1939
        %v1972 = vunpack.c.l.b16 %v1940
        %v1973 = vunpack.c.l.b16 %v1941
        %v1974 = vunpack.c.l.b16 %v1942
        %v1975 = vunpack.c.l.b16 %v1943
        %v1976 = vunpack.c.l.b16 %v1944
        %v1977 = vunpack.c.l.b16 %v1945
        %v1978 = vunpack.c.l.b16 %v1946
        %v1979 = vunpack.c.l.b16 %v1947
        %v1980 = vunpack.c.l.b16 %v1948
        %v1981 = vunpack.c.l.b16 %v1949
        %v1982 = vunpack.c.l.b16 %v1950
        %v1983 = vunpack.c.l.b16 %v1951
        %v1984 = vunpack.c.l.b16 %v1952
        %v1985 = vunpack.c.l.b16 %v1953
        %v1986 = vpack.c.b16 %v1971, %v1970
        %v1987 = vpack.c.b16 %v1973, %v1972
        %v1988 = vpack.c.b16 %v1975, %v1974
        %v1989 = vpack.c.b16 %v1977, %v1976
        %v1990 = vpack.c.b16 %v1979, %v1978
        %v1991 = vpack.c.b16 %v1981, %v1980
        %v1992 = vpack.c.b16 %v1983, %v1982
        %v1993 = vpack.c.b16 %v1985, %v1984
        %2002 = vmatprep.subr.bf16.mxu0 0
        %2003 = vmatpush1.bf16.msra.mxu0 %v1986
        %2004 = vmatprep.subr.bf16.mxu0 0
        %2005 = vmatpush1.bf16.msra.mxu0 %v1987
        %2006 = vmatprep.subr.bf16.mxu0 0
        %2007 = vmatpush1.bf16.msra.mxu0 %v1988
        %2008 = vmatprep.subr.bf16.mxu0 0
        %2009 = vmatpush1.bf16.msra.mxu0 %v1989
        %2010 = vmatprep.subr.bf16.mxu0 0
        %2011 = vmatpush1.bf16.msra.mxu0 %v1990
        %2012 = vmatprep.subr.bf16.mxu0 0
        %2013 = vmatpush1.bf16.msra.mxu0 %v1991
        %2014 = vmatprep.subr.bf16.mxu0 0
        %2015 = vmatpush1.bf16.msra.mxu0 %v1992
        %2016 = vmatprep.subr.bf16.mxu0 0
        %2017 = vmatpush1.bf16.msra.mxu0 %v1993
        %2018 = vmatprep.subr.bf16.mxu0 0
        %2019 = vmatpush1.bf16.msra.mxu0 0
        %2020 = vmatprep.subr.bf16.mxu0 0
        %2021 = vmatpush1.bf16.msra.mxu0 0
        %2022 = vmatprep.subr.bf16.mxu0 0
        %2023 = vmatpush1.bf16.msra.mxu0 0
        %2024 = vmatprep.subr.bf16.mxu0 0
        %2025 = vmatpush1.bf16.msra.mxu0 0
        %2026 = vmatprep.subr.bf16.mxu0 0
        %2027 = vmatpush1.bf16.msra.mxu0 0
        %2028 = vmatprep.subr.bf16.mxu0 0
        %2029 = vmatpush1.bf16.msra.mxu0 0
        %2030 = vmatprep.subr.bf16.mxu0 0
        %2031 = vmatpush1.bf16.msra.mxu0 0
        %2032 = vmatprep.subr.bf16.mxu0 0
        %2033 = vmatpush1.bf16.msra.mxu0 0
        %2034 = vmatprep.mubr.bf16.mxu0 0
        %2035 = vmatmul.mubr.bf16.gmra.mrb[0].mxu0 %v1921
        %v2036 = vpop.f32.mrb[0].mxu0
        %v2037 = vadd.f32 0.0, %v2036
        %v2038 = vpop.f32.mrb[0].mxu0
        %v2039 = vpop.f32.mrb[0].mxu0
        %v2040 = vadd.f32 0.0, %v2039
        %v2041 = vpop.f32.mrb[0].mxu0
        %2042 = vmatprep.mubr.bf16.mxu0 0
        %2043 = vmatmul.mubr.bf16.gmra.mrb[0].mxu0 %v1922
        %v2044 = vpop.f32.mrb[0].mxu0
        %v2045 = vadd.f32 0.0, %v2044
        %v2046 = vpop.f32.mrb[0].mxu0
        %v2047 = vpop.f32.mrb[0].mxu0
        %v2048 = vadd.f32 0.0, %v2047
        %v2049 = vpop.f32.mrb[0].mxu0
        %2050 = vmatprep.mubr.bf16.mxu0 0
        %2051 = vmatmul.mubr.bf16.gmra.mrb[0].mxu0 %v1923
        %v2052 = vpop.f32.mrb[0].mxu0
        %v2053 = vadd.f32 0.0, %v2052
        %v2054 = vpop.f32.mrb[0].mxu0
        %v2055 = vpop.f32.mrb[0].mxu0
        %v2056 = vadd.f32 0.0, %v2055
        %v2057 = vpop.f32.mrb[0].mxu0
        %2058 = vmatprep.mubr.bf16.mxu0 0
        %2059 = vmatmul.mubr.bf16.gmra.mrb[0].mxu0 %v1924
        %v2060 = vpop.f32.mrb[0].mxu0
        %v2061 = vadd.f32 0.0, %v2060
        %v2062 = vpop.f32.mrb[0].mxu0
        %v2063 = vpop.f32.mrb[0].mxu0
        %v2064 = vadd.f32 0.0, %v2063
        %v2065 = vpop.f32.mrb[0].mxu0
        %2066 = vmatprep.mubr.bf16.mxu0 0
        %2067 = vmatmul.mubr.bf16.gmra.mrb[0].mxu0 %v1925
        %v2068 = vpop.f32.mrb[0].mxu0
        %v2069 = vadd.f32 0.0, %v2068
        %v2070 = vpop.f32.mrb[0].mxu0
        %v2071 = vpop.f32.mrb[0].mxu0
        %v2072 = vadd.f32 0.0, %v2071
        %v2073 = vpop.f32.mrb[0].mxu0
        %2074 = vmatprep.mubr.bf16.mxu0 0
        %2075 = vmatmul.mubr.bf16.gmra.mrb[0].mxu0 %v1926
        %v2076 = vpop.f32.mrb[0].mxu0
        %v2077 = vadd.f32 0.0, %v2076
        %v2078 = vpop.f32.mrb[0].mxu0
        %v2079 = vpop.f32.mrb[0].mxu0
        %v2080 = vadd.f32 0.0, %v2079
        %v2081 = vpop.f32.mrb[0].mxu0
        %2082 = vmatprep.mubr.bf16.mxu0 0
        %2083 = vmatmul.mubr.bf16.gmra.mrb[0].mxu0 %v1927
        %v2084 = vpop.f32.mrb[0].mxu0
        %v2085 = vadd.f32 0.0, %v2084
        %v2086 = vpop.f32.mrb[0].mxu0
        %v2087 = vpop.f32.mrb[0].mxu0
        %v2088 = vadd.f32 0.0, %v2087
        %v2089 = vpop.f32.mrb[0].mxu0
        %2090 = vmatprep.mubr.bf16.mxu0 0
        %2091 = vmatmul.mubr.bf16.gmra.mrb[0].mxu0 %v1928
        %v2092 = vpop.f32.mrb[0].mxu0
        %v2093 = vadd.f32 0.0, %v2092
        %v2094 = vpop.f32.mrb[0].mxu0
        %v2095 = vpop.f32.mrb[0].mxu0
        %v2096 = vadd.f32 0.0, %v2095
        %v2097 = vpop.f32.mrb[0].mxu0
        %2098 = vmatprep.mubr.bf16.mxu0 0
        %2099 = vmatmul.mubr.bf16.gmra.mrb[0].mxu0 %v1929
        %v2100 = vpop.f32.mrb[0].mxu0
        %v2101 = vadd.f32 0.0, %v2100
        %v2102 = vpop.f32.mrb[0].mxu0
        %v2103 = vpop.f32.mrb[0].mxu0
        %v2104 = vadd.f32 0.0, %v2103
        %v2105 = vpop.f32.mrb[0].mxu0
        %2106 = vmatprep.mubr.bf16.mxu0 0
        %2107 = vmatmul.mubr.bf16.gmra.mrb[0].mxu0 %v1930
        %v2108 = vpop.f32.mrb[0].mxu0
        %v2109 = vadd.f32 0.0, %v2108
        %v2110 = vpop.f32.mrb[0].mxu0
        %v2111 = vpop.f32.mrb[0].mxu0
        %v2112 = vadd.f32 0.0, %v2111
        %v2113 = vpop.f32.mrb[0].mxu0
        %2114 = vmatprep.mubr.bf16.mxu0 0
        %2115 = vmatmul.mubr.bf16.gmra.mrb[0].mxu0 %v1931
        %v2116 = vpop.f32.mrb[0].mxu0
        %v2117 = vadd.f32 0.0, %v2116
        %v2118 = vpop.f32.mrb[0].mxu0
        %v2119 = vpop.f32.mrb[0].mxu0
        %v2120 = vadd.f32 0.0, %v2119
        %v2121 = vpop.f32.mrb[0].mxu0
        %2122 = vmatprep.mubr.bf16.mxu0 0
        %2123 = vmatmul.mubr.bf16.gmra.mrb[0].mxu0 %v1932
        %v2124 = vpop.f32.mrb[0].mxu0
        %v2125 = vadd.f32 0.0, %v2124
        %v2126 = vpop.f32.mrb[0].mxu0
        %v2127 = vpop.f32.mrb[0].mxu0
        %v2128 = vadd.f32 0.0, %v2127
        %v2129 = vpop.f32.mrb[0].mxu0
        %2130 = vmatprep.mubr.bf16.mxu0 0
        %2131 = vmatmul.mubr.bf16.gmra.mrb[0].mxu0 %v1933
        %v2132 = vpop.f32.mrb[0].mxu0
        %v2133 = vadd.f32 0.0, %v2132
        %v2134 = vpop.f32.mrb[0].mxu0
        %v2135 = vpop.f32.mrb[0].mxu0
        %v2136 = vadd.f32 0.0, %v2135
        %v2137 = vpop.f32.mrb[0].mxu0
        %2138 = vmatprep.mubr.bf16.mxu0 0
        %2139 = vmatmul.mubr.bf16.gmra.mrb[0].mxu0 %v1934
        %v2140 = vpop.f32.mrb[0].mxu0
        %v2141 = vadd.f32 0.0, %v2140
        %v2142 = vpop.f32.mrb[0].mxu0
        %v2143 = vpop.f32.mrb[0].mxu0
        %v2144 = vadd.f32 0.0, %v2143
        %v2145 = vpop.f32.mrb[0].mxu0
        %2146 = vmatprep.mubr.bf16.mxu0 0
        %2147 = vmatmul.mubr.bf16.gmra.mrb[0].mxu0 %v1935
        %v2148 = vpop.f32.mrb[0].mxu0
        %v2149 = vadd.f32 0.0, %v2148
        %v2150 = vpop.f32.mrb[0].mxu0
        %v2151 = vpop.f32.mrb[0].mxu0
        %v2152 = vadd.f32 0.0, %v2151
        %v2153 = vpop.f32.mrb[0].mxu0
        %2154 = vmatprep.mubr.bf16.mxu0 0
        %2155 = vmatmul.mubr.bf16.gmra.mrb[0].mxu0 %v1936
        %v2156 = vpop.f32.mrb[0].mxu0
        %v2157 = vadd.f32 0.0, %v2156
        %v2158 = vpop.f32.mrb[0].mxu0
        %v2159 = vpop.f32.mrb[0].mxu0
        %v2160 = vadd.f32 0.0, %v2159
        %v2161 = vpop.f32.mrb[0].mxu0
        %2162 = vdwg.mxu0
        %v2163 = vadd.f32 %v1857, %v2037
        %v2164 = vadd.f32 %v1858, %v2040
        %v2165 = vadd.f32 %v1859, %v2045
        %v2166 = vadd.f32 %v1860, %v2048
        %v2167 = vadd.f32 %v1861, %v2053
        %v2168 = vadd.f32 %v1862, %v2056
        %v2169 = vadd.f32 %v1863, %v2061
        %v2170 = vadd.f32 %v1864, %v2064
        %v2171 = vadd.f32 %v1865, %v2069
        %v2172 = vadd.f32 %v1866, %v2072
        %v2173 = vadd.f32 %v1867, %v2077
        %v2174 = vadd.f32 %v1868, %v2080
        %v2175 = vadd.f32 %v1869, %v2085
        %v2176 = vadd.f32 %v1870, %v2088
        %v2177 = vadd.f32 %v1871, %v2093
        %v2178 = vadd.f32 %v1872, %v2096
        %v2179 = vadd.f32 %v1873, %v2101
        %v2180 = vadd.f32 %v1874, %v2104
        %v2181 = vadd.f32 %v1875, %v2109
        %v2182 = vadd.f32 %v1876, %v2112
        %v2183 = vadd.f32 %v1877, %v2117
        %v2184 = vadd.f32 %v1878, %v2120
        %v2185 = vadd.f32 %v1879, %v2125
        %v2186 = vadd.f32 %v1880, %v2128
        %v2187 = vadd.f32 %v1881, %v2133
        %v2188 = vadd.f32 %v1882, %v2136
        %v2189 = vadd.f32 %v1883, %v2141
        %v2190 = vadd.f32 %v1884, %v2144
        %v2191 = vadd.f32 %v1885, %v2149
        %v2192 = vadd.f32 %v1886, %v2152
        %v2193 = vadd.f32 %v1887, %v2157
        %v2194 = vadd.f32 %v1888, %v2160
        %v2195 = vld [vmem:[%s697 + $0x2] sm:$0xff]
        %v2196 = vld [vmem:[%s697 + $0xa] sm:$0xff]
        %v2197 = vld [vmem:[%s697 + $0x1a] sm:$0xff]
        %v2198 = vld [vmem:[%s697 + $0x22] sm:$0xff]
        %v2199 = vld [vmem:[%s697 + $0x32] sm:$0xff]
        %v2200 = vld [vmem:[%s697 + $0x3a] sm:$0xff]
        %v2201 = vld [vmem:[%s697 + $0x4a] sm:$0xff]
        %v2202 = vld [vmem:[%s697 + $0x52] sm:$0xff]
        %v2203 = vld [vmem:[%s697 + $0x62] sm:$0xff]
        %v2204 = vld [vmem:[%s697 + $0x6a] sm:$0xff]
        %v2205 = vld [vmem:[%s697 + $0x7a] sm:$0xff]
        %v2206 = vld [vmem:[%s697 + $0x82] sm:$0xff]
        %v2207 = vld [vmem:[%s697 + $0x92] sm:$0xff]
        %v2208 = vld [vmem:[%s697 + $0x9a] sm:$0xff]
        %v2209 = vld [vmem:[%s697 + $0xaa] sm:$0xff]
        %v2210 = vld [vmem:[%s697 + $0xb2] sm:$0xff]
        %v2211 = vld [vmem:[%s697 + $0xc2] sm:$0xff]
        %v2212 = vld [vmem:[%s697 + $0xca] sm:$0xff]
        %v2213 = vld [vmem:[%s697 + $0xda] sm:$0xff]
        %v2214 = vld [vmem:[%s697 + $0xe2] sm:$0xff]
        %v2215 = vld [vmem:[%s697 + $0xf2] sm:$0xff]
        %v2216 = vld [vmem:[%s697 + $0xfa] sm:$0xff]
        %v2217 = vld [vmem:[%s697 + $0x10a] sm:$0xff]
        %v2218 = vld [vmem:[%s697 + $0x112] sm:$0xff]
        %v2219 = vld [vmem:[%s697 + $0x122] sm:$0xff]
        %v2220 = vld [vmem:[%s697 + $0x12a] sm:$0xff]
        %v2221 = vld [vmem:[%s697 + $0x13a] sm:$0xff]
        %v2222 = vld [vmem:[%s697 + $0x142] sm:$0xff]
        %v2223 = vld [vmem:[%s697 + $0x152] sm:$0xff]
        %v2224 = vld [vmem:[%s697 + $0x15a] sm:$0xff]
        %v2225 = vld [vmem:[%s697 + $0x16a] sm:$0xff]
        %v2226 = vld [vmem:[%s697 + $0x172] sm:$0xff]
        %v2227 = vpack.c.bf16 %v2196, %v2195
        %v2228 = vpack.c.bf16 %v2198, %v2197
        %v2229 = vpack.c.bf16 %v2200, %v2199
        %v2230 = vpack.c.bf16 %v2202, %v2201
        %v2231 = vpack.c.bf16 %v2204, %v2203
        %v2232 = vpack.c.bf16 %v2206, %v2205
        %v2233 = vpack.c.bf16 %v2208, %v2207
        %v2234 = vpack.c.bf16 %v2210, %v2209
        %v2235 = vpack.c.bf16 %v2212, %v2211
        %v2236 = vpack.c.bf16 %v2214, %v2213
        %v2237 = vpack.c.bf16 %v2216, %v2215
        %v2238 = vpack.c.bf16 %v2218, %v2217
        %v2239 = vpack.c.bf16 %v2220, %v2219
        %v2240 = vpack.c.bf16 %v2222, %v2221
        %v2241 = vpack.c.bf16 %v2224, %v2223
        %v2242 = vpack.c.bf16 %v2226, %v2225
        %s2243 = scalar_lea.vmem [#allocation8], 320
        %v2244 = vld [vmem:[%s2243] sm:$0xf]
        %v2245 = vld [vmem:[%s2243 + $0x4] sm:$0xf]
        %v2246 = vld [vmem:[%s2243 + $0x8] sm:$0xf]
        %v2247 = vld [vmem:[%s2243 + $0xc] sm:$0xf]
        %v2248 = vld [vmem:[%s2243 + $0x10] sm:$0xf]
        %v2249 = vld [vmem:[%s2243 + $0x14] sm:$0xf]
        %v2250 = vld [vmem:[%s2243 + $0x18] sm:$0xf]
        %v2251 = vld [vmem:[%s2243 + $0x1c] sm:$0xf]
        %v2252 = vld [vmem:[%s2243 + $0x20] sm:$0xf]
        %v2253 = vld [vmem:[%s2243 + $0x24] sm:$0xf]
        %v2254 = vld [vmem:[%s2243 + $0x28] sm:$0xf]
        %v2255 = vld [vmem:[%s2243 + $0x2c] sm:$0xf]
        %v2256 = vld [vmem:[%s2243 + $0x30] sm:$0xf]
        %v2257 = vld [vmem:[%s2243 + $0x34] sm:$0xf]
        %v2258 = vld [vmem:[%s2243 + $0x38] sm:$0xf]
        %v2259 = vld [vmem:[%s2243 + $0x3c] sm:$0xf]
        %v2276 = vunpack.c.l.b16 %v2244
        %v2277 = vunpack.c.l.b16 %v2245
        %v2278 = vunpack.c.l.b16 %v2246
        %v2279 = vunpack.c.l.b16 %v2247
        %v2280 = vunpack.c.l.b16 %v2248
        %v2281 = vunpack.c.l.b16 %v2249
        %v2282 = vunpack.c.l.b16 %v2250
        %v2283 = vunpack.c.l.b16 %v2251
        %v2284 = vunpack.c.l.b16 %v2252
        %v2285 = vunpack.c.l.b16 %v2253
        %v2286 = vunpack.c.l.b16 %v2254
        %v2287 = vunpack.c.l.b16 %v2255
        %v2288 = vunpack.c.l.b16 %v2256
        %v2289 = vunpack.c.l.b16 %v2257
        %v2290 = vunpack.c.l.b16 %v2258
        %v2291 = vunpack.c.l.b16 %v2259
        %v2292 = vpack.c.b16 %v2277, %v2276
        %v2293 = vpack.c.b16 %v2279, %v2278
        %v2294 = vpack.c.b16 %v2281, %v2280
        %v2295 = vpack.c.b16 %v2283, %v2282
        %v2296 = vpack.c.b16 %v2285, %v2284
        %v2297 = vpack.c.b16 %v2287, %v2286
        %v2298 = vpack.c.b16 %v2289, %v2288
        %v2299 = vpack.c.b16 %v2291, %v2290
        %2308 = vmatprep.subr.bf16.mxu0 0
        %2309 = vmatpush1.bf16.msra.mxu0 %v2292
        %2310 = vmatprep.subr.bf16.mxu0 0
        %2311 = vmatpush1.bf16.msra.mxu0 %v2293
        %2312 = vmatprep.subr.bf16.mxu0 0
        %2313 = vmatpush1.bf16.msra.mxu0 %v2294
        %2314 = vmatprep.subr.bf16.mxu0 0
        %2315 = vmatpush1.bf16.msra.mxu0 %v2295
        %2316 = vmatprep.subr.bf16.mxu0 0
        %2317 = vmatpush1.bf16.msra.mxu0 %v2296
        %2318 = vmatprep.subr.bf16.mxu0 0
        %2319 = vmatpush1.bf16.msra.mxu0 %v2297
        %2320 = vmatprep.subr.bf16.mxu0 0
        %2321 = vmatpush1.bf16.msra.mxu0 %v2298
        %2322 = vmatprep.subr.bf16.mxu0 0
        %2323 = vmatpush1.bf16.msra.mxu0 %v2299
        %2324 = vmatprep.subr.bf16.mxu0 0
        %2325 = vmatpush1.bf16.msra.mxu0 0
        %2326 = vmatprep.subr.bf16.mxu0 0
        %2327 = vmatpush1.bf16.msra.mxu0 0
        %2328 = vmatprep.subr.bf16.mxu0 0
        %2329 = vmatpush1.bf16.msra.mxu0 0
        %2330 = vmatprep.subr.bf16.mxu0 0
        %2331 = vmatpush1.bf16.msra.mxu0 0
        %2332 = vmatprep.subr.bf16.mxu0 0
        %2333 = vmatpush1.bf16.msra.mxu0 0
        %2334 = vmatprep.subr.bf16.mxu0 0
        %2335 = vmatpush1.bf16.msra.mxu0 0
        %2336 = vmatprep.subr.bf16.mxu0 0
        %2337 = vmatpush1.bf16.msra.mxu0 0
        %2338 = vmatprep.subr.bf16.mxu0 0
        %2339 = vmatpush1.bf16.msra.mxu0 0
        %2340 = vmatprep.mubr.bf16.mxu0 0
        %2341 = vmatmul.mubr.bf16.gmra.mrb[0].mxu0 %v2227
        %v2342 = vpop.f32.mrb[0].mxu0
        %v2343 = vadd.f32 0.0, %v2342
        %v2344 = vpop.f32.mrb[0].mxu0
        %v2345 = vpop.f32.mrb[0].mxu0
        %v2346 = vadd.f32 0.0, %v2345
        %v2347 = vpop.f32.mrb[0].mxu0
        %2348 = vmatprep.mubr.bf16.mxu0 0
        %2349 = vmatmul.mubr.bf16.gmra.mrb[0].mxu0 %v2228
        %v2350 = vpop.f32.mrb[0].mxu0
        %v2351 = vadd.f32 0.0, %v2350
        %v2352 = vpop.f32.mrb[0].mxu0
        %v2353 = vpop.f32.mrb[0].mxu0
        %v2354 = vadd.f32 0.0, %v2353
        %v2355 = vpop.f32.mrb[0].mxu0
        %2356 = vmatprep.mubr.bf16.mxu0 0
        %2357 = vmatmul.mubr.bf16.gmra.mrb[0].mxu0 %v2229
        %v2358 = vpop.f32.mrb[0].mxu0
        %v2359 = vadd.f32 0.0, %v2358
        %v2360 = vpop.f32.mrb[0].mxu0
        %v2361 = vpop.f32.mrb[0].mxu0
        %v2362 = vadd.f32 0.0, %v2361
        %v2363 = vpop.f32.mrb[0].mxu0
        %2364 = vmatprep.mubr.bf16.mxu0 0
        %2365 = vmatmul.mubr.bf16.gmra.mrb[0].mxu0 %v2230
        %v2366 = vpop.f32.mrb[0].mxu0
        %v2367 = vadd.f32 0.0, %v2366
        %v2368 = vpop.f32.mrb[0].mxu0
        %v2369 = vpop.f32.mrb[0].mxu0
        %v2370 = vadd.f32 0.0, %v2369
        %v2371 = vpop.f32.mrb[0].mxu0
        %2372 = vmatprep.mubr.bf16.mxu0 0
        %2373 = vmatmul.mubr.bf16.gmra.mrb[0].mxu0 %v2231
        %v2374 = vpop.f32.mrb[0].mxu0
        %v2375 = vadd.f32 0.0, %v2374
        %v2376 = vpop.f32.mrb[0].mxu0
        %v2377 = vpop.f32.mrb[0].mxu0
        %v2378 = vadd.f32 0.0, %v2377
        %v2379 = vpop.f32.mrb[0].mxu0
        %2380 = vmatprep.mubr.bf16.mxu0 0
        %2381 = vmatmul.mubr.bf16.gmra.mrb[0].mxu0 %v2232
        %v2382 = vpop.f32.mrb[0].mxu0
        %v2383 = vadd.f32 0.0, %v2382
        %v2384 = vpop.f32.mrb[0].mxu0
        %v2385 = vpop.f32.mrb[0].mxu0
        %v2386 = vadd.f32 0.0, %v2385
        %v2387 = vpop.f32.mrb[0].mxu0
        %2388 = vmatprep.mubr.bf16.mxu0 0
        %2389 = vmatmul.mubr.bf16.gmra.mrb[0].mxu0 %v2233
        %v2390 = vpop.f32.mrb[0].mxu0
        %v2391 = vadd.f32 0.0, %v2390
        %v2392 = vpop.f32.mrb[0].mxu0
        %v2393 = vpop.f32.mrb[0].mxu0
        %v2394 = vadd.f32 0.0, %v2393
        %v2395 = vpop.f32.mrb[0].mxu0
        %2396 = vmatprep.mubr.bf16.mxu0 0
        %2397 = vmatmul.mubr.bf16.gmra.mrb[0].mxu0 %v2234
        %v2398 = vpop.f32.mrb[0].mxu0
        %v2399 = vadd.f32 0.0, %v2398
        %v2400 = vpop.f32.mrb[0].mxu0
        %v2401 = vpop.f32.mrb[0].mxu0
        %v2402 = vadd.f32 0.0, %v2401
        %v2403 = vpop.f32.mrb[0].mxu0
        %2404 = vmatprep.mubr.bf16.mxu0 0
        %2405 = vmatmul.mubr.bf16.gmra.mrb[0].mxu0 %v2235
        %v2406 = vpop.f32.mrb[0].mxu0
        %v2407 = vadd.f32 0.0, %v2406
        %v2408 = vpop.f32.mrb[0].mxu0
        %v2409 = vpop.f32.mrb[0].mxu0
        %v2410 = vadd.f32 0.0, %v2409
        %v2411 = vpop.f32.mrb[0].mxu0
        %2412 = vmatprep.mubr.bf16.mxu0 0
        %2413 = vmatmul.mubr.bf16.gmra.mrb[0].mxu0 %v2236
        %v2414 = vpop.f32.mrb[0].mxu0
        %v2415 = vadd.f32 0.0, %v2414
        %v2416 = vpop.f32.mrb[0].mxu0
        %v2417 = vpop.f32.mrb[0].mxu0
        %v2418 = vadd.f32 0.0, %v2417
        %v2419 = vpop.f32.mrb[0].mxu0
        %2420 = vmatprep.mubr.bf16.mxu0 0
        %2421 = vmatmul.mubr.bf16.gmra.mrb[0].mxu0 %v2237
        %v2422 = vpop.f32.mrb[0].mxu0
        %v2423 = vadd.f32 0.0, %v2422
        %v2424 = vpop.f32.mrb[0].mxu0
        %v2425 = vpop.f32.mrb[0].mxu0
        %v2426 = vadd.f32 0.0, %v2425
        %v2427 = vpop.f32.mrb[0].mxu0
        %2428 = vmatprep.mubr.bf16.mxu0 0
        %2429 = vmatmul.mubr.bf16.gmra.mrb[0].mxu0 %v2238
        %v2430 = vpop.f32.mrb[0].mxu0
        %v2431 = vadd.f32 0.0, %v2430
        %v2432 = vpop.f32.mrb[0].mxu0
        %v2433 = vpop.f32.mrb[0].mxu0
        %v2434 = vadd.f32 0.0, %v2433
        %v2435 = vpop.f32.mrb[0].mxu0
        %2436 = vmatprep.mubr.bf16.mxu0 0
        %2437 = vmatmul.mubr.bf16.gmra.mrb[0].mxu0 %v2239
        %v2438 = vpop.f32.mrb[0].mxu0
        %v2439 = vadd.f32 0.0, %v2438
        %v2440 = vpop.f32.mrb[0].mxu0
        %v2441 = vpop.f32.mrb[0].mxu0
        %v2442 = vadd.f32 0.0, %v2441
        %v2443 = vpop.f32.mrb[0].mxu0
        %2444 = vmatprep.mubr.bf16.mxu0 0
        %2445 = vmatmul.mubr.bf16.gmra.mrb[0].mxu0 %v2240
        %v2446 = vpop.f32.mrb[0].mxu0
        %v2447 = vadd.f32 0.0, %v2446
        %v2448 = vpop.f32.mrb[0].mxu0
        %v2449 = vpop.f32.mrb[0].mxu0
        %v2450 = vadd.f32 0.0, %v2449
        %v2451 = vpop.f32.mrb[0].mxu0
        %2452 = vmatprep.mubr.bf16.mxu0 0
        %2453 = vmatmul.mubr.bf16.gmra.mrb[0].mxu0 %v2241
        %v2454 = vpop.f32.mrb[0].mxu0
        %v2455 = vadd.f32 0.0, %v2454
        %v2456 = vpop.f32.mrb[0].mxu0
        %v2457 = vpop.f32.mrb[0].mxu0
        %v2458 = vadd.f32 0.0, %v2457
        %v2459 = vpop.f32.mrb[0].mxu0
        %2460 = vmatprep.mubr.bf16.mxu0 0
        %2461 = vmatmul.mubr.bf16.gmra.mrb[0].mxu0 %v2242
        %v2462 = vpop.f32.mrb[0].mxu0
        %v2463 = vadd.f32 0.0, %v2462
        %v2464 = vpop.f32.mrb[0].mxu0
        %v2465 = vpop.f32.mrb[0].mxu0
        %v2466 = vadd.f32 0.0, %v2465
        %v2467 = vpop.f32.mrb[0].mxu0
        %2468 = vdwg.mxu0
        %v2469 = vadd.f32 %v2163, %v2343
        %v2470 = vadd.f32 %v2164, %v2346
        %v2471 = vadd.f32 %v2165, %v2351
        %v2472 = vadd.f32 %v2166, %v2354
        %v2473 = vadd.f32 %v2167, %v2359
        %v2474 = vadd.f32 %v2168, %v2362
        %v2475 = vadd.f32 %v2169, %v2367
        %v2476 = vadd.f32 %v2170, %v2370
        %v2477 = vadd.f32 %v2171, %v2375
        %v2478 = vadd.f32 %v2172, %v2378
        %v2479 = vadd.f32 %v2173, %v2383
        %v2480 = vadd.f32 %v2174, %v2386
        %v2481 = vadd.f32 %v2175, %v2391
        %v2482 = vadd.f32 %v2176, %v2394
        %v2483 = vadd.f32 %v2177, %v2399
        %v2484 = vadd.f32 %v2178, %v2402
        %v2485 = vadd.f32 %v2179, %v2407
        %v2486 = vadd.f32 %v2180, %v2410
        %v2487 = vadd.f32 %v2181, %v2415
        %v2488 = vadd.f32 %v2182, %v2418
        %v2489 = vadd.f32 %v2183, %v2423
        %v2490 = vadd.f32 %v2184, %v2426
        %v2491 = vadd.f32 %v2185, %v2431
        %v2492 = vadd.f32 %v2186, %v2434
        %v2493 = vadd.f32 %v2187, %v2439
        %v2494 = vadd.f32 %v2188, %v2442
        %v2495 = vadd.f32 %v2189, %v2447
        %v2496 = vadd.f32 %v2190, %v2450
        %v2497 = vadd.f32 %v2191, %v2455
        %v2498 = vadd.f32 %v2192, %v2458
        %v2499 = vadd.f32 %v2193, %v2463
        %v2500 = vadd.f32 %v2194, %v2466
        %s2501 = scalar_lea.vmem [#allocation2], 48
        %v2502 = vld [vmem:[%s2501] sm:$0xff]
        %v2503 = vld [vmem:[%s2501 + $0x8] sm:$0xff]
        %v2504 = vld [vmem:[%s2501 + $0x18] sm:$0xff]
        %v2505 = vld [vmem:[%s2501 + $0x20] sm:$0xff]
        %v2506 = vld [vmem:[%s2501 + $0x30] sm:$0xff]
        %v2507 = vld [vmem:[%s2501 + $0x38] sm:$0xff]
        %v2508 = vld [vmem:[%s2501 + $0x48] sm:$0xff]
        %v2509 = vld [vmem:[%s2501 + $0x50] sm:$0xff]
        %v2510 = vld [vmem:[%s2501 + $0x60] sm:$0xff]
        %v2511 = vld [vmem:[%s2501 + $0x68] sm:$0xff]
        %v2512 = vld [vmem:[%s2501 + $0x78] sm:$0xff]
        %v2513 = vld [vmem:[%s2501 + $0x80] sm:$0xff]
        %v2514 = vld [vmem:[%s2501 + $0x90] sm:$0xff]
        %v2515 = vld [vmem:[%s2501 + $0x98] sm:$0xff]
        %v2516 = vld [vmem:[%s2501 + $0xa8] sm:$0xff]
        %v2517 = vld [vmem:[%s2501 + $0xb0] sm:$0xff]
        %v2518 = vld [vmem:[%s2501 + $0xc0] sm:$0xff]
        %v2519 = vld [vmem:[%s2501 + $0xc8] sm:$0xff]
        %v2520 = vld [vmem:[%s2501 + $0xd8] sm:$0xff]
        %v2521 = vld [vmem:[%s2501 + $0xe0] sm:$0xff]
        %v2522 = vld [vmem:[%s2501 + $0xf0] sm:$0xff]
        %v2523 = vld [vmem:[%s2501 + $0xf8] sm:$0xff]
        %v2524 = vld [vmem:[%s2501 + $0x108] sm:$0xff]
        %v2525 = vld [vmem:[%s2501 + $0x110] sm:$0xff]
        %v2526 = vld [vmem:[%s2501 + $0x120] sm:$0xff]
        %v2527 = vld [vmem:[%s2501 + $0x128] sm:$0xff]
        %v2528 = vld [vmem:[%s2501 + $0x138] sm:$0xff]
        %v2529 = vld [vmem:[%s2501 + $0x140] sm:$0xff]
        %v2530 = vld [vmem:[%s2501 + $0x150] sm:$0xff]
        %v2531 = vld [vmem:[%s2501 + $0x158] sm:$0xff]
        %v2532 = vld [vmem:[%s2501 + $0x168] sm:$0xff]
        %v2533 = vld [vmem:[%s2501 + $0x170] sm:$0xff]
        %v2534 = vpack.c.bf16 %v2503, %v2502
        %v2535 = vpack.c.bf16 %v2505, %v2504
        %v2536 = vpack.c.bf16 %v2507, %v2506
        %v2537 = vpack.c.bf16 %v2509, %v2508
        %v2538 = vpack.c.bf16 %v2511, %v2510
        %v2539 = vpack.c.bf16 %v2513, %v2512
        %v2540 = vpack.c.bf16 %v2515, %v2514
        %v2541 = vpack.c.bf16 %v2517, %v2516
        %v2542 = vpack.c.bf16 %v2519, %v2518
        %v2543 = vpack.c.bf16 %v2521, %v2520
        %v2544 = vpack.c.bf16 %v2523, %v2522
        %v2545 = vpack.c.bf16 %v2525, %v2524
        %v2546 = vpack.c.bf16 %v2527, %v2526
        %v2547 = vpack.c.bf16 %v2529, %v2528
        %v2548 = vpack.c.bf16 %v2531, %v2530
        %v2549 = vpack.c.bf16 %v2533, %v2532
        %s2550 = scalar_lea.vmem [#allocation8], 384
        %v2551 = vld [vmem:[%s2550] sm:$0xf]
        %v2552 = vld [vmem:[%s2550 + $0x4] sm:$0xf]
        %v2553 = vld [vmem:[%s2550 + $0x8] sm:$0xf]
        %v2554 = vld [vmem:[%s2550 + $0xc] sm:$0xf]
        %v2555 = vld [vmem:[%s2550 + $0x10] sm:$0xf]
        %v2556 = vld [vmem:[%s2550 + $0x14] sm:$0xf]
        %v2557 = vld [vmem:[%s2550 + $0x18] sm:$0xf]
        %v2558 = vld [vmem:[%s2550 + $0x1c] sm:$0xf]
        %v2559 = vld [vmem:[%s2550 + $0x20] sm:$0xf]
        %v2560 = vld [vmem:[%s2550 + $0x24] sm:$0xf]
        %v2561 = vld [vmem:[%s2550 + $0x28] sm:$0xf]
        %v2562 = vld [vmem:[%s2550 + $0x2c] sm:$0xf]
        %v2563 = vld [vmem:[%s2550 + $0x30] sm:$0xf]
        %v2564 = vld [vmem:[%s2550 + $0x34] sm:$0xf]
        %v2565 = vld [vmem:[%s2550 + $0x38] sm:$0xf]
        %v2566 = vld [vmem:[%s2550 + $0x3c] sm:$0xf]
        %v2583 = vunpack.c.l.b16 %v2551
        %v2584 = vunpack.c.l.b16 %v2552
        %v2585 = vunpack.c.l.b16 %v2553
        %v2586 = vunpack.c.l.b16 %v2554
        %v2587 = vunpack.c.l.b16 %v2555
        %v2588 = vunpack.c.l.b16 %v2556
        %v2589 = vunpack.c.l.b16 %v2557
        %v2590 = vunpack.c.l.b16 %v2558
        %v2591 = vunpack.c.l.b16 %v2559
        %v2592 = vunpack.c.l.b16 %v2560
        %v2593 = vunpack.c.l.b16 %v2561
        %v2594 = vunpack.c.l.b16 %v2562
        %v2595 = vunpack.c.l.b16 %v2563
        %v2596 = vunpack.c.l.b16 %v2564
        %v2597 = vunpack.c.l.b16 %v2565
        %v2598 = vunpack.c.l.b16 %v2566
        %v2599 = vpack.c.b16 %v2584, %v2583
        %v2600 = vpack.c.b16 %v2586, %v2585
        %v2601 = vpack.c.b16 %v2588, %v2587
        %v2602 = vpack.c.b16 %v2590, %v2589
        %v2603 = vpack.c.b16 %v2592, %v2591
        %v2604 = vpack.c.b16 %v2594, %v2593
        %v2605 = vpack.c.b16 %v2596, %v2595
        %v2606 = vpack.c.b16 %v2598, %v2597
        %2615 = vmatprep.subr.bf16.mxu0 0
        %2616 = vmatpush1.bf16.msra.mxu0 %v2599
        %2617 = vmatprep.subr.bf16.mxu0 0
        %2618 = vmatpush1.bf16.msra.mxu0 %v2600
        %2619 = vmatprep.subr.bf16.mxu0 0
        %2620 = vmatpush1.bf16.msra.mxu0 %v2601
        %2621 = vmatprep.subr.bf16.mxu0 0
        %2622 = vmatpush1.bf16.msra.mxu0 %v2602
        %2623 = vmatprep.subr.bf16.mxu0 0
        %2624 = vmatpush1.bf16.msra.mxu0 %v2603
        %2625 = vmatprep.subr.bf16.mxu0 0
        %2626 = vmatpush1.bf16.msra.mxu0 %v2604
        %2627 = vmatprep.subr.bf16.mxu0 0
        %2628 = vmatpush1.bf16.msra.mxu0 %v2605
        %2629 = vmatprep.subr.bf16.mxu0 0
        %2630 = vmatpush1.bf16.msra.mxu0 %v2606
        %2631 = vmatprep.subr.bf16.mxu0 0
        %2632 = vmatpush1.bf16.msra.mxu0 0
        %2633 = vmatprep.subr.bf16.mxu0 0
        %2634 = vmatpush1.bf16.msra.mxu0 0
        %2635 = vmatprep.subr.bf16.mxu0 0
        %2636 = vmatpush1.bf16.msra.mxu0 0
        %2637 = vmatprep.subr.bf16.mxu0 0
        %2638 = vmatpush1.bf16.msra.mxu0 0
        %2639 = vmatprep.subr.bf16.mxu0 0
        %2640 = vmatpush1.bf16.msra.mxu0 0
        %2641 = vmatprep.subr.bf16.mxu0 0
        %2642 = vmatpush1.bf16.msra.mxu0 0
        %2643 = vmatprep.subr.bf16.mxu0 0
        %2644 = vmatpush1.bf16.msra.mxu0 0
        %2645 = vmatprep.subr.bf16.mxu0 0
        %2646 = vmatpush1.bf16.msra.mxu0 0
        %2647 = vmatprep.mubr.bf16.mxu0 0
        %2648 = vmatmul.mubr.bf16.gmra.mrb[0].mxu0 %v2534
        %v2649 = vpop.f32.mrb[0].mxu0
        %v2650 = vadd.f32 0.0, %v2649
        %v2651 = vpop.f32.mrb[0].mxu0
        %v2652 = vpop.f32.mrb[0].mxu0
        %v2653 = vadd.f32 0.0, %v2652
        %v2654 = vpop.f32.mrb[0].mxu0
        %2655 = vmatprep.mubr.bf16.mxu0 0
        %2656 = vmatmul.mubr.bf16.gmra.mrb[0].mxu0 %v2535
        %v2657 = vpop.f32.mrb[0].mxu0
        %v2658 = vadd.f32 0.0, %v2657
        %v2659 = vpop.f32.mrb[0].mxu0
        %v2660 = vpop.f32.mrb[0].mxu0
        %v2661 = vadd.f32 0.0, %v2660
        %v2662 = vpop.f32.mrb[0].mxu0
        %2663 = vmatprep.mubr.bf16.mxu0 0
        %2664 = vmatmul.mubr.bf16.gmra.mrb[0].mxu0 %v2536
        %v2665 = vpop.f32.mrb[0].mxu0
        %v2666 = vadd.f32 0.0, %v2665
        %v2667 = vpop.f32.mrb[0].mxu0
        %v2668 = vpop.f32.mrb[0].mxu0
        %v2669 = vadd.f32 0.0, %v2668
        %v2670 = vpop.f32.mrb[0].mxu0
        %2671 = vmatprep.mubr.bf16.mxu0 0
        %2672 = vmatmul.mubr.bf16.gmra.mrb[0].mxu0 %v2537
        %v2673 = vpop.f32.mrb[0].mxu0
        %v2674 = vadd.f32 0.0, %v2673
        %v2675 = vpop.f32.mrb[0].mxu0
        %v2676 = vpop.f32.mrb[0].mxu0
        %v2677 = vadd.f32 0.0, %v2676
        %v2678 = vpop.f32.mrb[0].mxu0
        %2679 = vmatprep.mubr.bf16.mxu0 0
        %2680 = vmatmul.mubr.bf16.gmra.mrb[0].mxu0 %v2538
        %v2681 = vpop.f32.mrb[0].mxu0
        %v2682 = vadd.f32 0.0, %v2681
        %v2683 = vpop.f32.mrb[0].mxu0
        %v2684 = vpop.f32.mrb[0].mxu0
        %v2685 = vadd.f32 0.0, %v2684
        %v2686 = vpop.f32.mrb[0].mxu0
        %2687 = vmatprep.mubr.bf16.mxu0 0
        %2688 = vmatmul.mubr.bf16.gmra.mrb[0].mxu0 %v2539
        %v2689 = vpop.f32.mrb[0].mxu0
        %v2690 = vadd.f32 0.0, %v2689
        %v2691 = vpop.f32.mrb[0].mxu0
        %v2692 = vpop.f32.mrb[0].mxu0
        %v2693 = vadd.f32 0.0, %v2692
        %v2694 = vpop.f32.mrb[0].mxu0
        %2695 = vmatprep.mubr.bf16.mxu0 0
        %2696 = vmatmul.mubr.bf16.gmra.mrb[0].mxu0 %v2540
        %v2697 = vpop.f32.mrb[0].mxu0
        %v2698 = vadd.f32 0.0, %v2697
        %v2699 = vpop.f32.mrb[0].mxu0
        %v2700 = vpop.f32.mrb[0].mxu0
        %v2701 = vadd.f32 0.0, %v2700
        %v2702 = vpop.f32.mrb[0].mxu0
        %2703 = vmatprep.mubr.bf16.mxu0 0
        %2704 = vmatmul.mubr.bf16.gmra.mrb[0].mxu0 %v2541
        %v2705 = vpop.f32.mrb[0].mxu0
        %v2706 = vadd.f32 0.0, %v2705
        %v2707 = vpop.f32.mrb[0].mxu0
        %v2708 = vpop.f32.mrb[0].mxu0
        %v2709 = vadd.f32 0.0, %v2708
        %v2710 = vpop.f32.mrb[0].mxu0
        %2711 = vmatprep.mubr.bf16.mxu0 0
        %2712 = vmatmul.mubr.bf16.gmra.mrb[0].mxu0 %v2542
        %v2713 = vpop.f32.mrb[0].mxu0
        %v2714 = vadd.f32 0.0, %v2713
        %v2715 = vpop.f32.mrb[0].mxu0
        %v2716 = vpop.f32.mrb[0].mxu0
        %v2717 = vadd.f32 0.0, %v2716
        %v2718 = vpop.f32.mrb[0].mxu0
        %2719 = vmatprep.mubr.bf16.mxu0 0
        %2720 = vmatmul.mubr.bf16.gmra.mrb[0].mxu0 %v2543
        %v2721 = vpop.f32.mrb[0].mxu0
        %v2722 = vadd.f32 0.0, %v2721
        %v2723 = vpop.f32.mrb[0].mxu0
        %v2724 = vpop.f32.mrb[0].mxu0
        %v2725 = vadd.f32 0.0, %v2724
        %v2726 = vpop.f32.mrb[0].mxu0
        %2727 = vmatprep.mubr.bf16.mxu0 0
        %2728 = vmatmul.mubr.bf16.gmra.mrb[0].mxu0 %v2544
        %v2729 = vpop.f32.mrb[0].mxu0
        %v2730 = vadd.f32 0.0, %v2729
        %v2731 = vpop.f32.mrb[0].mxu0
        %v2732 = vpop.f32.mrb[0].mxu0
        %v2733 = vadd.f32 0.0, %v2732
        %v2734 = vpop.f32.mrb[0].mxu0
        %2735 = vmatprep.mubr.bf16.mxu0 0
        %2736 = vmatmul.mubr.bf16.gmra.mrb[0].mxu0 %v2545
        %v2737 = vpop.f32.mrb[0].mxu0
        %v2738 = vadd.f32 0.0, %v2737
        %v2739 = vpop.f32.mrb[0].mxu0
        %v2740 = vpop.f32.mrb[0].mxu0
        %v2741 = vadd.f32 0.0, %v2740
        %v2742 = vpop.f32.mrb[0].mxu0
        %2743 = vmatprep.mubr.bf16.mxu0 0
        %2744 = vmatmul.mubr.bf16.gmra.mrb[0].mxu0 %v2546
        %v2745 = vpop.f32.mrb[0].mxu0
        %v2746 = vadd.f32 0.0, %v2745
        %v2747 = vpop.f32.mrb[0].mxu0
        %v2748 = vpop.f32.mrb[0].mxu0
        %v2749 = vadd.f32 0.0, %v2748
        %v2750 = vpop.f32.mrb[0].mxu0
        %2751 = vmatprep.mubr.bf16.mxu0 0
        %2752 = vmatmul.mubr.bf16.gmra.mrb[0].mxu0 %v2547
        %v2753 = vpop.f32.mrb[0].mxu0
        %v2754 = vadd.f32 0.0, %v2753
        %v2755 = vpop.f32.mrb[0].mxu0
        %v2756 = vpop.f32.mrb[0].mxu0
        %v2757 = vadd.f32 0.0, %v2756
        %v2758 = vpop.f32.mrb[0].mxu0
        %2759 = vmatprep.mubr.bf16.mxu0 0
        %2760 = vmatmul.mubr.bf16.gmra.mrb[0].mxu0 %v2548
        %v2761 = vpop.f32.mrb[0].mxu0
        %v2762 = vadd.f32 0.0, %v2761
        %v2763 = vpop.f32.mrb[0].mxu0
        %v2764 = vpop.f32.mrb[0].mxu0
        %v2765 = vadd.f32 0.0, %v2764
        %v2766 = vpop.f32.mrb[0].mxu0
        %2767 = vmatprep.mubr.bf16.mxu0 0
        %2768 = vmatmul.mubr.bf16.gmra.mrb[0].mxu0 %v2549
        %v2769 = vpop.f32.mrb[0].mxu0
        %v2770 = vadd.f32 0.0, %v2769
        %v2771 = vpop.f32.mrb[0].mxu0
        %v2772 = vpop.f32.mrb[0].mxu0
        %v2773 = vadd.f32 0.0, %v2772
        %v2774 = vpop.f32.mrb[0].mxu0
        %2775 = vdwg.mxu0
        %v2776 = vadd.f32 %v2469, %v2650
        %v2777 = vadd.f32 %v2470, %v2653
        %v2778 = vadd.f32 %v2471, %v2658
        %v2779 = vadd.f32 %v2472, %v2661
        %v2780 = vadd.f32 %v2473, %v2666
        %v2781 = vadd.f32 %v2474, %v2669
        %v2782 = vadd.f32 %v2475, %v2674
        %v2783 = vadd.f32 %v2476, %v2677
        %v2784 = vadd.f32 %v2477, %v2682
        %v2785 = vadd.f32 %v2478, %v2685
        %v2786 = vadd.f32 %v2479, %v2690
        %v2787 = vadd.f32 %v2480, %v2693
        %v2788 = vadd.f32 %v2481, %v2698
        %v2789 = vadd.f32 %v2482, %v2701
        %v2790 = vadd.f32 %v2483, %v2706
        %v2791 = vadd.f32 %v2484, %v2709
        %v2792 = vadd.f32 %v2485, %v2714
        %v2793 = vadd.f32 %v2486, %v2717
        %v2794 = vadd.f32 %v2487, %v2722
        %v2795 = vadd.f32 %v2488, %v2725
        %v2796 = vadd.f32 %v2489, %v2730
        %v2797 = vadd.f32 %v2490, %v2733
        %v2798 = vadd.f32 %v2491, %v2738
        %v2799 = vadd.f32 %v2492, %v2741
        %v2800 = vadd.f32 %v2493, %v2746
        %v2801 = vadd.f32 %v2494, %v2749
        %v2802 = vadd.f32 %v2495, %v2754
        %v2803 = vadd.f32 %v2496, %v2757
        %v2804 = vadd.f32 %v2497, %v2762
        %v2805 = vadd.f32 %v2498, %v2765
        %v2806 = vadd.f32 %v2499, %v2770
        %v2807 = vadd.f32 %v2500, %v2773
        %v2808 = vld [vmem:[%s2501 + $0x1] sm:$0xff]
        %v2809 = vld [vmem:[%s2501 + $0x9] sm:$0xff]
        %v2810 = vld [vmem:[%s2501 + $0x19] sm:$0xff]
        %v2811 = vld [vmem:[%s2501 + $0x21] sm:$0xff]
        %v2812 = vld [vmem:[%s2501 + $0x31] sm:$0xff]
        %v2813 = vld [vmem:[%s2501 + $0x39] sm:$0xff]
        %v2814 = vld [vmem:[%s2501 + $0x49] sm:$0xff]
        %v2815 = vld [vmem:[%s2501 + $0x51] sm:$0xff]
        %v2816 = vld [vmem:[%s2501 + $0x61] sm:$0xff]
        %v2817 = vld [vmem:[%s2501 + $0x69] sm:$0xff]
        %v2818 = vld [vmem:[%s2501 + $0x79] sm:$0xff]
        %v2819 = vld [vmem:[%s2501 + $0x81] sm:$0xff]
        %v2820 = vld [vmem:[%s2501 + $0x91] sm:$0xff]
        %v2821 = vld [vmem:[%s2501 + $0x99] sm:$0xff]
        %v2822 = vld [vmem:[%s2501 + $0xa9] sm:$0xff]
        %v2823 = vld [vmem:[%s2501 + $0xb1] sm:$0xff]
        %v2824 = vld [vmem:[%s2501 + $0xc1] sm:$0xff]
        %v2825 = vld [vmem:[%s2501 + $0xc9] sm:$0xff]
        %v2826 = vld [vmem:[%s2501 + $0xd9] sm:$0xff]
        %v2827 = vld [vmem:[%s2501 + $0xe1] sm:$0xff]
        %v2828 = vld [vmem:[%s2501 + $0xf1] sm:$0xff]
        %v2829 = vld [vmem:[%s2501 + $0xf9] sm:$0xff]
        %v2830 = vld [vmem:[%s2501 + $0x109] sm:$0xff]
        %v2831 = vld [vmem:[%s2501 + $0x111] sm:$0xff]
        %v2832 = vld [vmem:[%s2501 + $0x121] sm:$0xff]
        %v2833 = vld [vmem:[%s2501 + $0x129] sm:$0xff]
        %v2834 = vld [vmem:[%s2501 + $0x139] sm:$0xff]
        %v2835 = vld [vmem:[%s2501 + $0x141] sm:$0xff]
        %v2836 = vld [vmem:[%s2501 + $0x151] sm:$0xff]
        %v2837 = vld [vmem:[%s2501 + $0x159] sm:$0xff]
        %v2838 = vld [vmem:[%s2501 + $0x169] sm:$0xff]
        %v2839 = vld [vmem:[%s2501 + $0x171] sm:$0xff]
        %v2840 = vpack.c.bf16 %v2809, %v2808
        %v2841 = vpack.c.bf16 %v2811, %v2810
        %v2842 = vpack.c.bf16 %v2813, %v2812
        %v2843 = vpack.c.bf16 %v2815, %v2814
        %v2844 = vpack.c.bf16 %v2817, %v2816
        %v2845 = vpack.c.bf16 %v2819, %v2818
        %v2846 = vpack.c.bf16 %v2821, %v2820
        %v2847 = vpack.c.bf16 %v2823, %v2822
        %v2848 = vpack.c.bf16 %v2825, %v2824
        %v2849 = vpack.c.bf16 %v2827, %v2826
        %v2850 = vpack.c.bf16 %v2829, %v2828
        %v2851 = vpack.c.bf16 %v2831, %v2830
        %v2852 = vpack.c.bf16 %v2833, %v2832
        %v2853 = vpack.c.bf16 %v2835, %v2834
        %v2854 = vpack.c.bf16 %v2837, %v2836
        %v2855 = vpack.c.bf16 %v2839, %v2838
        %s2856 = scalar_lea.vmem [#allocation8], 448
        %v2857 = vld [vmem:[%s2856] sm:$0xf]
        %v2858 = vld [vmem:[%s2856 + $0x4] sm:$0xf]
        %v2859 = vld [vmem:[%s2856 + $0x8] sm:$0xf]
        %v2860 = vld [vmem:[%s2856 + $0xc] sm:$0xf]
        %v2861 = vld [vmem:[%s2856 + $0x10] sm:$0xf]
        %v2862 = vld [vmem:[%s2856 + $0x14] sm:$0xf]
        %v2863 = vld [vmem:[%s2856 + $0x18] sm:$0xf]
        %v2864 = vld [vmem:[%s2856 + $0x1c] sm:$0xf]
        %v2865 = vld [vmem:[%s2856 + $0x20] sm:$0xf]
        %v2866 = vld [vmem:[%s2856 + $0x24] sm:$0xf]
        %v2867 = vld [vmem:[%s2856 + $0x28] sm:$0xf]
        %v2868 = vld [vmem:[%s2856 + $0x2c] sm:$0xf]
        %v2869 = vld [vmem:[%s2856 + $0x30] sm:$0xf]
        %v2870 = vld [vmem:[%s2856 + $0x34] sm:$0xf]
        %v2871 = vld [vmem:[%s2856 + $0x38] sm:$0xf]
        %v2872 = vld [vmem:[%s2856 + $0x3c] sm:$0xf]
        %v2889 = vunpack.c.l.b16 %v2857
        %v2890 = vunpack.c.l.b16 %v2858
        %v2891 = vunpack.c.l.b16 %v2859
        %v2892 = vunpack.c.l.b16 %v2860
        %v2893 = vunpack.c.l.b16 %v2861
        %v2894 = vunpack.c.l.b16 %v2862
        %v2895 = vunpack.c.l.b16 %v2863
        %v2896 = vunpack.c.l.b16 %v2864
        %v2897 = vunpack.c.l.b16 %v2865
        %v2898 = vunpack.c.l.b16 %v2866
        %v2899 = vunpack.c.l.b16 %v2867
        %v2900 = vunpack.c.l.b16 %v2868
        %v2901 = vunpack.c.l.b16 %v2869
        %v2902 = vunpack.c.l.b16 %v2870
        %v2903 = vunpack.c.l.b16 %v2871
        %v2904 = vunpack.c.l.b16 %v2872
        %v2905 = vpack.c.b16 %v2890, %v2889
        %v2906 = vpack.c.b16 %v2892, %v2891
        %v2907 = vpack.c.b16 %v2894, %v2893
        %v2908 = vpack.c.b16 %v2896, %v2895
        %v2909 = vpack.c.b16 %v2898, %v2897
        %v2910 = vpack.c.b16 %v2900, %v2899
        %v2911 = vpack.c.b16 %v2902, %v2901
        %v2912 = vpack.c.b16 %v2904, %v2903
        %2921 = vmatprep.subr.bf16.mxu0 0
        %2922 = vmatpush1.bf16.msra.mxu0 %v2905
        %2923 = vmatprep.subr.bf16.mxu0 0
        %2924 = vmatpush1.bf16.msra.mxu0 %v2906
        %2925 = vmatprep.subr.bf16.mxu0 0
        %2926 = vmatpush1.bf16.msra.mxu0 %v2907
        %2927 = vmatprep.subr.bf16.mxu0 0
        %2928 = vmatpush1.bf16.msra.mxu0 %v2908
        %2929 = vmatprep.subr.bf16.mxu0 0
        %2930 = vmatpush1.bf16.msra.mxu0 %v2909
        %2931 = vmatprep.subr.bf16.mxu0 0
        %2932 = vmatpush1.bf16.msra.mxu0 %v2910
        %2933 = vmatprep.subr.bf16.mxu0 0
        %2934 = vmatpush1.bf16.msra.mxu0 %v2911
        %2935 = vmatprep.subr.bf16.mxu0 0
        %2936 = vmatpush1.bf16.msra.mxu0 %v2912
        %2937 = vmatprep.subr.bf16.mxu0 0
        %2938 = vmatpush1.bf16.msra.mxu0 0
        %2939 = vmatprep.subr.bf16.mxu0 0
        %2940 = vmatpush1.bf16.msra.mxu0 0
        %2941 = vmatprep.subr.bf16.mxu0 0
        %2942 = vmatpush1.bf16.msra.mxu0 0
        %2943 = vmatprep.subr.bf16.mxu0 0
        %2944 = vmatpush1.bf16.msra.mxu0 0
        %2945 = vmatprep.subr.bf16.mxu0 0
        %2946 = vmatpush1.bf16.msra.mxu0 0
        %2947 = vmatprep.subr.bf16.mxu0 0
        %2948 = vmatpush1.bf16.msra.mxu0 0
        %2949 = vmatprep.subr.bf16.mxu0 0
        %2950 = vmatpush1.bf16.msra.mxu0 0
        %2951 = vmatprep.subr.bf16.mxu0 0
        %2952 = vmatpush1.bf16.msra.mxu0 0
        %2953 = vmatprep.mubr.bf16.mxu0 0
        %2954 = vmatmul.mubr.bf16.gmra.mrb[0].mxu0 %v2840
        %v2955 = vpop.f32.mrb[0].mxu0
        %v2956 = vadd.f32 0.0, %v2955
        %v2957 = vpop.f32.mrb[0].mxu0
        %v2958 = vpop.f32.mrb[0].mxu0
        %v2959 = vadd.f32 0.0, %v2958
        %v2960 = vpop.f32.mrb[0].mxu0
        %2961 = vmatprep.mubr.bf16.mxu0 0
        %2962 = vmatmul.mubr.bf16.gmra.mrb[0].mxu0 %v2841
        %v2963 = vpop.f32.mrb[0].mxu0
        %v2964 = vadd.f32 0.0, %v2963
        %v2965 = vpop.f32.mrb[0].mxu0
        %v2966 = vpop.f32.mrb[0].mxu0
        %v2967 = vadd.f32 0.0, %v2966
        %v2968 = vpop.f32.mrb[0].mxu0
        %2969 = vmatprep.mubr.bf16.mxu0 0
        %2970 = vmatmul.mubr.bf16.gmra.mrb[0].mxu0 %v2842
        %v2971 = vpop.f32.mrb[0].mxu0
        %v2972 = vadd.f32 0.0, %v2971
        %v2973 = vpop.f32.mrb[0].mxu0
        %v2974 = vpop.f32.mrb[0].mxu0
        %v2975 = vadd.f32 0.0, %v2974
        %v2976 = vpop.f32.mrb[0].mxu0
        %2977 = vmatprep.mubr.bf16.mxu0 0
        %2978 = vmatmul.mubr.bf16.gmra.mrb[0].mxu0 %v2843
        %v2979 = vpop.f32.mrb[0].mxu0
        %v2980 = vadd.f32 0.0, %v2979
        %v2981 = vpop.f32.mrb[0].mxu0
        %v2982 = vpop.f32.mrb[0].mxu0
        %v2983 = vadd.f32 0.0, %v2982
        %v2984 = vpop.f32.mrb[0].mxu0
        %2985 = vmatprep.mubr.bf16.mxu0 0
        %2986 = vmatmul.mubr.bf16.gmra.mrb[0].mxu0 %v2844
        %v2987 = vpop.f32.mrb[0].mxu0
        %v2988 = vadd.f32 0.0, %v2987
        %v2989 = vpop.f32.mrb[0].mxu0
        %v2990 = vpop.f32.mrb[0].mxu0
        %v2991 = vadd.f32 0.0, %v2990
        %v2992 = vpop.f32.mrb[0].mxu0
        %2993 = vmatprep.mubr.bf16.mxu0 0
        %2994 = vmatmul.mubr.bf16.gmra.mrb[0].mxu0 %v2845
        %v2995 = vpop.f32.mrb[0].mxu0
        %v2996 = vadd.f32 0.0, %v2995
        %v2997 = vpop.f32.mrb[0].mxu0
        %v2998 = vpop.f32.mrb[0].mxu0
        %v2999 = vadd.f32 0.0, %v2998
        %v3000 = vpop.f32.mrb[0].mxu0
        %3001 = vmatprep.mubr.bf16.mxu0 0
        %3002 = vmatmul.mubr.bf16.gmra.mrb[0].mxu0 %v2846
        %v3003 = vpop.f32.mrb[0].mxu0
        %v3004 = vadd.f32 0.0, %v3003
        %v3005 = vpop.f32.mrb[0].mxu0
        %v3006 = vpop.f32.mrb[0].mxu0
        %v3007 = vadd.f32 0.0, %v3006
        %v3008 = vpop.f32.mrb[0].mxu0
        %3009 = vmatprep.mubr.bf16.mxu0 0
        %3010 = vmatmul.mubr.bf16.gmra.mrb[0].mxu0 %v2847
        %v3011 = vpop.f32.mrb[0].mxu0
        %v3012 = vadd.f32 0.0, %v3011
        %v3013 = vpop.f32.mrb[0].mxu0
        %v3014 = vpop.f32.mrb[0].mxu0
        %v3015 = vadd.f32 0.0, %v3014
        %v3016 = vpop.f32.mrb[0].mxu0
        %3017 = vmatprep.mubr.bf16.mxu0 0
        %3018 = vmatmul.mubr.bf16.gmra.mrb[0].mxu0 %v2848
        %v3019 = vpop.f32.mrb[0].mxu0
        %v3020 = vadd.f32 0.0, %v3019
        %v3021 = vpop.f32.mrb[0].mxu0
        %v3022 = vpop.f32.mrb[0].mxu0
        %v3023 = vadd.f32 0.0, %v3022
        %v3024 = vpop.f32.mrb[0].mxu0
        %3025 = vmatprep.mubr.bf16.mxu0 0
        %3026 = vmatmul.mubr.bf16.gmra.mrb[0].mxu0 %v2849
        %v3027 = vpop.f32.mrb[0].mxu0
        %v3028 = vadd.f32 0.0, %v3027
        %v3029 = vpop.f32.mrb[0].mxu0
        %v3030 = vpop.f32.mrb[0].mxu0
        %v3031 = vadd.f32 0.0, %v3030
        %v3032 = vpop.f32.mrb[0].mxu0
        %3033 = vmatprep.mubr.bf16.mxu0 0
        %3034 = vmatmul.mubr.bf16.gmra.mrb[0].mxu0 %v2850
        %v3035 = vpop.f32.mrb[0].mxu0
        %v3036 = vadd.f32 0.0, %v3035
        %v3037 = vpop.f32.mrb[0].mxu0
        %v3038 = vpop.f32.mrb[0].mxu0
        %v3039 = vadd.f32 0.0, %v3038
        %v3040 = vpop.f32.mrb[0].mxu0
        %3041 = vmatprep.mubr.bf16.mxu0 0
        %3042 = vmatmul.mubr.bf16.gmra.mrb[0].mxu0 %v2851
        %v3043 = vpop.f32.mrb[0].mxu0
        %v3044 = vadd.f32 0.0, %v3043
        %v3045 = vpop.f32.mrb[0].mxu0
        %v3046 = vpop.f32.mrb[0].mxu0
        %v3047 = vadd.f32 0.0, %v3046
        %v3048 = vpop.f32.mrb[0].mxu0
        %3049 = vmatprep.mubr.bf16.mxu0 0
        %3050 = vmatmul.mubr.bf16.gmra.mrb[0].mxu0 %v2852
        %v3051 = vpop.f32.mrb[0].mxu0
        %v3052 = vadd.f32 0.0, %v3051
        %v3053 = vpop.f32.mrb[0].mxu0
        %v3054 = vpop.f32.mrb[0].mxu0
        %v3055 = vadd.f32 0.0, %v3054
        %v3056 = vpop.f32.mrb[0].mxu0
        %3057 = vmatprep.mubr.bf16.mxu0 0
        %3058 = vmatmul.mubr.bf16.gmra.mrb[0].mxu0 %v2853
        %v3059 = vpop.f32.mrb[0].mxu0
        %v3060 = vadd.f32 0.0, %v3059
        %v3061 = vpop.f32.mrb[0].mxu0
        %v3062 = vpop.f32.mrb[0].mxu0
        %v3063 = vadd.f32 0.0, %v3062
        %v3064 = vpop.f32.mrb[0].mxu0
        %3065 = vmatprep.mubr.bf16.mxu0 0
        %3066 = vmatmul.mubr.bf16.gmra.mrb[0].mxu0 %v2854
        %v3067 = vpop.f32.mrb[0].mxu0
        %v3068 = vadd.f32 0.0, %v3067
        %v3069 = vpop.f32.mrb[0].mxu0
        %v3070 = vpop.f32.mrb[0].mxu0
        %v3071 = vadd.f32 0.0, %v3070
        %v3072 = vpop.f32.mrb[0].mxu0
        %3073 = vmatprep.mubr.bf16.mxu0 0
        %3074 = vmatmul.mubr.bf16.gmra.mrb[0].mxu0 %v2855
        %v3075 = vpop.f32.mrb[0].mxu0
        %v3076 = vadd.f32 0.0, %v3075
        %v3077 = vpop.f32.mrb[0].mxu0
        %v3078 = vpop.f32.mrb[0].mxu0
        %v3079 = vadd.f32 0.0, %v3078
        %v3080 = vpop.f32.mrb[0].mxu0
        %3081 = vdwg.mxu0
        %v3082 = vadd.f32 %v2776, %v2956
        %v3083 = vadd.f32 %v2777, %v2959
        %v3084 = vadd.f32 %v2778, %v2964
        %v3085 = vadd.f32 %v2779, %v2967
        %v3086 = vadd.f32 %v2780, %v2972
        %v3087 = vadd.f32 %v2781, %v2975
        %v3088 = vadd.f32 %v2782, %v2980
        %v3089 = vadd.f32 %v2783, %v2983
        %v3090 = vadd.f32 %v2784, %v2988
        %v3091 = vadd.f32 %v2785, %v2991
        %v3092 = vadd.f32 %v2786, %v2996
        %v3093 = vadd.f32 %v2787, %v2999
        %v3094 = vadd.f32 %v2788, %v3004
        %v3095 = vadd.f32 %v2789, %v3007
        %v3096 = vadd.f32 %v2790, %v3012
        %v3097 = vadd.f32 %v2791, %v3015
        %v3098 = vadd.f32 %v2792, %v3020
        %v3099 = vadd.f32 %v2793, %v3023
        %v3100 = vadd.f32 %v2794, %v3028
        %v3101 = vadd.f32 %v2795, %v3031
        %v3102 = vadd.f32 %v2796, %v3036
        %v3103 = vadd.f32 %v2797, %v3039
        %v3104 = vadd.f32 %v2798, %v3044
        %v3105 = vadd.f32 %v2799, %v3047
        %v3106 = vadd.f32 %v2800, %v3052
        %v3107 = vadd.f32 %v2801, %v3055
        %v3108 = vadd.f32 %v2802, %v3060
        %v3109 = vadd.f32 %v2803, %v3063
        %v3110 = vadd.f32 %v2804, %v3068
        %v3111 = vadd.f32 %v2805, %v3071
        %v3112 = vadd.f32 %v2806, %v3076
        %v3113 = vadd.f32 %v2807, %v3079
        %v3114 = vld [vmem:[%s2501 + $0x2] sm:$0xff]
        %v3115 = vld [vmem:[%s2501 + $0xa] sm:$0xff]
        %v3116 = vld [vmem:[%s2501 + $0x1a] sm:$0xff]
        %v3117 = vld [vmem:[%s2501 + $0x22] sm:$0xff]
        %v3118 = vld [vmem:[%s2501 + $0x32] sm:$0xff]
        %v3119 = vld [vmem:[%s2501 + $0x3a] sm:$0xff]
        %v3120 = vld [vmem:[%s2501 + $0x4a] sm:$0xff]
        %v3121 = vld [vmem:[%s2501 + $0x52] sm:$0xff]
        %v3122 = vld [vmem:[%s2501 + $0x62] sm:$0xff]
        %v3123 = vld [vmem:[%s2501 + $0x6a] sm:$0xff]
        %v3124 = vld [vmem:[%s2501 + $0x7a] sm:$0xff]
        %v3125 = vld [vmem:[%s2501 + $0x82] sm:$0xff]
        %v3126 = vld [vmem:[%s2501 + $0x92] sm:$0xff]
        %v3127 = vld [vmem:[%s2501 + $0x9a] sm:$0xff]
        %v3128 = vld [vmem:[%s2501 + $0xaa] sm:$0xff]
        %v3129 = vld [vmem:[%s2501 + $0xb2] sm:$0xff]
        %v3130 = vld [vmem:[%s2501 + $0xc2] sm:$0xff]
        %v3131 = vld [vmem:[%s2501 + $0xca] sm:$0xff]
        %v3132 = vld [vmem:[%s2501 + $0xda] sm:$0xff]
        %v3133 = vld [vmem:[%s2501 + $0xe2] sm:$0xff]
        %v3134 = vld [vmem:[%s2501 + $0xf2] sm:$0xff]
        %v3135 = vld [vmem:[%s2501 + $0xfa] sm:$0xff]
        %v3136 = vld [vmem:[%s2501 + $0x10a] sm:$0xff]
        %v3137 = vld [vmem:[%s2501 + $0x112] sm:$0xff]
        %v3138 = vld [vmem:[%s2501 + $0x122] sm:$0xff]
        %v3139 = vld [vmem:[%s2501 + $0x12a] sm:$0xff]
        %v3140 = vld [vmem:[%s2501 + $0x13a] sm:$0xff]
        %v3141 = vld [vmem:[%s2501 + $0x142] sm:$0xff]
        %v3142 = vld [vmem:[%s2501 + $0x152] sm:$0xff]
        %v3143 = vld [vmem:[%s2501 + $0x15a] sm:$0xff]
        %v3144 = vld [vmem:[%s2501 + $0x16a] sm:$0xff]
        %v3145 = vld [vmem:[%s2501 + $0x172] sm:$0xff]
        %v3146 = vpack.c.bf16 %v3115, %v3114
        %v3147 = vpack.c.bf16 %v3117, %v3116
        %v3148 = vpack.c.bf16 %v3119, %v3118
        %v3149 = vpack.c.bf16 %v3121, %v3120
        %v3150 = vpack.c.bf16 %v3123, %v3122
        %v3151 = vpack.c.bf16 %v3125, %v3124
        %v3152 = vpack.c.bf16 %v3127, %v3126
        %v3153 = vpack.c.bf16 %v3129, %v3128
        %v3154 = vpack.c.bf16 %v3131, %v3130
        %v3155 = vpack.c.bf16 %v3133, %v3132
        %v3156 = vpack.c.bf16 %v3135, %v3134
        %v3157 = vpack.c.bf16 %v3137, %v3136
        %v3158 = vpack.c.bf16 %v3139, %v3138
        %v3159 = vpack.c.bf16 %v3141, %v3140
        %v3160 = vpack.c.bf16 %v3143, %v3142
        %v3161 = vpack.c.bf16 %v3145, %v3144
        %s3162 = scalar_lea.vmem [#allocation8], 512
        %v3163 = vld [vmem:[%s3162] sm:$0xf]
        %v3164 = vld [vmem:[%s3162 + $0x4] sm:$0xf]
        %v3165 = vld [vmem:[%s3162 + $0x8] sm:$0xf]
        %v3166 = vld [vmem:[%s3162 + $0xc] sm:$0xf]
        %v3167 = vld [vmem:[%s3162 + $0x10] sm:$0xf]
        %v3168 = vld [vmem:[%s3162 + $0x14] sm:$0xf]
        %v3169 = vld [vmem:[%s3162 + $0x18] sm:$0xf]
        %v3170 = vld [vmem:[%s3162 + $0x1c] sm:$0xf]
        %v3171 = vld [vmem:[%s3162 + $0x20] sm:$0xf]
        %v3172 = vld [vmem:[%s3162 + $0x24] sm:$0xf]
        %v3173 = vld [vmem:[%s3162 + $0x28] sm:$0xf]
        %v3174 = vld [vmem:[%s3162 + $0x2c] sm:$0xf]
        %v3175 = vld [vmem:[%s3162 + $0x30] sm:$0xf]
        %v3176 = vld [vmem:[%s3162 + $0x34] sm:$0xf]
        %v3177 = vld [vmem:[%s3162 + $0x38] sm:$0xf]
        %v3178 = vld [vmem:[%s3162 + $0x3c] sm:$0xf]
        %v3195 = vunpack.c.l.b16 %v3163
        %v3196 = vunpack.c.l.b16 %v3164
        %v3197 = vunpack.c.l.b16 %v3165
        %v3198 = vunpack.c.l.b16 %v3166
        %v3199 = vunpack.c.l.b16 %v3167
        %v3200 = vunpack.c.l.b16 %v3168
        %v3201 = vunpack.c.l.b16 %v3169
        %v3202 = vunpack.c.l.b16 %v3170
        %v3203 = vunpack.c.l.b16 %v3171
        %v3204 = vunpack.c.l.b16 %v3172
        %v3205 = vunpack.c.l.b16 %v3173
        %v3206 = vunpack.c.l.b16 %v3174
        %v3207 = vunpack.c.l.b16 %v3175
        %v3208 = vunpack.c.l.b16 %v3176
        %v3209 = vunpack.c.l.b16 %v3177
        %v3210 = vunpack.c.l.b16 %v3178
        %v3211 = vpack.c.b16 %v3196, %v3195
        %v3212 = vpack.c.b16 %v3198, %v3197
        %v3213 = vpack.c.b16 %v3200, %v3199
        %v3214 = vpack.c.b16 %v3202, %v3201
        %v3215 = vpack.c.b16 %v3204, %v3203
        %v3216 = vpack.c.b16 %v3206, %v3205
        %v3217 = vpack.c.b16 %v3208, %v3207
        %v3218 = vpack.c.b16 %v3210, %v3209
        %3227 = vmatprep.subr.bf16.mxu0 0
        %3228 = vmatpush1.bf16.msra.mxu0 %v3211
        %3229 = vmatprep.subr.bf16.mxu0 0
        %3230 = vmatpush1.bf16.msra.mxu0 %v3212
        %3231 = vmatprep.subr.bf16.mxu0 0
        %3232 = vmatpush1.bf16.msra.mxu0 %v3213
        %3233 = vmatprep.subr.bf16.mxu0 0
        %3234 = vmatpush1.bf16.msra.mxu0 %v3214
        %3235 = vmatprep.subr.bf16.mxu0 0
        %3236 = vmatpush1.bf16.msra.mxu0 %v3215
        %3237 = vmatprep.subr.bf16.mxu0 0
        %3238 = vmatpush1.bf16.msra.mxu0 %v3216
        %3239 = vmatprep.subr.bf16.mxu0 0
        %3240 = vmatpush1.bf16.msra.mxu0 %v3217
        %3241 = vmatprep.subr.bf16.mxu0 0
        %3242 = vmatpush1.bf16.msra.mxu0 %v3218
        %3243 = vmatprep.subr.bf16.mxu0 0
        %3244 = vmatpush1.bf16.msra.mxu0 0
        %3245 = vmatprep.subr.bf16.mxu0 0
        %3246 = vmatpush1.bf16.msra.mxu0 0
        %3247 = vmatprep.subr.bf16.mxu0 0
        %3248 = vmatpush1.bf16.msra.mxu0 0
        %3249 = vmatprep.subr.bf16.mxu0 0
        %3250 = vmatpush1.bf16.msra.mxu0 0
        %3251 = vmatprep.subr.bf16.mxu0 0
        %3252 = vmatpush1.bf16.msra.mxu0 0
        %3253 = vmatprep.subr.bf16.mxu0 0
        %3254 = vmatpush1.bf16.msra.mxu0 0
        %3255 = vmatprep.subr.bf16.mxu0 0
        %3256 = vmatpush1.bf16.msra.mxu0 0
        %3257 = vmatprep.subr.bf16.mxu0 0
        %3258 = vmatpush1.bf16.msra.mxu0 0
        %3259 = vmatprep.mubr.bf16.mxu0 0
        %3260 = vmatmul.mubr.bf16.gmra.mrb[0].mxu0 %v3146
        %v3261 = vpop.f32.mrb[0].mxu0
        %v3262 = vadd.f32 0.0, %v3261
        %v3263 = vpop.f32.mrb[0].mxu0
        %v3264 = vpop.f32.mrb[0].mxu0
        %v3265 = vadd.f32 0.0, %v3264
        %v3266 = vpop.f32.mrb[0].mxu0
        %3267 = vmatprep.mubr.bf16.mxu0 0
        %3268 = vmatmul.mubr.bf16.gmra.mrb[0].mxu0 %v3147
        %v3269 = vpop.f32.mrb[0].mxu0
        %v3270 = vadd.f32 0.0, %v3269
        %v3271 = vpop.f32.mrb[0].mxu0
        %v3272 = vpop.f32.mrb[0].mxu0
        %v3273 = vadd.f32 0.0, %v3272
        %v3274 = vpop.f32.mrb[0].mxu0
        %3275 = vmatprep.mubr.bf16.mxu0 0
        %3276 = vmatmul.mubr.bf16.gmra.mrb[0].mxu0 %v3148
        %v3277 = vpop.f32.mrb[0].mxu0
        %v3278 = vadd.f32 0.0, %v3277
        %v3279 = vpop.f32.mrb[0].mxu0
        %v3280 = vpop.f32.mrb[0].mxu0
        %v3281 = vadd.f32 0.0, %v3280
        %v3282 = vpop.f32.mrb[0].mxu0
        %3283 = vmatprep.mubr.bf16.mxu0 0
        %3284 = vmatmul.mubr.bf16.gmra.mrb[0].mxu0 %v3149
        %v3285 = vpop.f32.mrb[0].mxu0
        %v3286 = vadd.f32 0.0, %v3285
        %v3287 = vpop.f32.mrb[0].mxu0
        %v3288 = vpop.f32.mrb[0].mxu0
        %v3289 = vadd.f32 0.0, %v3288
        %v3290 = vpop.f32.mrb[0].mxu0
        %3291 = vmatprep.mubr.bf16.mxu0 0
        %3292 = vmatmul.mubr.bf16.gmra.mrb[0].mxu0 %v3150
        %v3293 = vpop.f32.mrb[0].mxu0
        %v3294 = vadd.f32 0.0, %v3293
        %v3295 = vpop.f32.mrb[0].mxu0
        %v3296 = vpop.f32.mrb[0].mxu0
        %v3297 = vadd.f32 0.0, %v3296
        %v3298 = vpop.f32.mrb[0].mxu0
        %3299 = vmatprep.mubr.bf16.mxu0 0
        %3300 = vmatmul.mubr.bf16.gmra.mrb[0].mxu0 %v3151
        %v3301 = vpop.f32.mrb[0].mxu0
        %v3302 = vadd.f32 0.0, %v3301
        %v3303 = vpop.f32.mrb[0].mxu0
        %v3304 = vpop.f32.mrb[0].mxu0
        %v3305 = vadd.f32 0.0, %v3304
        %v3306 = vpop.f32.mrb[0].mxu0
        %3307 = vmatprep.mubr.bf16.mxu0 0
        %3308 = vmatmul.mubr.bf16.gmra.mrb[0].mxu0 %v3152
        %v3309 = vpop.f32.mrb[0].mxu0
        %v3310 = vadd.f32 0.0, %v3309
        %v3311 = vpop.f32.mrb[0].mxu0
        %v3312 = vpop.f32.mrb[0].mxu0
        %v3313 = vadd.f32 0.0, %v3312
        %v3314 = vpop.f32.mrb[0].mxu0
        %3315 = vmatprep.mubr.bf16.mxu0 0
        %3316 = vmatmul.mubr.bf16.gmra.mrb[0].mxu0 %v3153
        %v3317 = vpop.f32.mrb[0].mxu0
        %v3318 = vadd.f32 0.0, %v3317
        %v3319 = vpop.f32.mrb[0].mxu0
        %v3320 = vpop.f32.mrb[0].mxu0
        %v3321 = vadd.f32 0.0, %v3320
        %v3322 = vpop.f32.mrb[0].mxu0
        %3323 = vmatprep.mubr.bf16.mxu0 0
        %3324 = vmatmul.mubr.bf16.gmra.mrb[0].mxu0 %v3154
        %v3325 = vpop.f32.mrb[0].mxu0
        %v3326 = vadd.f32 0.0, %v3325
        %v3327 = vpop.f32.mrb[0].mxu0
        %v3328 = vpop.f32.mrb[0].mxu0
        %v3329 = vadd.f32 0.0, %v3328
        %v3330 = vpop.f32.mrb[0].mxu0
        %3331 = vmatprep.mubr.bf16.mxu0 0
        %3332 = vmatmul.mubr.bf16.gmra.mrb[0].mxu0 %v3155
        %v3333 = vpop.f32.mrb[0].mxu0
        %v3334 = vadd.f32 0.0, %v3333
        %v3335 = vpop.f32.mrb[0].mxu0
        %v3336 = vpop.f32.mrb[0].mxu0
        %v3337 = vadd.f32 0.0, %v3336
        %v3338 = vpop.f32.mrb[0].mxu0
        %3339 = vmatprep.mubr.bf16.mxu0 0
        %3340 = vmatmul.mubr.bf16.gmra.mrb[0].mxu0 %v3156
        %v3341 = vpop.f32.mrb[0].mxu0
        %v3342 = vadd.f32 0.0, %v3341
        %v3343 = vpop.f32.mrb[0].mxu0
        %v3344 = vpop.f32.mrb[0].mxu0
        %v3345 = vadd.f32 0.0, %v3344
        %v3346 = vpop.f32.mrb[0].mxu0
        %3347 = vmatprep.mubr.bf16.mxu0 0
        %3348 = vmatmul.mubr.bf16.gmra.mrb[0].mxu0 %v3157
        %v3349 = vpop.f32.mrb[0].mxu0
        %v3350 = vadd.f32 0.0, %v3349
        %v3351 = vpop.f32.mrb[0].mxu0
        %v3352 = vpop.f32.mrb[0].mxu0
        %v3353 = vadd.f32 0.0, %v3352
        %v3354 = vpop.f32.mrb[0].mxu0
        %3355 = vmatprep.mubr.bf16.mxu0 0
        %3356 = vmatmul.mubr.bf16.gmra.mrb[0].mxu0 %v3158
        %v3357 = vpop.f32.mrb[0].mxu0
        %v3358 = vadd.f32 0.0, %v3357
        %v3359 = vpop.f32.mrb[0].mxu0
        %v3360 = vpop.f32.mrb[0].mxu0
        %v3361 = vadd.f32 0.0, %v3360
        %v3362 = vpop.f32.mrb[0].mxu0
        %3363 = vmatprep.mubr.bf16.mxu0 0
        %3364 = vmatmul.mubr.bf16.gmra.mrb[0].mxu0 %v3159
        %v3365 = vpop.f32.mrb[0].mxu0
        %v3366 = vadd.f32 0.0, %v3365
        %v3367 = vpop.f32.mrb[0].mxu0
        %v3368 = vpop.f32.mrb[0].mxu0
        %v3369 = vadd.f32 0.0, %v3368
        %v3370 = vpop.f32.mrb[0].mxu0
        %3371 = vmatprep.mubr.bf16.mxu0 0
        %3372 = vmatmul.mubr.bf16.gmra.mrb[0].mxu0 %v3160
        %v3373 = vpop.f32.mrb[0].mxu0
        %v3374 = vadd.f32 0.0, %v3373
        %v3375 = vpop.f32.mrb[0].mxu0
        %v3376 = vpop.f32.mrb[0].mxu0
        %v3377 = vadd.f32 0.0, %v3376
        %v3378 = vpop.f32.mrb[0].mxu0
        %3379 = vmatprep.mubr.bf16.mxu0 0
        %3380 = vmatmul.mubr.bf16.gmra.mrb[0].mxu0 %v3161
        %v3381 = vpop.f32.mrb[0].mxu0
        %v3382 = vadd.f32 0.0, %v3381
        %v3383 = vpop.f32.mrb[0].mxu0
        %v3384 = vpop.f32.mrb[0].mxu0
        %v3385 = vadd.f32 0.0, %v3384
        %v3386 = vpop.f32.mrb[0].mxu0
        %3387 = vdwg.mxu0
        %v3388 = vadd.f32 %v3082, %v3262
        %v3389 = vadd.f32 %v3083, %v3265
        %v3390 = vadd.f32 %v3084, %v3270
        %v3391 = vadd.f32 %v3085, %v3273
        %v3392 = vadd.f32 %v3086, %v3278
        %v3393 = vadd.f32 %v3087, %v3281
        %v3394 = vadd.f32 %v3088, %v3286
        %v3395 = vadd.f32 %v3089, %v3289
        %v3396 = vadd.f32 %v3090, %v3294
        %v3397 = vadd.f32 %v3091, %v3297
        %v3398 = vadd.f32 %v3092, %v3302
        %v3399 = vadd.f32 %v3093, %v3305
        %v3400 = vadd.f32 %v3094, %v3310
        %v3401 = vadd.f32 %v3095, %v3313
        %v3402 = vadd.f32 %v3096, %v3318
        %v3403 = vadd.f32 %v3097, %v3321
        %v3404 = vadd.f32 %v3098, %v3326
        %v3405 = vadd.f32 %v3099, %v3329
        %v3406 = vadd.f32 %v3100, %v3334
        %v3407 = vadd.f32 %v3101, %v3337
        %v3408 = vadd.f32 %v3102, %v3342
        %v3409 = vadd.f32 %v3103, %v3345
        %v3410 = vadd.f32 %v3104, %v3350
        %v3411 = vadd.f32 %v3105, %v3353
        %v3412 = vadd.f32 %v3106, %v3358
        %v3413 = vadd.f32 %v3107, %v3361
        %v3414 = vadd.f32 %v3108, %v3366
        %v3415 = vadd.f32 %v3109, %v3369
        %v3416 = vadd.f32 %v3110, %v3374
        %v3417 = vadd.f32 %v3111, %v3377
        %v3418 = vadd.f32 %v3112, %v3382
        %v3419 = vadd.f32 %v3113, %v3385
        %v3420 = vld [vmem:[%s4] sm:$0x1]
        %v3422 = vlaneseq
        %v3423 = vshrl.u32 %v3422, 7
        %v3424 = vsub.s32 0, %v3423
        %v3425 = vrot.slane %v3420, %v3424
        %v3427 = vadd.f32 %v3388, %v3425
        %v3428 = vadd.f32 %v3389, %v3425
        %v3429 = vadd.f32 %v3390, %v3425
        %v3430 = vadd.f32 %v3391, %v3425
        %v3431 = vadd.f32 %v3392, %v3425
        %v3432 = vadd.f32 %v3393, %v3425
        %v3433 = vadd.f32 %v3394, %v3425
        %v3434 = vadd.f32 %v3395, %v3425
        %v3435 = vadd.f32 %v3396, %v3425
        %v3436 = vadd.f32 %v3397, %v3425
        %v3437 = vadd.f32 %v3398, %v3425
        %v3438 = vadd.f32 %v3399, %v3425
        %v3439 = vadd.f32 %v3400, %v3425
        %v3440 = vadd.f32 %v3401, %v3425
        %v3441 = vadd.f32 %v3402, %v3425
        %v3442 = vadd.f32 %v3403, %v3425
        %v3443 = vadd.f32 %v3404, %v3425
        %v3444 = vadd.f32 %v3405, %v3425
        %v3445 = vadd.f32 %v3406, %v3425
        %v3446 = vadd.f32 %v3407, %v3425
        %v3447 = vadd.f32 %v3408, %v3425
        %v3448 = vadd.f32 %v3409, %v3425
        %v3449 = vadd.f32 %v3410, %v3425
        %v3450 = vadd.f32 %v3411, %v3425
        %v3451 = vadd.f32 %v3412, %v3425
        %v3452 = vadd.f32 %v3413, %v3425
        %v3453 = vadd.f32 %v3414, %v3425
        %v3454 = vadd.f32 %v3415, %v3425
        %v3455 = vadd.f32 %v3416, %v3425
        %v3456 = vadd.f32 %v3417, %v3425
        %v3457 = vadd.f32 %v3418, %v3425
        %v3458 = vadd.f32 %v3419, %v3425
        %v3459 = vmax.f32 %v3427, 0.0
        %v3460 = vmax.f32 %v3428, 0.0
        %v3461 = vmax.f32 %v3429, 0.0
        %v3462 = vmax.f32 %v3430, 0.0
        %v3463 = vmax.f32 %v3431, 0.0
        %v3464 = vmax.f32 %v3432, 0.0
        %v3465 = vmax.f32 %v3433, 0.0
        %v3466 = vmax.f32 %v3434, 0.0
        %v3467 = vmax.f32 %v3435, 0.0
        %v3468 = vmax.f32 %v3436, 0.0
        %v3469 = vmax.f32 %v3437, 0.0
        %v3470 = vmax.f32 %v3438, 0.0
        %v3471 = vmax.f32 %v3439, 0.0
        %v3472 = vmax.f32 %v3440, 0.0
        %v3473 = vmax.f32 %v3441, 0.0
        %v3474 = vmax.f32 %v3442, 0.0
        %v3475 = vmax.f32 %v3443, 0.0
        %v3476 = vmax.f32 %v3444, 0.0
        %v3477 = vmax.f32 %v3445, 0.0
        %v3478 = vmax.f32 %v3446, 0.0
        %v3479 = vmax.f32 %v3447, 0.0
        %v3480 = vmax.f32 %v3448, 0.0
        %v3481 = vmax.f32 %v3449, 0.0
        %v3482 = vmax.f32 %v3450, 0.0
        %v3483 = vmax.f32 %v3451, 0.0
        %v3484 = vmax.f32 %v3452, 0.0
        %v3485 = vmax.f32 %v3453, 0.0
        %v3486 = vmax.f32 %v3454, 0.0
        %v3487 = vmax.f32 %v3455, 0.0
        %v3488 = vmax.f32 %v3456, 0.0
        %v3489 = vmax.f32 %v3457, 0.0
        %v3490 = vmax.f32 %v3458, 0.0
        %v3491 = vpack.c.bf16 %v3460, %v3459
        %v3492 = vpack.c.bf16 %v3462, %v3461
        %v3493 = vpack.c.bf16 %v3464, %v3463
        %v3494 = vpack.c.bf16 %v3466, %v3465
        %v3495 = vpack.c.bf16 %v3468, %v3467
        %v3496 = vpack.c.bf16 %v3470, %v3469
        %v3497 = vpack.c.bf16 %v3472, %v3471
        %v3498 = vpack.c.bf16 %v3474, %v3473
        %v3499 = vpack.c.bf16 %v3476, %v3475
        %v3500 = vpack.c.bf16 %v3478, %v3477
        %v3501 = vpack.c.bf16 %v3480, %v3479
        %v3502 = vpack.c.bf16 %v3482, %v3481
        %v3503 = vpack.c.bf16 %v3484, %v3483
        %v3504 = vpack.c.bf16 %v3486, %v3485
        %v3505 = vpack.c.bf16 %v3488, %v3487
        %v3506 = vpack.c.bf16 %v3490, %v3489
        %v3507 = vld [vmem:[#allocation9] sm:$0xf]
        %v3508 = vld [vmem:[#allocation9 + $0x4] sm:$0xf]
        %v3509 = vld [vmem:[#allocation9 + $0x8] sm:$0xf]
        %v3510 = vld [vmem:[#allocation9 + $0xc] sm:$0xf]
        %v3511 = vld [vmem:[#allocation9 + $0x10] sm:$0xf]
        %v3512 = vld [vmem:[#allocation9 + $0x14] sm:$0xf]
        %v3513 = vld [vmem:[#allocation9 + $0x18] sm:$0xf]
        %v3514 = vld [vmem:[#allocation9 + $0x1c] sm:$0xf]
        %v3515 = vld [vmem:[#allocation9 + $0x20] sm:$0xf]
        %v3516 = vld [vmem:[#allocation9 + $0x24] sm:$0xf]
        %v3517 = vld [vmem:[#allocation9 + $0x28] sm:$0xf]
        %v3518 = vld [vmem:[#allocation9 + $0x2c] sm:$0xf]
        %v3519 = vld [vmem:[#allocation9 + $0x30] sm:$0xf]
        %v3520 = vld [vmem:[#allocation9 + $0x34] sm:$0xf]
        %v3521 = vld [vmem:[#allocation9 + $0x38] sm:$0xf]
        %v3522 = vld [vmem:[#allocation9 + $0x3c] sm:$0xf]
        %v3523 = vld [vmem:[%s6] sm:$0x1]
        %v3525 = vlaneseq
        %v3526 = vshrl.u32 %v3525, 7
        %v3527 = vsub.s32 0, %v3526
        %v3528 = vrot.slane %v3523, %v3527
        %v3546 = vunpack.c.l.b16 %v3507
        %v3547 = vunpack.c.l.b16 %v3508
        %v3548 = vunpack.c.l.b16 %v3509
        %v3549 = vunpack.c.l.b16 %v3510
        %v3550 = vunpack.c.l.b16 %v3511
        %v3551 = vunpack.c.l.b16 %v3512
        %v3552 = vunpack.c.l.b16 %v3513
        %v3553 = vunpack.c.l.b16 %v3514
        %v3554 = vunpack.c.l.b16 %v3515
        %v3555 = vunpack.c.l.b16 %v3516
        %v3556 = vunpack.c.l.b16 %v3517
        %v3557 = vunpack.c.l.b16 %v3518
        %v3558 = vunpack.c.l.b16 %v3519
        %v3559 = vunpack.c.l.b16 %v3520
        %v3560 = vunpack.c.l.b16 %v3521
        %v3561 = vunpack.c.l.b16 %v3522
        %v3562 = vpack.c.b16 %v3547, %v3546
        %v3563 = vpack.c.b16 %v3549, %v3548
        %v3564 = vpack.c.b16 %v3551, %v3550
        %v3565 = vpack.c.b16 %v3553, %v3552
        %v3566 = vpack.c.b16 %v3555, %v3554
        %v3567 = vpack.c.b16 %v3557, %v3556
        %v3568 = vpack.c.b16 %v3559, %v3558
        %v3569 = vpack.c.b16 %v3561, %v3560
        %3578 = vmatprep.subr.bf16.mxu0 0
        %3579 = vmatpush1.bf16.msra.mxu0 %v3562
        %3580 = vmatprep.subr.bf16.mxu0 0
        %3581 = vmatpush1.bf16.msra.mxu0 %v3563
        %3582 = vmatprep.subr.bf16.mxu0 0
        %3583 = vmatpush1.bf16.msra.mxu0 %v3564
        %3584 = vmatprep.subr.bf16.mxu0 0
        %3585 = vmatpush1.bf16.msra.mxu0 %v3565
        %3586 = vmatprep.subr.bf16.mxu0 0
        %3587 = vmatpush1.bf16.msra.mxu0 %v3566
        %3588 = vmatprep.subr.bf16.mxu0 0
        %3589 = vmatpush1.bf16.msra.mxu0 %v3567
        %3590 = vmatprep.subr.bf16.mxu0 0
        %3591 = vmatpush1.bf16.msra.mxu0 %v3568
        %3592 = vmatprep.subr.bf16.mxu0 0
        %3593 = vmatpush1.bf16.msra.mxu0 %v3569
        %3594 = vmatprep.subr.bf16.mxu0 0
        %3595 = vmatpush1.bf16.msra.mxu0 0
        %3596 = vmatprep.subr.bf16.mxu0 0
        %3597 = vmatpush1.bf16.msra.mxu0 0
        %3598 = vmatprep.subr.bf16.mxu0 0
        %3599 = vmatpush1.bf16.msra.mxu0 0
        %3600 = vmatprep.subr.bf16.mxu0 0
        %3601 = vmatpush1.bf16.msra.mxu0 0
        %3602 = vmatprep.subr.bf16.mxu0 0
        %3603 = vmatpush1.bf16.msra.mxu0 0
        %3604 = vmatprep.subr.bf16.mxu0 0
        %3605 = vmatpush1.bf16.msra.mxu0 0
        %3606 = vmatprep.subr.bf16.mxu0 0
        %3607 = vmatpush1.bf16.msra.mxu0 0
        %3608 = vmatprep.subr.bf16.mxu0 0
        %3609 = vmatpush1.bf16.msra.mxu0 0
        %3610 = vmatprep.mubr.bf16.mxu0 0
        %3611 = vmatmul.mubr.bf16.gmra.mrb[0].mxu0 %v3491
        %v3612 = vpop.f32.mrb[0].mxu0
        %v3613 = vadd.f32 %v3528, %v3612
        %v3614 = vpop.f32.mrb[0].mxu0
        %v3615 = vpop.f32.mrb[0].mxu0
        %v3616 = vadd.f32 %v3528, %v3615
        %v3617 = vpop.f32.mrb[0].mxu0
        %3618 = vmatprep.mubr.bf16.mxu0 0
        %3619 = vmatmul.mubr.bf16.gmra.mrb[0].mxu0 %v3492
        %v3620 = vpop.f32.mrb[0].mxu0
        %v3621 = vadd.f32 %v3528, %v3620
        %v3622 = vpop.f32.mrb[0].mxu0
        %v3623 = vpop.f32.mrb[0].mxu0
        %v3624 = vadd.f32 %v3528, %v3623
        %v3625 = vpop.f32.mrb[0].mxu0
        %3626 = vmatprep.mubr.bf16.mxu0 0
        %3627 = vmatmul.mubr.bf16.gmra.mrb[0].mxu0 %v3493
        %v3628 = vpop.f32.mrb[0].mxu0
        %v3629 = vadd.f32 %v3528, %v3628
        %v3630 = vpop.f32.mrb[0].mxu0
        %v3631 = vpop.f32.mrb[0].mxu0
        %v3632 = vadd.f32 %v3528, %v3631
        %v3633 = vpop.f32.mrb[0].mxu0
        %3634 = vmatprep.mubr.bf16.mxu0 0
        %3635 = vmatmul.mubr.bf16.gmra.mrb[0].mxu0 %v3494
        %v3636 = vpop.f32.mrb[0].mxu0
        %v3637 = vadd.f32 %v3528, %v3636
        %v3638 = vpop.f32.mrb[0].mxu0
        %v3639 = vpop.f32.mrb[0].mxu0
        %v3640 = vadd.f32 %v3528, %v3639
        %v3641 = vpop.f32.mrb[0].mxu0
        %3642 = vmatprep.mubr.bf16.mxu0 0
        %3643 = vmatmul.mubr.bf16.gmra.mrb[0].mxu0 %v3495
        %v3644 = vpop.f32.mrb[0].mxu0
        %v3645 = vadd.f32 %v3528, %v3644
        %v3646 = vpop.f32.mrb[0].mxu0
        %v3647 = vpop.f32.mrb[0].mxu0
        %v3648 = vadd.f32 %v3528, %v3647
        %v3649 = vpop.f32.mrb[0].mxu0
        %3650 = vmatprep.mubr.bf16.mxu0 0
        %3651 = vmatmul.mubr.bf16.gmra.mrb[0].mxu0 %v3496
        %v3652 = vpop.f32.mrb[0].mxu0
        %v3653 = vadd.f32 %v3528, %v3652
        %v3654 = vpop.f32.mrb[0].mxu0
        %v3655 = vpop.f32.mrb[0].mxu0
        %v3656 = vadd.f32 %v3528, %v3655
        %v3657 = vpop.f32.mrb[0].mxu0
        %3658 = vmatprep.mubr.bf16.mxu0 0
        %3659 = vmatmul.mubr.bf16.gmra.mrb[0].mxu0 %v3497
        %v3660 = vpop.f32.mrb[0].mxu0
        %v3661 = vadd.f32 %v3528, %v3660
        %v3662 = vpop.f32.mrb[0].mxu0
        %v3663 = vpop.f32.mrb[0].mxu0
        %v3664 = vadd.f32 %v3528, %v3663
        %v3665 = vpop.f32.mrb[0].mxu0
        %3666 = vmatprep.mubr.bf16.mxu0 0
        %3667 = vmatmul.mubr.bf16.gmra.mrb[0].mxu0 %v3498
        %v3668 = vpop.f32.mrb[0].mxu0
        %v3669 = vadd.f32 %v3528, %v3668
        %v3670 = vpop.f32.mrb[0].mxu0
        %v3671 = vpop.f32.mrb[0].mxu0
        %v3672 = vadd.f32 %v3528, %v3671
        %v3673 = vpop.f32.mrb[0].mxu0
        %3674 = vmatprep.mubr.bf16.mxu0 0
        %3675 = vmatmul.mubr.bf16.gmra.mrb[0].mxu0 %v3499
        %v3676 = vpop.f32.mrb[0].mxu0
        %v3677 = vadd.f32 %v3528, %v3676
        %v3678 = vpop.f32.mrb[0].mxu0
        %v3679 = vpop.f32.mrb[0].mxu0
        %v3680 = vadd.f32 %v3528, %v3679
        %v3681 = vpop.f32.mrb[0].mxu0
        %3682 = vmatprep.mubr.bf16.mxu0 0
        %3683 = vmatmul.mubr.bf16.gmra.mrb[0].mxu0 %v3500
        %v3684 = vpop.f32.mrb[0].mxu0
        %v3685 = vadd.f32 %v3528, %v3684
        %v3686 = vpop.f32.mrb[0].mxu0
        %v3687 = vpop.f32.mrb[0].mxu0
        %v3688 = vadd.f32 %v3528, %v3687
        %v3689 = vpop.f32.mrb[0].mxu0
        %3690 = vmatprep.mubr.bf16.mxu0 0
        %3691 = vmatmul.mubr.bf16.gmra.mrb[0].mxu0 %v3501
        %v3692 = vpop.f32.mrb[0].mxu0
        %v3693 = vadd.f32 %v3528, %v3692
        %v3694 = vpop.f32.mrb[0].mxu0
        %v3695 = vpop.f32.mrb[0].mxu0
        %v3696 = vadd.f32 %v3528, %v3695
        %v3697 = vpop.f32.mrb[0].mxu0
        %3698 = vmatprep.mubr.bf16.mxu0 0
        %3699 = vmatmul.mubr.bf16.gmra.mrb[0].mxu0 %v3502
        %v3700 = vpop.f32.mrb[0].mxu0
        %v3701 = vadd.f32 %v3528, %v3700
        %v3702 = vpop.f32.mrb[0].mxu0
        %v3703 = vpop.f32.mrb[0].mxu0
        %v3704 = vadd.f32 %v3528, %v3703
        %v3705 = vpop.f32.mrb[0].mxu0
        %3706 = vmatprep.mubr.bf16.mxu0 0
        %3707 = vmatmul.mubr.bf16.gmra.mrb[0].mxu0 %v3503
        %v3708 = vpop.f32.mrb[0].mxu0
        %v3709 = vadd.f32 %v3528, %v3708
        %v3710 = vpop.f32.mrb[0].mxu0
        %v3711 = vpop.f32.mrb[0].mxu0
        %v3712 = vadd.f32 %v3528, %v3711
        %v3713 = vpop.f32.mrb[0].mxu0
        %3714 = vmatprep.mubr.bf16.mxu0 0
        %3715 = vmatmul.mubr.bf16.gmra.mrb[0].mxu0 %v3504
        %v3716 = vpop.f32.mrb[0].mxu0
        %v3717 = vadd.f32 %v3528, %v3716
        %v3718 = vpop.f32.mrb[0].mxu0
        %v3719 = vpop.f32.mrb[0].mxu0
        %v3720 = vadd.f32 %v3528, %v3719
        %v3721 = vpop.f32.mrb[0].mxu0
        %3722 = vmatprep.mubr.bf16.mxu0 0
        %3723 = vmatmul.mubr.bf16.gmra.mrb[0].mxu0 %v3505
        %v3724 = vpop.f32.mrb[0].mxu0
        %v3725 = vadd.f32 %v3528, %v3724
        %v3726 = vpop.f32.mrb[0].mxu0
        %v3727 = vpop.f32.mrb[0].mxu0
        %v3728 = vadd.f32 %v3528, %v3727
        %v3729 = vpop.f32.mrb[0].mxu0
        %3730 = vmatprep.mubr.bf16.mxu0 0
        %3731 = vmatmul.mubr.bf16.gmra.mrb[0].mxu0 %v3506
        %v3732 = vpop.f32.mrb[0].mxu0
        %v3733 = vadd.f32 %v3528, %v3732
        %v3734 = vpop.f32.mrb[0].mxu0
        %v3735 = vpop.f32.mrb[0].mxu0
        %v3736 = vadd.f32 %v3528, %v3735
        %v3737 = vpop.f32.mrb[0].mxu0
        %3738 = vdwg.mxu0
        %v3739 = vadd.f32 %v3613, %v342
        %v3740 = vadd.f32 %v3616, %v343
        %v3741 = vadd.f32 %v3621, %v344
        %v3742 = vadd.f32 %v3624, %v345
        %v3743 = vadd.f32 %v3629, %v346
        %v3744 = vadd.f32 %v3632, %v347
        %v3745 = vadd.f32 %v3637, %v348
        %v3746 = vadd.f32 %v3640, %v349
        %v3747 = vadd.f32 %v3645, %v350
        %v3748 = vadd.f32 %v3648, %v351
        %v3749 = vadd.f32 %v3653, %v352
        %v3750 = vadd.f32 %v3656, %v353
        %v3751 = vadd.f32 %v3661, %v354
        %v3752 = vadd.f32 %v3664, %v355
        %v3753 = vadd.f32 %v3669, %v356
        %v3754 = vadd.f32 %v3672, %v357
        %v3755 = vadd.f32 %v3677, %v358
        %v3756 = vadd.f32 %v3680, %v359
        %v3757 = vadd.f32 %v3685, %v360
        %v3758 = vadd.f32 %v3688, %v361
        %v3759 = vadd.f32 %v3693, %v362
        %v3760 = vadd.f32 %v3696, %v363
        %v3761 = vadd.f32 %v3701, %v364
        %v3762 = vadd.f32 %v3704, %v365
        %v3763 = vadd.f32 %v3709, %v366
        %v3764 = vadd.f32 %v3712, %v367
        %v3765 = vadd.f32 %v3717, %v368
        %v3766 = vadd.f32 %v3720, %v369
        %v3767 = vadd.f32 %v3725, %v370
        %v3768 = vadd.f32 %v3728, %v371
        %v3769 = vadd.f32 %v3733, %v372
        %v3770 = vadd.f32 %v3736, %v373
        %v3771 = vmax.f32 %v3739, 0.0
        %v3772 = vmax.f32 %v3740, 0.0
        %v3773 = vmax.f32 %v3741, 0.0
        %v3774 = vmax.f32 %v3742, 0.0
        %v3775 = vmax.f32 %v3743, 0.0
        %v3776 = vmax.f32 %v3744, 0.0
        %v3777 = vmax.f32 %v3745, 0.0
        %v3778 = vmax.f32 %v3746, 0.0
        %v3779 = vmax.f32 %v3747, 0.0
        %v3780 = vmax.f32 %v3748, 0.0
        %v3781 = vmax.f32 %v3749, 0.0
        %v3782 = vmax.f32 %v3750, 0.0
        %v3783 = vmax.f32 %v3751, 0.0
        %v3784 = vmax.f32 %v3752, 0.0
        %v3785 = vmax.f32 %v3753, 0.0
        %v3786 = vmax.f32 %v3754, 0.0
        %v3787 = vmax.f32 %v3755, 0.0
        %v3788 = vmax.f32 %v3756, 0.0
        %v3789 = vmax.f32 %v3757, 0.0
        %v3790 = vmax.f32 %v3758, 0.0
        %v3791 = vmax.f32 %v3759, 0.0
        %v3792 = vmax.f32 %v3760, 0.0
        %v3793 = vmax.f32 %v3761, 0.0
        %v3794 = vmax.f32 %v3762, 0.0
        %v3795 = vmax.f32 %v3763, 0.0
        %v3796 = vmax.f32 %v3764, 0.0
        %v3797 = vmax.f32 %v3765, 0.0
        %v3798 = vmax.f32 %v3766, 0.0
        %v3799 = vmax.f32 %v3767, 0.0
        %v3800 = vmax.f32 %v3768, 0.0
        %v3801 = vmax.f32 %v3769, 0.0
        %v3802 = vmax.f32 %v3770, 0.0
        %3803 = vst [vmem:[%s340] sm:$0xff] %v3771
        %3804 = vst [vmem:[%s340 + $0x8] sm:$0xff] %v3772
        %3805 = vst [vmem:[%s340 + $0x10] sm:$0xff] %v3773
        %3806 = vst [vmem:[%s340 + $0x18] sm:$0xff] %v3774
        %3807 = vst [vmem:[%s340 + $0x20] sm:$0xff] %v3775
        %3808 = vst [vmem:[%s340 + $0x28] sm:$0xff] %v3776
        %3809 = vst [vmem:[%s340 + $0x30] sm:$0xff] %v3777
        %3810 = vst [vmem:[%s340 + $0x38] sm:$0xff] %v3778
        %3811 = vst [vmem:[%s340 + $0x40] sm:$0xff] %v3779
        %3812 = vst [vmem:[%s340 + $0x48] sm:$0xff] %v3780
        %3813 = vst [vmem:[%s340 + $0x50] sm:$0xff] %v3781
        %3814 = vst [vmem:[%s340 + $0x58] sm:$0xff] %v3782
        %3815 = vst [vmem:[%s340 + $0x60] sm:$0xff] %v3783
        %3816 = vst [vmem:[%s340 + $0x68] sm:$0xff] %v3784
        %3817 = vst [vmem:[%s340 + $0x70] sm:$0xff] %v3785
        %3818 = vst [vmem:[%s340 + $0x78] sm:$0xff] %v3786
        %3819 = vst [vmem:[%s340 + $0x80] sm:$0xff] %v3787
        %3820 = vst [vmem:[%s340 + $0x88] sm:$0xff] %v3788
        %3821 = vst [vmem:[%s340 + $0x90] sm:$0xff] %v3789
        %3822 = vst [vmem:[%s340 + $0x98] sm:$0xff] %v3790
        %3823 = vst [vmem:[%s340 + $0xa0] sm:$0xff] %v3791
        %3824 = vst [vmem:[%s340 + $0xa8] sm:$0xff] %v3792
        %3825 = vst [vmem:[%s340 + $0xb0] sm:$0xff] %v3793
        %3826 = vst [vmem:[%s340 + $0xb8] sm:$0xff] %v3794
        %3827 = vst [vmem:[%s340 + $0xc0] sm:$0xff] %v3795
        %3828 = vst [vmem:[%s340 + $0xc8] sm:$0xff] %v3796
        %3829 = vst [vmem:[%s340 + $0xd0] sm:$0xff] %v3797
        %3830 = vst [vmem:[%s340 + $0xd8] sm:$0xff] %v3798
        %3831 = vst [vmem:[%s340 + $0xe0] sm:$0xff] %v3799
        %3832 = vst [vmem:[%s340 + $0xe8] sm:$0xff] %v3800
        %3833 = vst [vmem:[%s340 + $0xf0] sm:$0xff] %v3801
        %3834 = vst [vmem:[%s340 + $0xf8] sm:$0xff] %v3802
        %s3835 = sand.u32 %s186, 1
        %s3836 = scalar_lea.sflag [#allocation5], %s3835
        %s3837 = sand.u32 %s186, 1
        %s3838 = smul.addr %s3837, 256
        %s3839 = scalar_lea.vmem [#allocation11], %s3838
        // Predicated region
        $region65: #{tpu_custom_call.1} parent=47 // pred_check
          %p3840 = pneg %p196
        $region66: #{tpu_custom_call.1} parent=47 // pred_check_branch
          %3842 = sbr.rel (%p3840) target = $region68
        $region67: #{tpu_custom_call.1} parent=47 // pred_region
          %s3844 = ssub.s32 4096, 4096
          %3845 = vsyncadd %s3836, %s3844
          %s3846 = smul.addr %s26, 32
          %s3847 = smul.addr %s3846, 128
          %s3848 = scalar_lea.hbm %s7, %s3847
          %s3849 = sshll.u32 %s3839, 4
          %s3850 = int_to_ptr.vmem [resolvable:$true] %s3849
          %3855 = dma.vmem_to_hbm [thread:$0]  %s3850, 4096, %s3848, %s3836, 128, 128, 8
        $region68: #{tpu_custom_call.1} parent=47 // pred_fallthru
          _
      $region48: #{tpu_custom_call.1} parent=5 // pred_fallthru
        _
      %p3856 = scmp.le.s32.totalorder 2, %s21
      // Predicated region
      $region69: #{tpu_custom_call.1} parent=5 // pred_check
        %p3857 = pneg %p3856
      $region70: #{tpu_custom_call.1} parent=5 // pred_check_branch
        %3859 = sbr.rel (%p3857) target = $region72
      $region71: #{tpu_custom_call.1} parent=5 // pred_region
        %s3860 = ssub.s32 %s21, 2
        // Predicated region
        $region73: #{tpu_custom_call.1} parent=71 // pred_check
          %p3861 = pneg %p202
        $region74: #{tpu_custom_call.1} parent=71 // pred_check_branch
          %3863 = sbr.rel (%p3861) target = $region76
        $region75: #{tpu_custom_call.1} parent=71 // pred_region
          %s3864 = sand.u32 %s187, 1
          %s3865 = scalar_lea.sflag [#allocation5], %s3864
          %s3866 = sand.u32 %s187, 1
          %s3867 = smul.addr %s3866, 256
          %s3868 = scalar_lea.vmem [#allocation11], %s3867
          %3869 = dma.done %s3865, 4096
        $region76: #{tpu_custom_call.1} parent=71 // pred_fallthru
          _
      $region72: #{tpu_custom_call.1} parent=5 // pred_fallthru
        _
    $region6: #{tpu_custom_call.1} parent=1 // loop_footer
      %s25 = sadd.s32 1, %s21
    $region7: #{tpu_custom_call.1} parent=1 // loop_footer_branch
      %20 = sbr.rel target = $region3
    $region8: #{tpu_custom_call.1} parent=1 // loop_exit
      _
    %3870 = vsyncpa [#allocation4], 1
    %s3871 = scalar_lea.sflag [#allocation4], 1
    %3872 = vsyncpa %s3871, 1
    %3873 = vsyncpa [#allocation7], 1
    %3874 = vsyncpa [#allocation10], 1
    %3875 = vsyncpa [#allocation5], 1
    %s3876 = scalar_lea.sflag [#allocation5], 1
    %3877 = vsyncpa %s3876, 1

</llo_original>
